<compile_context>
chip_gen: v7x
topology: tpu7x:2x2x1
jax: 0.10.0
libtpu: 0.0.40
codegen_flags: <defaults>
</compile_context>

<pallas_src>
import jax
import jax.numpy as jnp
from jax.experimental import pallas as pl
from jax.experimental.pallas import tpu as pltpu


def _attn_decoder_kernel(
    # inputs
    ids_ref,        # SMEM (Bp,) int32 token ids
    emb_tbl_ref,    # HBM  (V, H) embedding table (memory_space=pl.ANY)
    ctx_ref, h0_ref, c0_ref, enc_ref,                      # VMEM activations
    w_ip_e_ref, w_ip_c_ref, b_ip_ref,                      # input_processor (pre-split)
    w_xi_ref, w_hi_ref, b_i_ref,                           # LSTM gate i
    w_xf_ref, w_hf_ref, b_f_ref,                           # LSTM gate f
    w_xg_ref, w_hg_ref, b_g_ref,                           # LSTM gate g
    w_xo_ref, w_ho_ref, b_o_ref,                           # LSTM gate o
    w_attn_c_ref, w_attn_x_ref, b_attn_ref,                # attn (pre-split)
    w_attn0_ref, b_attn0_ref,                              # attn_0
    w_out_h_ref, w_out_c_ref, b_out_ref,                   # out (pre-split)
    # outputs
    logp_ref, newh_ref, attnw_ref, newc_ref, ctxvec_ref,
    # scratch
    emb_buf, dma_sem,
):
    f32 = jnp.float32
    Bp = emb_buf.shape[0]

    # ---- in-kernel embedding gather: one small DMA per (padded) batch row ----
    copies = []
    for b in range(Bp):
        idx = ids_ref[b]
        cp = pltpu.make_async_copy(
            emb_tbl_ref.at[pl.ds(idx, 1)],      # (1, H) row in HBM
            emb_buf.at[pl.ds(b, 1)],            # (1, H) row in VMEM
            dma_sem.at[b],
        )
        cp.start()
        copies.append(cp)
    for cp in copies:
        cp.wait()

    emb = emb_buf[...]          # (Bp, H)
    ctx = ctx_ref[...]          # (Bp, H)  decoder_context
    h0 = h0_ref[...]            # (Bp, H)
    c0 = c0_ref[...]            # (Bp, H)
    enc = enc_ref[...]          # (Bp, S, H)

    # ---- input processor: Linear(2H -> H) on concat([emb, ctx]) without the concat ----
    x = (jnp.dot(emb, w_ip_e_ref[...], preferred_element_type=f32)
         + jnp.dot(ctx, w_ip_c_ref[...], preferred_element_type=f32)
         + b_ip_ref[...])                                              # (Bp, H)

    # ---- single-step LSTM, per-gate weight blocks (PyTorch order i, f, g, o) ----
    def gate_pre(wx_ref, wh_ref, b_ref):
        return (jnp.dot(x, wx_ref[...], preferred_element_type=f32)
                + jnp.dot(h0, wh_ref[...], preferred_element_type=f32)
                + b_ref[...])                                          # (Bp, H)

    i_g = jax.nn.sigmoid(gate_pre(w_xi_ref, w_hi_ref, b_i_ref))
    f_g = jax.nn.sigmoid(gate_pre(w_xf_ref, w_hf_ref, b_f_ref))
    g_g = jnp.tanh(gate_pre(w_xg_ref, w_hg_ref, b_g_ref))
    o_g = jax.nn.sigmoid(gate_pre(w_xo_ref, w_ho_ref, b_o_ref))
    c_new = f_g * c0 + i_g * g_g
    h_new = o_g * jnp.tanh(c_new)                                      # LSTM output (seq_len=1)

    # ---- attention weights (concat([ctx, x]) expressed as two dots) ----
    a1 = jax.nn.sigmoid(jnp.dot(ctx, w_attn_c_ref[...], preferred_element_type=f32)
                        + jnp.dot(x, w_attn_x_ref[...], preferred_element_type=f32)
                        + b_attn_ref[...])                             # (Bp, H)
    a2 = jax.nn.sigmoid(jnp.dot(a1, w_attn0_ref[...], preferred_element_type=f32)
                        + b_attn0_ref[...])                            # (Bp, L)
    # softmax over the full max_length L, then slice to the encoder length S
    m = jnp.max(a2, axis=-1, keepdims=True)
    e = jnp.exp(a2 - m)
    # approx=False: approx vrcp is ~bf16 precision and can break the 1e-4 tolerance.
    attn_full = e * pl.reciprocal(jnp.sum(e, axis=-1, keepdims=True), approx=False)
    S = enc.shape[1]
    attn_w = attn_full[:, :S]                                          # (Bp, S)

    # ---- context vector: weighted sum over encoder positions ----
    # At S=8, H=32 the broadcast+sum is fine; at larger sizes switch to a batched
    # lax.dot_general ('bs,bsh->bh') so the contraction hits the MXU.
    ctx_vec = jnp.sum(attn_w[:, :, None] * enc, axis=1)                # (Bp, H)

    # ---- output projection (concat([h_new, ctx_vec]) as two dots) + log_softmax ----
    logits = (jnp.dot(h_new, w_out_h_ref[...], preferred_element_type=f32)
              + jnp.dot(ctx_vec, w_out_c_ref[...], preferred_element_type=f32)
              + b_out_ref[...])                                        # (Bp, O)
    lmax = jnp.max(logits, axis=-1, keepdims=True)
    lse = jnp.log(jnp.sum(jnp.exp(logits - lmax), axis=-1, keepdims=True))
    logp = logits - lmax - lse

    logp_ref[...] = logp
    newh_ref[...] = h_new
    attnw_ref[...] = attn_w
    newc_ref[...] = c_new
    ctxvec_ref[...] = ctx_vec


def preprocess_params(p, hidden_size):
    """One-time host-side re-layout: split concat-axis weights, split LSTM gate blocks,
    pre-sum the two LSTM biases, reshape biases to (1, N) for 2D VMEM broadcast."""
    H = hidden_size
    row = lambda v: jnp.asarray(v, jnp.float32).reshape(1, -1)
    b_lstm = p["b_ih"] + p["b_hh"]
    return {
        "embedding": jnp.asarray(p["embedding"], jnp.float32),
        # input_processor acts on concat([emb, ctx])
        "w_ip_e": p["w_ip"][:H], "w_ip_c": p["w_ip"][H:], "b_ip": row(p["b_ip"]),
        # LSTM per-gate blocks, PyTorch gate order i, f, g, o
        "w_xi": p["w_ih"][:, 0:H],       "w_hi": p["w_hh"][:, 0:H],       "b_i": row(b_lstm[0:H]),
        "w_xf": p["w_ih"][:, H:2 * H],   "w_hf": p["w_hh"][:, H:2 * H],   "b_f": row(b_lstm[H:2 * H]),
        "w_xg": p["w_ih"][:, 2 * H:3 * H], "w_hg": p["w_hh"][:, 2 * H:3 * H], "b_g": row(b_lstm[2 * H:3 * H]),
        "w_xo": p["w_ih"][:, 3 * H:4 * H], "w_ho": p["w_hh"][:, 3 * H:4 * H], "b_o": row(b_lstm[3 * H:4 * H]),
        # attn acts on concat([ctx, x])
        "w_attn_c": p["w_attn"][:H], "w_attn_x": p["w_attn"][H:], "b_attn": row(p["b_attn"]),
        "w_attn0": p["w_attn0"], "b_attn0": row(p["b_attn0"]),
        # out acts on concat([h_new, ctx_vec])
        "w_out_h": p["w_out"][:H], "w_out_c": p["w_out"][H:], "b_out": row(p["b_out"]),
    }


_WEIGHT_ORDER = (
    "w_ip_e", "w_ip_c", "b_ip",
    "w_xi", "w_hi", "b_i",
    "w_xf", "w_hf", "b_f",
    "w_xg", "w_hg", "b_g",
    "w_xo", "w_ho", "b_o",
    "w_attn_c", "w_attn_x", "b_attn",
    "w_attn0", "b_attn0",
    "w_out_h", "w_out_c", "b_out",
)


def attn_decoder_forward(input_ids, hidden, decoder_context, encoder_outputs, cell_state, kparams):
    """JAX/Pallas equivalent of AttnDecoderRNN.forward (single decoder step).

    input_ids:        (B, 1) int32 token indices
    hidden:           (1, B, H)
    decoder_context:  (1, B, H)
    encoder_outputs:  (1, B, S, H)   (so encoder_outputs.size(2) == S, as the torch code expects)
    cell_state:       (1, B, H)
    kparams:          output of preprocess_params()
    """
    B, H = hidden.shape[1], hidden.shape[2]
    S = encoder_outputs.shape[2]
    O = kparams["w_out_h"].shape[1]

    # Pad batch to full 8-row sublane tiles so vregs / MXU rows are fully used.
    Bp = ((B + 7) // 8) * 8

    def pad_b(x):
        return jnp.pad(x, ((0, Bp - B),) + ((0, 0),) * (x.ndim - 1))

    ids = pad_b(input_ids[:, 0].astype(jnp.int32))       # (Bp,)  pad rows gather row 0 (discarded)
    ctx = pad_b(decoder_context[0])                      # (Bp, H)
    h0 = pad_b(hidden[0])                                # (Bp, H)
    c0 = pad_b(cell_state[0])                            # (Bp, H)
    enc = pad_b(encoder_outputs[0])                      # (Bp, S, H)

    vmem = pl.BlockSpec(memory_space=pltpu.MemorySpace.VMEM)
    smem = pl.BlockSpec(memory_space=pltpu.MemorySpace.SMEM)
    anyhbm = pl.BlockSpec(memory_space=pl.ANY)           # embedding table stays in HBM

    weights = [kparams[n] for n in _WEIGHT_ORDER]
    in_specs = [smem, anyhbm] + [vmem] * (4 + len(weights))

    out_shape = (
        jax.ShapeDtypeStruct((Bp, O), jnp.float32),   # log_softmax
        jax.ShapeDtypeStruct((Bp, H), jnp.float32),   # new_hidden
        jax.ShapeDtypeStruct((Bp, S), jnp.float32),   # attn_weights
        jax.ShapeDtypeStruct((Bp, H), jnp.float32),   # cell_state
        jax.ShapeDtypeStruct((Bp, H), jnp.float32),   # context_vector
    )

    logp, h_new, attn_w, c_new, ctx_vec = pl.pallas_call(
        _attn_decoder_kernel,
        out_shape=out_shape,
        in_specs=in_specs,
        out_specs=(vmem,) * 5,
        scratch_shapes=[
            pltpu.VMEM((Bp, H), jnp.float32),     # gathered embeddings
            pltpu.SemaphoreType.DMA((Bp,)),       # one DMA sem per gathered row
        ],
    )(ids, kparams["embedding"], ctx, h0, c0, enc, *weights)

    # restore PyTorch output layouts: (1, B, ...) and drop batch padding
    return (logp[:B][None], h_new[:B][None], attn_w[:B][None],
            c_new[:B][None], ctx_vec[:B][None])


def make_params(key, hidden_size, output_size, max_length):
    """Deterministic synthetic parameters in a layout-agnostic form.
    Weight matrices stored as (in_features, out_features); biases 1D."""
    H, O, L = hidden_size, output_size, max_length
    ks = jax.random.split(key, 12)
    s = 0.1
    return {
        "embedding": jax.random.normal(ks[0], (O, H), jnp.float32) * s,
        "w_ip":     jax.random.normal(ks[1], (2 * H, H), jnp.float32) * s,
        "b_ip":     jax.random.normal(ks[2], (H,), jnp.float32) * s,
        "w_attn":   jax.random.normal(ks[3], (2 * H, H), jnp.float32) * s,
        "b_attn":   jax.random.normal(ks[4], (H,), jnp.float32) * s,
        "w_attn0":  jax.random.normal(ks[5], (H, L), jnp.float32) * s,
        "b_attn0":  jax.random.normal(ks[6], (L,), jnp.float32) * s,
        "w_ih":     jax.random.normal(ks[7], (H, 4 * H), jnp.float32) * s,
        "w_hh":     jax.random.normal(ks[8], (H, 4 * H), jnp.float32) * s,
        "b_ih":     jax.random.normal(ks[9], (4 * H,), jnp.float32) * s,
        "b_hh":     jax.random.normal(ks[10], (4 * H,), jnp.float32) * s,
        "w_out":    jax.random.normal(ks[11], (2 * H, O), jnp.float32) * s,
        "b_out":    jnp.zeros((O,), jnp.float32),
    }


def _reference_forward(input_ids, hidden, decoder_context, encoder_outputs, cell_state, p):
    """Pure-JAX reference mirroring the PyTorch forward (for a correctness check)."""
    H = hidden.shape[2]
    emb = p["embedding"][input_ids[:, 0]]
    ctx, h0, c0, enc = decoder_context[0], hidden[0], cell_state[0], encoder_outputs[0]
    x = jnp.concatenate([emb, ctx], 1) @ p["w_ip"] + p["b_ip"]
    gates = x @ p["w_ih"] + p["b_ih"] + h0 @ p["w_hh"] + p["b_hh"]
    i = jax.nn.sigmoid(gates[:, :H]); f = jax.nn.sigmoid(gates[:, H:2 * H])
    g = jnp.tanh(gates[:, 2 * H:3 * H]); o = jax.nn.sigmoid(gates[:, 3 * H:])
    c_new = f * c0 + i * g
    h_new = o * jnp.tanh(c_new)
    a1 = jax.nn.sigmoid(jnp.concatenate([ctx, x], 1) @ p["w_attn"] + p["b_attn"])
    a2 = jax.nn.sigmoid(a1 @ p["w_attn0"] + p["b_attn0"])
    attn_w = jax.nn.softmax(a2, axis=-1)[:, :enc.shape[1]]
    ctx_vec = jnp.einsum("bs,bsh->bh", attn_w, enc)
    logits = jnp.concatenate([h_new, ctx_vec], 1) @ p["w_out"] + p["b_out"]
    logp = jax.nn.log_softmax(logits, axis=-1)
    return logp[None], h_new[None], attn_w[None], c_new[None], ctx_vec[None]


if __name__ == "__main__":
    B, H, O, S, L = 2, 32, 40, 8, 15   # batch, hidden_size, output_size, encoder len, max_length

    key = jax.random.PRNGKey(0)
    kp, k1, k2, k3, k4, k5 = jax.random.split(key, 6)
    raw_params = make_params(kp, H, O, L)
    kparams = preprocess_params(raw_params, H)   # one-time weight re-layout (not per-step work)

    input_ids = jax.random.randint(k1, (B, 1), 0, O, dtype=jnp.int32)
    hidden = jax.random.normal(k2, (1, B, H), jnp.float32)
    decoder_context = jax.random.normal(k3, (1, B, H), jnp.float32)
    encoder_outputs = jax.random.normal(k4, (1, B, S, H), jnp.float32)
    cell_state = jax.random.normal(k5, (1, B, H), jnp.float32)

    outs = attn_decoder_forward(input_ids, hidden, decoder_context,
                                encoder_outputs, cell_state, kparams)
    outs = jax.block_until_ready(outs)

    refs = _reference_forward(input_ids, hidden, decoder_context,
                              encoder_outputs, cell_state, raw_params)
    for got, ref in zip(outs, refs):
        assert got.shape == ref.shape, (got.shape, ref.shape)
        assert jnp.allclose(got, ref, atol=1e-4, rtol=1e-4)

    print("KERNEL_OK")
</pallas_src>

<mosaic_0001>
module attributes {stable_mosaic.version = 11 : i64} {
  func.func @_attn_decoder_kernel(%arg0: memref<8xi32, #tpu.memory_space<smem>>, %arg1: memref<40x32xf32, #tpu.memory_space<any>>, %arg2: memref<8x32xf32, #tpu.memory_space<vmem>>, %arg3: memref<8x32xf32, #tpu.memory_space<vmem>>, %arg4: memref<8x32xf32, #tpu.memory_space<vmem>>, %arg5: memref<8x8x32xf32, #tpu.memory_space<vmem>>, %arg6: memref<32x32xf32, #tpu.memory_space<vmem>>, %arg7: memref<32x32xf32, #tpu.memory_space<vmem>>, %arg8: memref<1x32xf32, #tpu.memory_space<vmem>>, %arg9: memref<32x32xf32, #tpu.memory_space<vmem>>, %arg10: memref<32x32xf32, #tpu.memory_space<vmem>>, %arg11: memref<1x32xf32, #tpu.memory_space<vmem>>, %arg12: memref<32x32xf32, #tpu.memory_space<vmem>>, %arg13: memref<32x32xf32, #tpu.memory_space<vmem>>, %arg14: memref<1x32xf32, #tpu.memory_space<vmem>>, %arg15: memref<32x32xf32, #tpu.memory_space<vmem>>, %arg16: memref<32x32xf32, #tpu.memory_space<vmem>>, %arg17: memref<1x32xf32, #tpu.memory_space<vmem>>, %arg18: memref<32x32xf32, #tpu.memory_space<vmem>>, %arg19: memref<32x32xf32, #tpu.memory_space<vmem>>, %arg20: memref<1x32xf32, #tpu.memory_space<vmem>>, %arg21: memref<32x32xf32, #tpu.memory_space<vmem>>, %arg22: memref<32x32xf32, #tpu.memory_space<vmem>>, %arg23: memref<1x32xf32, #tpu.memory_space<vmem>>, %arg24: memref<32x15xf32, #tpu.memory_space<vmem>>, %arg25: memref<1x15xf32, #tpu.memory_space<vmem>>, %arg26: memref<32x40xf32, #tpu.memory_space<vmem>>, %arg27: memref<32x40xf32, #tpu.memory_space<vmem>>, %arg28: memref<1x40xf32, #tpu.memory_space<vmem>>, %arg29: memref<8x40xf32, #tpu.memory_space<vmem>>, %arg30: memref<8x32xf32, #tpu.memory_space<vmem>>, %arg31: memref<8x8xf32, #tpu.memory_space<vmem>>, %arg32: memref<8x32xf32, #tpu.memory_space<vmem>>, %arg33: memref<8x32xf32, #tpu.memory_space<vmem>>, %arg34: memref<8x32xf32, #tpu.memory_space<vmem>>, %arg35: memref<8x!tpu.dma_semaphore, #tpu.memory_space<semaphore_mem>>) attributes {dimension_semantics = [], scalar_prefetch = 0 : i64, scratch_operands = 2 : i64, tpu.core_type = #tpu.core_type<tc>} {
    %c0 = arith.constant 0 : index
    %0 = memref.load %arg0[%c0] : memref<8xi32, #tpu.memory_space<smem>>
    %c0_i32 = arith.constant 0 : i32
    %c0_i32_0 = arith.constant 0 : i32
    %1 = tpu.memref_slice %arg1[%0, %c0_i32_0] : memref<40x32xf32, #tpu.memory_space<any>> -> memref<1x32xf32, #tpu.memory_space<any>>
    %c0_i32_1 = arith.constant 0 : i32
    %c0_i32_2 = arith.constant 0 : i32
    %2 = tpu.memref_slice %arg34[%c0_i32_1, %c0_i32_2] : memref<8x32xf32, #tpu.memory_space<vmem>> -> memref<1x32xf32, #tpu.memory_space<vmem>>
    %3 = tpu.memref_slice %arg35[%c0_i32] : memref<8x!tpu.dma_semaphore, #tpu.memory_space<semaphore_mem>> -> memref<1x!tpu.dma_semaphore, #tpu.memory_space<semaphore_mem>>
    %4 = tpu.memref_squeeze %3 : memref<1x!tpu.dma_semaphore, #tpu.memory_space<semaphore_mem>> -> memref<!tpu.dma_semaphore, #tpu.memory_space<semaphore_mem>>
    tpu.enqueue_dma source(%1 : memref<1x32xf32, #tpu.memory_space<any>>) target(%2 : memref<1x32xf32, #tpu.memory_space<vmem>>) target_semaphore(%4 : memref<!tpu.dma_semaphore, #tpu.memory_space<semaphore_mem>>)
    %c1 = arith.constant 1 : index
    %5 = memref.load %arg0[%c1] : memref<8xi32, #tpu.memory_space<smem>>
    %c1_i32 = arith.constant 1 : i32
    %c0_i32_3 = arith.constant 0 : i32
    %6 = tpu.memref_slice %arg1[%5, %c0_i32_3] : memref<40x32xf32, #tpu.memory_space<any>> -> memref<1x32xf32, #tpu.memory_space<any>>
    %c1_i32_4 = arith.constant 1 : i32
    %c0_i32_5 = arith.constant 0 : i32
    %7 = tpu.memref_slice %arg34[%c1_i32_4, %c0_i32_5] : memref<8x32xf32, #tpu.memory_space<vmem>> -> memref<1x32xf32, #tpu.memory_space<vmem>>
    %8 = tpu.memref_slice %arg35[%c1_i32] : memref<8x!tpu.dma_semaphore, #tpu.memory_space<semaphore_mem>> -> memref<1x!tpu.dma_semaphore, #tpu.memory_space<semaphore_mem>>
    %9 = tpu.memref_squeeze %8 : memref<1x!tpu.dma_semaphore, #tpu.memory_space<semaphore_mem>> -> memref<!tpu.dma_semaphore, #tpu.memory_space<semaphore_mem>>
    tpu.enqueue_dma source(%6 : memref<1x32xf32, #tpu.memory_space<any>>) target(%7 : memref<1x32xf32, #tpu.memory_space<vmem>>) target_semaphore(%9 : memref<!tpu.dma_semaphore, #tpu.memory_space<semaphore_mem>>)
    %c2 = arith.constant 2 : index
    %10 = memref.load %arg0[%c2] : memref<8xi32, #tpu.memory_space<smem>>
    %c2_i32 = arith.constant 2 : i32
    %c0_i32_6 = arith.constant 0 : i32
    %11 = tpu.memref_slice %arg1[%10, %c0_i32_6] : memref<40x32xf32, #tpu.memory_space<any>> -> memref<1x32xf32, #tpu.memory_space<any>>
    %c2_i32_7 = arith.constant 2 : i32
    %c0_i32_8 = arith.constant 0 : i32
    %12 = tpu.memref_slice %arg34[%c2_i32_7, %c0_i32_8] : memref<8x32xf32, #tpu.memory_space<vmem>> -> memref<1x32xf32, #tpu.memory_space<vmem>>
    %13 = tpu.memref_slice %arg35[%c2_i32] : memref<8x!tpu.dma_semaphore, #tpu.memory_space<semaphore_mem>> -> memref<1x!tpu.dma_semaphore, #tpu.memory_space<semaphore_mem>>
    %14 = tpu.memref_squeeze %13 : memref<1x!tpu.dma_semaphore, #tpu.memory_space<semaphore_mem>> -> memref<!tpu.dma_semaphore, #tpu.memory_space<semaphore_mem>>
    tpu.enqueue_dma source(%11 : memref<1x32xf32, #tpu.memory_space<any>>) target(%12 : memref<1x32xf32, #tpu.memory_space<vmem>>) target_semaphore(%14 : memref<!tpu.dma_semaphore, #tpu.memory_space<semaphore_mem>>)
    %c3 = arith.constant 3 : index
    %15 = memref.load %arg0[%c3] : memref<8xi32, #tpu.memory_space<smem>>
    %c3_i32 = arith.constant 3 : i32
    %c0_i32_9 = arith.constant 0 : i32
    %16 = tpu.memref_slice %arg1[%15, %c0_i32_9] : memref<40x32xf32, #tpu.memory_space<any>> -> memref<1x32xf32, #tpu.memory_space<any>>
    %c3_i32_10 = arith.constant 3 : i32
    %c0_i32_11 = arith.constant 0 : i32
    %17 = tpu.memref_slice %arg34[%c3_i32_10, %c0_i32_11] : memref<8x32xf32, #tpu.memory_space<vmem>> -> memref<1x32xf32, #tpu.memory_space<vmem>>
    %18 = tpu.memref_slice %arg35[%c3_i32] : memref<8x!tpu.dma_semaphore, #tpu.memory_space<semaphore_mem>> -> memref<1x!tpu.dma_semaphore, #tpu.memory_space<semaphore_mem>>
    %19 = tpu.memref_squeeze %18 : memref<1x!tpu.dma_semaphore, #tpu.memory_space<semaphore_mem>> -> memref<!tpu.dma_semaphore, #tpu.memory_space<semaphore_mem>>
    tpu.enqueue_dma source(%16 : memref<1x32xf32, #tpu.memory_space<any>>) target(%17 : memref<1x32xf32, #tpu.memory_space<vmem>>) target_semaphore(%19 : memref<!tpu.dma_semaphore, #tpu.memory_space<semaphore_mem>>)
    %c4 = arith.constant 4 : index
    %20 = memref.load %arg0[%c4] : memref<8xi32, #tpu.memory_space<smem>>
    %c4_i32 = arith.constant 4 : i32
    %c0_i32_12 = arith.constant 0 : i32
    %21 = tpu.memref_slice %arg1[%20, %c0_i32_12] : memref<40x32xf32, #tpu.memory_space<any>> -> memref<1x32xf32, #tpu.memory_space<any>>
    %c4_i32_13 = arith.constant 4 : i32
    %c0_i32_14 = arith.constant 0 : i32
    %22 = tpu.memref_slice %arg34[%c4_i32_13, %c0_i32_14] : memref<8x32xf32, #tpu.memory_space<vmem>> -> memref<1x32xf32, #tpu.memory_space<vmem>>
    %23 = tpu.memref_slice %arg35[%c4_i32] : memref<8x!tpu.dma_semaphore, #tpu.memory_space<semaphore_mem>> -> memref<1x!tpu.dma_semaphore, #tpu.memory_space<semaphore_mem>>
    %24 = tpu.memref_squeeze %23 : memref<1x!tpu.dma_semaphore, #tpu.memory_space<semaphore_mem>> -> memref<!tpu.dma_semaphore, #tpu.memory_space<semaphore_mem>>
    tpu.enqueue_dma source(%21 : memref<1x32xf32, #tpu.memory_space<any>>) target(%22 : memref<1x32xf32, #tpu.memory_space<vmem>>) target_semaphore(%24 : memref<!tpu.dma_semaphore, #tpu.memory_space<semaphore_mem>>)
    %c5 = arith.constant 5 : index
    %25 = memref.load %arg0[%c5] : memref<8xi32, #tpu.memory_space<smem>>
    %c5_i32 = arith.constant 5 : i32
    %c0_i32_15 = arith.constant 0 : i32
    %26 = tpu.memref_slice %arg1[%25, %c0_i32_15] : memref<40x32xf32, #tpu.memory_space<any>> -> memref<1x32xf32, #tpu.memory_space<any>>
    %c5_i32_16 = arith.constant 5 : i32
    %c0_i32_17 = arith.constant 0 : i32
    %27 = tpu.memref_slice %arg34[%c5_i32_16, %c0_i32_17] : memref<8x32xf32, #tpu.memory_space<vmem>> -> memref<1x32xf32, #tpu.memory_space<vmem>>
    %28 = tpu.memref_slice %arg35[%c5_i32] : memref<8x!tpu.dma_semaphore, #tpu.memory_space<semaphore_mem>> -> memref<1x!tpu.dma_semaphore, #tpu.memory_space<semaphore_mem>>
    %29 = tpu.memref_squeeze %28 : memref<1x!tpu.dma_semaphore, #tpu.memory_space<semaphore_mem>> -> memref<!tpu.dma_semaphore, #tpu.memory_space<semaphore_mem>>
    tpu.enqueue_dma source(%26 : memref<1x32xf32, #tpu.memory_space<any>>) target(%27 : memref<1x32xf32, #tpu.memory_space<vmem>>) target_semaphore(%29 : memref<!tpu.dma_semaphore, #tpu.memory_space<semaphore_mem>>)
    %c6 = arith.constant 6 : index
    %30 = memref.load %arg0[%c6] : memref<8xi32, #tpu.memory_space<smem>>
    %c6_i32 = arith.constant 6 : i32
    %c0_i32_18 = arith.constant 0 : i32
    %31 = tpu.memref_slice %arg1[%30, %c0_i32_18] : memref<40x32xf32, #tpu.memory_space<any>> -> memref<1x32xf32, #tpu.memory_space<any>>
    %c6_i32_19 = arith.constant 6 : i32
    %c0_i32_20 = arith.constant 0 : i32
    %32 = tpu.memref_slice %arg34[%c6_i32_19, %c0_i32_20] : memref<8x32xf32, #tpu.memory_space<vmem>> -> memref<1x32xf32, #tpu.memory_space<vmem>>
    %33 = tpu.memref_slice %arg35[%c6_i32] : memref<8x!tpu.dma_semaphore, #tpu.memory_space<semaphore_mem>> -> memref<1x!tpu.dma_semaphore, #tpu.memory_space<semaphore_mem>>
    %34 = tpu.memref_squeeze %33 : memref<1x!tpu.dma_semaphore, #tpu.memory_space<semaphore_mem>> -> memref<!tpu.dma_semaphore, #tpu.memory_space<semaphore_mem>>
    tpu.enqueue_dma source(%31 : memref<1x32xf32, #tpu.memory_space<any>>) target(%32 : memref<1x32xf32, #tpu.memory_space<vmem>>) target_semaphore(%34 : memref<!tpu.dma_semaphore, #tpu.memory_space<semaphore_mem>>)
    %c7 = arith.constant 7 : index
    %35 = memref.load %arg0[%c7] : memref<8xi32, #tpu.memory_space<smem>>
    %c7_i32 = arith.constant 7 : i32
    %c0_i32_21 = arith.constant 0 : i32
    %36 = tpu.memref_slice %arg1[%35, %c0_i32_21] : memref<40x32xf32, #tpu.memory_space<any>> -> memref<1x32xf32, #tpu.memory_space<any>>
    %c7_i32_22 = arith.constant 7 : i32
    %c0_i32_23 = arith.constant 0 : i32
    %37 = tpu.memref_slice %arg34[%c7_i32_22, %c0_i32_23] : memref<8x32xf32, #tpu.memory_space<vmem>> -> memref<1x32xf32, #tpu.memory_space<vmem>>
    %38 = tpu.memref_slice %arg35[%c7_i32] : memref<8x!tpu.dma_semaphore, #tpu.memory_space<semaphore_mem>> -> memref<1x!tpu.dma_semaphore, #tpu.memory_space<semaphore_mem>>
    %39 = tpu.memref_squeeze %38 : memref<1x!tpu.dma_semaphore, #tpu.memory_space<semaphore_mem>> -> memref<!tpu.dma_semaphore, #tpu.memory_space<semaphore_mem>>
    tpu.enqueue_dma source(%36 : memref<1x32xf32, #tpu.memory_space<any>>) target(%37 : memref<1x32xf32, #tpu.memory_space<vmem>>) target_semaphore(%39 : memref<!tpu.dma_semaphore, #tpu.memory_space<semaphore_mem>>)
    %c0_i32_24 = arith.constant 0 : i32
    %c0_i32_25 = arith.constant 0 : i32
    %40 = tpu.memref_slice %arg1[%0, %c0_i32_25] : memref<40x32xf32, #tpu.memory_space<any>> -> memref<1x32xf32, #tpu.memory_space<any>>
    %c0_i32_26 = arith.constant 0 : i32
    %c0_i32_27 = arith.constant 0 : i32
    %41 = tpu.memref_slice %arg34[%c0_i32_26, %c0_i32_27] : memref<8x32xf32, #tpu.memory_space<vmem>> -> memref<1x32xf32, #tpu.memory_space<vmem>>
    %42 = tpu.memref_slice %arg35[%c0_i32_24] : memref<8x!tpu.dma_semaphore, #tpu.memory_space<semaphore_mem>> -> memref<1x!tpu.dma_semaphore, #tpu.memory_space<semaphore_mem>>
    %43 = tpu.memref_squeeze %42 : memref<1x!tpu.dma_semaphore, #tpu.memory_space<semaphore_mem>> -> memref<!tpu.dma_semaphore, #tpu.memory_space<semaphore_mem>>
    tpu.wait_dma2 semaphore(%43 : memref<!tpu.dma_semaphore, #tpu.memory_space<semaphore_mem>>) src(%40 : memref<1x32xf32, #tpu.memory_space<any>>) dst(%41 : memref<1x32xf32, #tpu.memory_space<vmem>>)
    %c1_i32_28 = arith.constant 1 : i32
    %c0_i32_29 = arith.constant 0 : i32
    %44 = tpu.memref_slice %arg1[%5, %c0_i32_29] : memref<40x32xf32, #tpu.memory_space<any>> -> memref<1x32xf32, #tpu.memory_space<any>>
    %c1_i32_30 = arith.constant 1 : i32
    %c0_i32_31 = arith.constant 0 : i32
    %45 = tpu.memref_slice %arg34[%c1_i32_30, %c0_i32_31] : memref<8x32xf32, #tpu.memory_space<vmem>> -> memref<1x32xf32, #tpu.memory_space<vmem>>
    %46 = tpu.memref_slice %arg35[%c1_i32_28] : memref<8x!tpu.dma_semaphore, #tpu.memory_space<semaphore_mem>> -> memref<1x!tpu.dma_semaphore, #tpu.memory_space<semaphore_mem>>
    %47 = tpu.memref_squeeze %46 : memref<1x!tpu.dma_semaphore, #tpu.memory_space<semaphore_mem>> -> memref<!tpu.dma_semaphore, #tpu.memory_space<semaphore_mem>>
    tpu.wait_dma2 semaphore(%47 : memref<!tpu.dma_semaphore, #tpu.memory_space<semaphore_mem>>) src(%44 : memref<1x32xf32, #tpu.memory_space<any>>) dst(%45 : memref<1x32xf32, #tpu.memory_space<vmem>>)
    %c2_i32_32 = arith.constant 2 : i32
    %c0_i32_33 = arith.constant 0 : i32
    %48 = tpu.memref_slice %arg1[%10, %c0_i32_33] : memref<40x32xf32, #tpu.memory_space<any>> -> memref<1x32xf32, #tpu.memory_space<any>>
    %c2_i32_34 = arith.constant 2 : i32
    %c0_i32_35 = arith.constant 0 : i32
    %49 = tpu.memref_slice %arg34[%c2_i32_34, %c0_i32_35] : memref<8x32xf32, #tpu.memory_space<vmem>> -> memref<1x32xf32, #tpu.memory_space<vmem>>
    %50 = tpu.memref_slice %arg35[%c2_i32_32] : memref<8x!tpu.dma_semaphore, #tpu.memory_space<semaphore_mem>> -> memref<1x!tpu.dma_semaphore, #tpu.memory_space<semaphore_mem>>
    %51 = tpu.memref_squeeze %50 : memref<1x!tpu.dma_semaphore, #tpu.memory_space<semaphore_mem>> -> memref<!tpu.dma_semaphore, #tpu.memory_space<semaphore_mem>>
    tpu.wait_dma2 semaphore(%51 : memref<!tpu.dma_semaphore, #tpu.memory_space<semaphore_mem>>) src(%48 : memref<1x32xf32, #tpu.memory_space<any>>) dst(%49 : memref<1x32xf32, #tpu.memory_space<vmem>>)
    %c3_i32_36 = arith.constant 3 : i32
    %c0_i32_37 = arith.constant 0 : i32
    %52 = tpu.memref_slice %arg1[%15, %c0_i32_37] : memref<40x32xf32, #tpu.memory_space<any>> -> memref<1x32xf32, #tpu.memory_space<any>>
    %c3_i32_38 = arith.constant 3 : i32
    %c0_i32_39 = arith.constant 0 : i32
    %53 = tpu.memref_slice %arg34[%c3_i32_38, %c0_i32_39] : memref<8x32xf32, #tpu.memory_space<vmem>> -> memref<1x32xf32, #tpu.memory_space<vmem>>
    %54 = tpu.memref_slice %arg35[%c3_i32_36] : memref<8x!tpu.dma_semaphore, #tpu.memory_space<semaphore_mem>> -> memref<1x!tpu.dma_semaphore, #tpu.memory_space<semaphore_mem>>
    %55 = tpu.memref_squeeze %54 : memref<1x!tpu.dma_semaphore, #tpu.memory_space<semaphore_mem>> -> memref<!tpu.dma_semaphore, #tpu.memory_space<semaphore_mem>>
    tpu.wait_dma2 semaphore(%55 : memref<!tpu.dma_semaphore, #tpu.memory_space<semaphore_mem>>) src(%52 : memref<1x32xf32, #tpu.memory_space<any>>) dst(%53 : memref<1x32xf32, #tpu.memory_space<vmem>>)
    %c4_i32_40 = arith.constant 4 : i32
    %c0_i32_41 = arith.constant 0 : i32
    %56 = tpu.memref_slice %arg1[%20, %c0_i32_41] : memref<40x32xf32, #tpu.memory_space<any>> -> memref<1x32xf32, #tpu.memory_space<any>>
    %c4_i32_42 = arith.constant 4 : i32
    %c0_i32_43 = arith.constant 0 : i32
    %57 = tpu.memref_slice %arg34[%c4_i32_42, %c0_i32_43] : memref<8x32xf32, #tpu.memory_space<vmem>> -> memref<1x32xf32, #tpu.memory_space<vmem>>
    %58 = tpu.memref_slice %arg35[%c4_i32_40] : memref<8x!tpu.dma_semaphore, #tpu.memory_space<semaphore_mem>> -> memref<1x!tpu.dma_semaphore, #tpu.memory_space<semaphore_mem>>
    %59 = tpu.memref_squeeze %58 : memref<1x!tpu.dma_semaphore, #tpu.memory_space<semaphore_mem>> -> memref<!tpu.dma_semaphore, #tpu.memory_space<semaphore_mem>>
    tpu.wait_dma2 semaphore(%59 : memref<!tpu.dma_semaphore, #tpu.memory_space<semaphore_mem>>) src(%56 : memref<1x32xf32, #tpu.memory_space<any>>) dst(%57 : memref<1x32xf32, #tpu.memory_space<vmem>>)
    %c5_i32_44 = arith.constant 5 : i32
    %c0_i32_45 = arith.constant 0 : i32
    %60 = tpu.memref_slice %arg1[%25, %c0_i32_45] : memref<40x32xf32, #tpu.memory_space<any>> -> memref<1x32xf32, #tpu.memory_space<any>>
    %c5_i32_46 = arith.constant 5 : i32
    %c0_i32_47 = arith.constant 0 : i32
    %61 = tpu.memref_slice %arg34[%c5_i32_46, %c0_i32_47] : memref<8x32xf32, #tpu.memory_space<vmem>> -> memref<1x32xf32, #tpu.memory_space<vmem>>
    %62 = tpu.memref_slice %arg35[%c5_i32_44] : memref<8x!tpu.dma_semaphore, #tpu.memory_space<semaphore_mem>> -> memref<1x!tpu.dma_semaphore, #tpu.memory_space<semaphore_mem>>
    %63 = tpu.memref_squeeze %62 : memref<1x!tpu.dma_semaphore, #tpu.memory_space<semaphore_mem>> -> memref<!tpu.dma_semaphore, #tpu.memory_space<semaphore_mem>>
    tpu.wait_dma2 semaphore(%63 : memref<!tpu.dma_semaphore, #tpu.memory_space<semaphore_mem>>) src(%60 : memref<1x32xf32, #tpu.memory_space<any>>) dst(%61 : memref<1x32xf32, #tpu.memory_space<vmem>>)
    %c6_i32_48 = arith.constant 6 : i32
    %c0_i32_49 = arith.constant 0 : i32
    %64 = tpu.memref_slice %arg1[%30, %c0_i32_49] : memref<40x32xf32, #tpu.memory_space<any>> -> memref<1x32xf32, #tpu.memory_space<any>>
    %c6_i32_50 = arith.constant 6 : i32
    %c0_i32_51 = arith.constant 0 : i32
    %65 = tpu.memref_slice %arg34[%c6_i32_50, %c0_i32_51] : memref<8x32xf32, #tpu.memory_space<vmem>> -> memref<1x32xf32, #tpu.memory_space<vmem>>
    %66 = tpu.memref_slice %arg35[%c6_i32_48] : memref<8x!tpu.dma_semaphore, #tpu.memory_space<semaphore_mem>> -> memref<1x!tpu.dma_semaphore, #tpu.memory_space<semaphore_mem>>
    %67 = tpu.memref_squeeze %66 : memref<1x!tpu.dma_semaphore, #tpu.memory_space<semaphore_mem>> -> memref<!tpu.dma_semaphore, #tpu.memory_space<semaphore_mem>>
    tpu.wait_dma2 semaphore(%67 : memref<!tpu.dma_semaphore, #tpu.memory_space<semaphore_mem>>) src(%64 : memref<1x32xf32, #tpu.memory_space<any>>) dst(%65 : memref<1x32xf32, #tpu.memory_space<vmem>>)
    %c7_i32_52 = arith.constant 7 : i32
    %c0_i32_53 = arith.constant 0 : i32
    %68 = tpu.memref_slice %arg1[%35, %c0_i32_53] : memref<40x32xf32, #tpu.memory_space<any>> -> memref<1x32xf32, #tpu.memory_space<any>>
    %c7_i32_54 = arith.constant 7 : i32
    %c0_i32_55 = arith.constant 0 : i32
    %69 = tpu.memref_slice %arg34[%c7_i32_54, %c0_i32_55] : memref<8x32xf32, #tpu.memory_space<vmem>> -> memref<1x32xf32, #tpu.memory_space<vmem>>
    %70 = tpu.memref_slice %arg35[%c7_i32_52] : memref<8x!tpu.dma_semaphore, #tpu.memory_space<semaphore_mem>> -> memref<1x!tpu.dma_semaphore, #tpu.memory_space<semaphore_mem>>
    %71 = tpu.memref_squeeze %70 : memref<1x!tpu.dma_semaphore, #tpu.memory_space<semaphore_mem>> -> memref<!tpu.dma_semaphore, #tpu.memory_space<semaphore_mem>>
    tpu.wait_dma2 semaphore(%71 : memref<!tpu.dma_semaphore, #tpu.memory_space<semaphore_mem>>) src(%68 : memref<1x32xf32, #tpu.memory_space<any>>) dst(%69 : memref<1x32xf32, #tpu.memory_space<vmem>>)
    %c0_56 = arith.constant 0 : index
    %c0_57 = arith.constant 0 : index
    %72 = vector.load %arg34[%c0_56, %c0_57] : memref<8x32xf32, #tpu.memory_space<vmem>>, vector<8x32xf32>
    %c0_58 = arith.constant 0 : index
    %c0_59 = arith.constant 0 : index
    %73 = vector.load %arg2[%c0_58, %c0_59] : memref<8x32xf32, #tpu.memory_space<vmem>>, vector<8x32xf32>
    %c0_60 = arith.constant 0 : index
    %c0_61 = arith.constant 0 : index
    %74 = vector.load %arg3[%c0_60, %c0_61] : memref<8x32xf32, #tpu.memory_space<vmem>>, vector<8x32xf32>
    %c0_62 = arith.constant 0 : index
    %c0_63 = arith.constant 0 : index
    %75 = vector.load %arg4[%c0_62, %c0_63] : memref<8x32xf32, #tpu.memory_space<vmem>>, vector<8x32xf32>
    %c0_64 = arith.constant 0 : index
    %c0_65 = arith.constant 0 : index
    %c0_66 = arith.constant 0 : index
    %76 = vector.load %arg5[%c0_64, %c0_65, %c0_66] : memref<8x8x32xf32, #tpu.memory_space<vmem>>, vector<8x8x32xf32>
    %c0_67 = arith.constant 0 : index
    %c0_68 = arith.constant 0 : index
    %77 = vector.load %arg6[%c0_67, %c0_68] : memref<32x32xf32, #tpu.memory_space<vmem>>, vector<32x32xf32>
    %cst = arith.constant dense<0.000000e+00> : vector<8x32xf32>
    %78 = tpu.matmul %72, %77, %cst {dimension_numbers = #tpu.dot_dimension_numbers<[1], [0], [0], [1], [0, 0, 1, 1], [], []>} : vector<8x32xf32>, vector<32x32xf32>, vector<8x32xf32> -> vector<8x32xf32>
    %c0_69 = arith.constant 0 : index
    %c0_70 = arith.constant 0 : index
    %79 = vector.load %arg7[%c0_69, %c0_70] : memref<32x32xf32, #tpu.memory_space<vmem>>, vector<32x32xf32>
    %cst_71 = arith.constant dense<0.000000e+00> : vector<8x32xf32>
    %80 = tpu.matmul %73, %79, %cst_71 {dimension_numbers = #tpu.dot_dimension_numbers<[1], [0], [0], [1], [0, 0, 1, 1], [], []>} : vector<8x32xf32>, vector<32x32xf32>, vector<8x32xf32> -> vector<8x32xf32>
    %81 = arith.addf %78, %80 : vector<8x32xf32>
    %c0_72 = arith.constant 0 : index
    %c0_73 = arith.constant 0 : index
    %82 = vector.load %arg8[%c0_72, %c0_73] : memref<1x32xf32, #tpu.memory_space<vmem>>, vector<1x32xf32>
    %83 = vector.broadcast %82 : vector<1x32xf32> to vector<8x32xf32>
    %84 = arith.addf %81, %83 : vector<8x32xf32>
    %c0_74 = arith.constant 0 : index
    %c0_75 = arith.constant 0 : index
    %85 = vector.load %arg9[%c0_74, %c0_75] : memref<32x32xf32, #tpu.memory_space<vmem>>, vector<32x32xf32>
    %cst_76 = arith.constant dense<0.000000e+00> : vector<8x32xf32>
    %86 = tpu.matmul %84, %85, %cst_76 {dimension_numbers = #tpu.dot_dimension_numbers<[1], [0], [0], [1], [0, 0, 1, 1], [], []>} : vector<8x32xf32>, vector<32x32xf32>, vector<8x32xf32> -> vector<8x32xf32>
    %c0_77 = arith.constant 0 : index
    %c0_78 = arith.constant 0 : index
    %87 = vector.load %arg10[%c0_77, %c0_78] : memref<32x32xf32, #tpu.memory_space<vmem>>, vector<32x32xf32>
    %cst_79 = arith.constant dense<0.000000e+00> : vector<8x32xf32>
    %88 = tpu.matmul %74, %87, %cst_79 {dimension_numbers = #tpu.dot_dimension_numbers<[1], [0], [0], [1], [0, 0, 1, 1], [], []>} : vector<8x32xf32>, vector<32x32xf32>, vector<8x32xf32> -> vector<8x32xf32>
    %89 = arith.addf %86, %88 : vector<8x32xf32>
    %c0_80 = arith.constant 0 : index
    %c0_81 = arith.constant 0 : index
    %90 = vector.load %arg11[%c0_80, %c0_81] : memref<1x32xf32, #tpu.memory_space<vmem>>, vector<1x32xf32>
    %91 = vector.broadcast %90 : vector<1x32xf32> to vector<8x32xf32>
    %92 = arith.addf %89, %91 : vector<8x32xf32>
    %93 = arith.negf %92 : vector<8x32xf32>
    %94 = math.exp %93 : vector<8x32xf32>
    %cst_82 = arith.constant 1.000000e+00 : f32
    %95 = vector.broadcast %cst_82 : f32 to vector<8x32xf32>
    %96 = arith.addf %95, %94 : vector<8x32xf32>
    %97 = arith.divf %95, %96 : vector<8x32xf32>
    %c0_83 = arith.constant 0 : index
    %c0_84 = arith.constant 0 : index
    %98 = vector.load %arg12[%c0_83, %c0_84] : memref<32x32xf32, #tpu.memory_space<vmem>>, vector<32x32xf32>
    %cst_85 = arith.constant dense<0.000000e+00> : vector<8x32xf32>
    %99 = tpu.matmul %84, %98, %cst_85 {dimension_numbers = #tpu.dot_dimension_numbers<[1], [0], [0], [1], [0, 0, 1, 1], [], []>} : vector<8x32xf32>, vector<32x32xf32>, vector<8x32xf32> -> vector<8x32xf32>
    %c0_86 = arith.constant 0 : index
    %c0_87 = arith.constant 0 : index
    %100 = vector.load %arg13[%c0_86, %c0_87] : memref<32x32xf32, #tpu.memory_space<vmem>>, vector<32x32xf32>
    %cst_88 = arith.constant dense<0.000000e+00> : vector<8x32xf32>
    %101 = tpu.matmul %74, %100, %cst_88 {dimension_numbers = #tpu.dot_dimension_numbers<[1], [0], [0], [1], [0, 0, 1, 1], [], []>} : vector<8x32xf32>, vector<32x32xf32>, vector<8x32xf32> -> vector<8x32xf32>
    %102 = arith.addf %99, %101 : vector<8x32xf32>
    %c0_89 = arith.constant 0 : index
    %c0_90 = arith.constant 0 : index
    %103 = vector.load %arg14[%c0_89, %c0_90] : memref<1x32xf32, #tpu.memory_space<vmem>>, vector<1x32xf32>
    %104 = vector.broadcast %103 : vector<1x32xf32> to vector<8x32xf32>
    %105 = arith.addf %102, %104 : vector<8x32xf32>
    %106 = arith.negf %105 : vector<8x32xf32>
    %107 = math.exp %106 : vector<8x32xf32>
    %cst_91 = arith.constant 1.000000e+00 : f32
    %108 = vector.broadcast %cst_91 : f32 to vector<8x32xf32>
    %109 = arith.addf %108, %107 : vector<8x32xf32>
    %110 = arith.divf %108, %109 : vector<8x32xf32>
    %c0_92 = arith.constant 0 : index
    %c0_93 = arith.constant 0 : index
    %111 = vector.load %arg15[%c0_92, %c0_93] : memref<32x32xf32, #tpu.memory_space<vmem>>, vector<32x32xf32>
    %cst_94 = arith.constant dense<0.000000e+00> : vector<8x32xf32>
    %112 = tpu.matmul %84, %111, %cst_94 {dimension_numbers = #tpu.dot_dimension_numbers<[1], [0], [0], [1], [0, 0, 1, 1], [], []>} : vector<8x32xf32>, vector<32x32xf32>, vector<8x32xf32> -> vector<8x32xf32>
    %c0_95 = arith.constant 0 : index
    %c0_96 = arith.constant 0 : index
    %113 = vector.load %arg16[%c0_95, %c0_96] : memref<32x32xf32, #tpu.memory_space<vmem>>, vector<32x32xf32>
    %cst_97 = arith.constant dense<0.000000e+00> : vector<8x32xf32>
    %114 = tpu.matmul %74, %113, %cst_97 {dimension_numbers = #tpu.dot_dimension_numbers<[1], [0], [0], [1], [0, 0, 1, 1], [], []>} : vector<8x32xf32>, vector<32x32xf32>, vector<8x32xf32> -> vector<8x32xf32>
    %115 = arith.addf %112, %114 : vector<8x32xf32>
    %c0_98 = arith.constant 0 : index
    %c0_99 = arith.constant 0 : index
    %116 = vector.load %arg17[%c0_98, %c0_99] : memref<1x32xf32, #tpu.memory_space<vmem>>, vector<1x32xf32>
    %117 = vector.broadcast %116 : vector<1x32xf32> to vector<8x32xf32>
    %118 = arith.addf %115, %117 : vector<8x32xf32>
    %119 = math.tanh %118 : vector<8x32xf32>
    %c0_100 = arith.constant 0 : index
    %c0_101 = arith.constant 0 : index
    %120 = vector.load %arg18[%c0_100, %c0_101] : memref<32x32xf32, #tpu.memory_space<vmem>>, vector<32x32xf32>
    %cst_102 = arith.constant dense<0.000000e+00> : vector<8x32xf32>
    %121 = tpu.matmul %84, %120, %cst_102 {dimension_numbers = #tpu.dot_dimension_numbers<[1], [0], [0], [1], [0, 0, 1, 1], [], []>} : vector<8x32xf32>, vector<32x32xf32>, vector<8x32xf32> -> vector<8x32xf32>
    %c0_103 = arith.constant 0 : index
    %c0_104 = arith.constant 0 : index
    %122 = vector.load %arg19[%c0_103, %c0_104] : memref<32x32xf32, #tpu.memory_space<vmem>>, vector<32x32xf32>
    %cst_105 = arith.constant dense<0.000000e+00> : vector<8x32xf32>
    %123 = tpu.matmul %74, %122, %cst_105 {dimension_numbers = #tpu.dot_dimension_numbers<[1], [0], [0], [1], [0, 0, 1, 1], [], []>} : vector<8x32xf32>, vector<32x32xf32>, vector<8x32xf32> -> vector<8x32xf32>
    %124 = arith.addf %121, %123 : vector<8x32xf32>
    %c0_106 = arith.constant 0 : index
    %c0_107 = arith.constant 0 : index
    %125 = vector.load %arg20[%c0_106, %c0_107] : memref<1x32xf32, #tpu.memory_space<vmem>>, vector<1x32xf32>
    %126 = vector.broadcast %125 : vector<1x32xf32> to vector<8x32xf32>
    %127 = arith.addf %124, %126 : vector<8x32xf32>
    %128 = arith.negf %127 : vector<8x32xf32>
    %129 = math.exp %128 : vector<8x32xf32>
    %cst_108 = arith.constant 1.000000e+00 : f32
    %130 = vector.broadcast %cst_108 : f32 to vector<8x32xf32>
    %131 = arith.addf %130, %129 : vector<8x32xf32>
    %132 = arith.divf %130, %131 : vector<8x32xf32>
    %133 = arith.mulf %110, %75 : vector<8x32xf32>
    %134 = arith.mulf %97, %119 : vector<8x32xf32>
    %135 = arith.addf %133, %134 : vector<8x32xf32>
    %136 = math.tanh %135 : vector<8x32xf32>
    %137 = arith.mulf %132, %136 : vector<8x32xf32>
    %c0_109 = arith.constant 0 : index
    %c0_110 = arith.constant 0 : index
    %138 = vector.load %arg21[%c0_109, %c0_110] : memref<32x32xf32, #tpu.memory_space<vmem>>, vector<32x32xf32>
    %cst_111 = arith.constant dense<0.000000e+00> : vector<8x32xf32>
    %139 = tpu.matmul %73, %138, %cst_111 {dimension_numbers = #tpu.dot_dimension_numbers<[1], [0], [0], [1], [0, 0, 1, 1], [], []>} : vector<8x32xf32>, vector<32x32xf32>, vector<8x32xf32> -> vector<8x32xf32>
    %c0_112 = arith.constant 0 : index
    %c0_113 = arith.constant 0 : index
    %140 = vector.load %arg22[%c0_112, %c0_113] : memref<32x32xf32, #tpu.memory_space<vmem>>, vector<32x32xf32>
    %cst_114 = arith.constant dense<0.000000e+00> : vector<8x32xf32>
    %141 = tpu.matmul %84, %140, %cst_114 {dimension_numbers = #tpu.dot_dimension_numbers<[1], [0], [0], [1], [0, 0, 1, 1], [], []>} : vector<8x32xf32>, vector<32x32xf32>, vector<8x32xf32> -> vector<8x32xf32>
    %142 = arith.addf %139, %141 : vector<8x32xf32>
    %c0_115 = arith.constant 0 : index
    %c0_116 = arith.constant 0 : index
    %143 = vector.load %arg23[%c0_115, %c0_116] : memref<1x32xf32, #tpu.memory_space<vmem>>, vector<1x32xf32>
    %144 = vector.broadcast %143 : vector<1x32xf32> to vector<8x32xf32>
    %145 = arith.addf %142, %144 : vector<8x32xf32>
    %146 = arith.negf %145 : vector<8x32xf32>
    %147 = math.exp %146 : vector<8x32xf32>
    %cst_117 = arith.constant 1.000000e+00 : f32
    %148 = vector.broadcast %cst_117 : f32 to vector<8x32xf32>
    %149 = arith.addf %148, %147 : vector<8x32xf32>
    %150 = arith.divf %148, %149 : vector<8x32xf32>
    %c0_118 = arith.constant 0 : index
    %c0_119 = arith.constant 0 : index
    %151 = vector.load %arg24[%c0_118, %c0_119] : memref<32x15xf32, #tpu.memory_space<vmem>>, vector<32x15xf32>
    %cst_120 = arith.constant dense<0.000000e+00> : vector<8x15xf32>
    %152 = tpu.matmul %150, %151, %cst_120 {dimension_numbers = #tpu.dot_dimension_numbers<[1], [0], [0], [1], [0, 0, 1, 1], [], []>} : vector<8x32xf32>, vector<32x15xf32>, vector<8x15xf32> -> vector<8x15xf32>
    %c0_121 = arith.constant 0 : index
    %c0_122 = arith.constant 0 : index
    %153 = vector.load %arg25[%c0_121, %c0_122] : memref<1x15xf32, #tpu.memory_space<vmem>>, vector<1x15xf32>
    %154 = vector.broadcast %153 : vector<1x15xf32> to vector<8x15xf32>
    %155 = arith.addf %152, %154 : vector<8x15xf32>
    %156 = arith.negf %155 : vector<8x15xf32>
    %157 = math.exp %156 : vector<8x15xf32>
    %cst_123 = arith.constant 1.000000e+00 : f32
    %158 = vector.broadcast %cst_123 : f32 to vector<8x15xf32>
    %159 = arith.addf %158, %157 : vector<8x15xf32>
    %160 = arith.divf %158, %159 : vector<8x15xf32>
    %cst_124 = arith.constant dense<0xFF800000> : vector<8xf32>
    %161 = vector.multi_reduction <maximumf>, %160, %cst_124 [1] : vector<8x15xf32> to vector<8xf32>
    %162 = vector.shape_cast %161 : vector<8xf32> to vector<8x1xf32>
    %163 = vector.broadcast %162 : vector<8x1xf32> to vector<8x15xf32>
    %164 = arith.subf %160, %163 : vector<8x15xf32>
    %165 = math.exp %164 : vector<8x15xf32>
    %cst_125 = arith.constant dense<0.000000e+00> : vector<8xf32>
    %166 = vector.multi_reduction <add>, %165, %cst_125 [1] : vector<8x15xf32> to vector<8xf32>
    %167 = vector.shape_cast %166 : vector<8xf32> to vector<8x1xf32>
    %168 = tpu.reciprocal %167 : vector<8x1xf32> -> vector<8x1xf32>
    %169 = vector.broadcast %168 : vector<8x1xf32> to vector<8x15xf32>
    %170 = arith.mulf %165, %169 : vector<8x15xf32>
    %171 = vector.extract_strided_slice %170 {offsets = [0, 0], sizes = [8, 8], strides = [1, 1]} : vector<8x15xf32> to vector<8x8xf32>
    %172 = vector.shape_cast %171 : vector<8x8xf32> to vector<8x8x1xf32>
    %173 = vector.broadcast %172 : vector<8x8x1xf32> to vector<8x8x32xf32>
    %174 = arith.mulf %173, %76 : vector<8x8x32xf32>
    %cst_126 = arith.constant dense<0.000000e+00> : vector<8x32xf32>
    %175 = vector.multi_reduction <add>, %174, %cst_126 [1] : vector<8x8x32xf32> to vector<8x32xf32>
    %c0_127 = arith.constant 0 : index
    %c0_128 = arith.constant 0 : index
    %176 = vector.load %arg26[%c0_127, %c0_128] : memref<32x40xf32, #tpu.memory_space<vmem>>, vector<32x40xf32>
    %cst_129 = arith.constant dense<0.000000e+00> : vector<8x40xf32>
    %177 = tpu.matmul %137, %176, %cst_129 {dimension_numbers = #tpu.dot_dimension_numbers<[1], [0], [0], [1], [0, 0, 1, 1], [], []>} : vector<8x32xf32>, vector<32x40xf32>, vector<8x40xf32> -> vector<8x40xf32>
    %c0_130 = arith.constant 0 : index
    %c0_131 = arith.constant 0 : index
    %178 = vector.load %arg27[%c0_130, %c0_131] : memref<32x40xf32, #tpu.memory_space<vmem>>, vector<32x40xf32>
    %cst_132 = arith.constant dense<0.000000e+00> : vector<8x40xf32>
    %179 = tpu.matmul %175, %178, %cst_132 {dimension_numbers = #tpu.dot_dimension_numbers<[1], [0], [0], [1], [0, 0, 1, 1], [], []>} : vector<8x32xf32>, vector<32x40xf32>, vector<8x40xf32> -> vector<8x40xf32>
    %180 = arith.addf %177, %179 : vector<8x40xf32>
    %c0_133 = arith.constant 0 : index
    %c0_134 = arith.constant 0 : index
    %181 = vector.load %arg28[%c0_133, %c0_134] : memref<1x40xf32, #tpu.memory_space<vmem>>, vector<1x40xf32>
    %182 = vector.broadcast %181 : vector<1x40xf32> to vector<8x40xf32>
    %183 = arith.addf %180, %182 : vector<8x40xf32>
    %cst_135 = arith.constant dense<0xFF800000> : vector<8xf32>
    %184 = vector.multi_reduction <maximumf>, %183, %cst_135 [1] : vector<8x40xf32> to vector<8xf32>
    %185 = vector.shape_cast %184 : vector<8xf32> to vector<8x1xf32>
    %186 = vector.broadcast %185 : vector<8x1xf32> to vector<8x40xf32>
    %187 = arith.subf %183, %186 : vector<8x40xf32>
    %188 = math.exp %187 : vector<8x40xf32>
    %cst_136 = arith.constant dense<0.000000e+00> : vector<8xf32>
    %189 = vector.multi_reduction <add>, %188, %cst_136 [1] : vector<8x40xf32> to vector<8xf32>
    %190 = vector.shape_cast %189 : vector<8xf32> to vector<8x1xf32>
    %191 = math.log %190 : vector<8x1xf32>
    %192 = vector.broadcast %185 : vector<8x1xf32> to vector<8x40xf32>
    %193 = arith.subf %183, %192 : vector<8x40xf32>
    %194 = vector.broadcast %191 : vector<8x1xf32> to vector<8x40xf32>
    %195 = arith.subf %193, %194 : vector<8x40xf32>
    %c0_137 = arith.constant 0 : index
    %c0_138 = arith.constant 0 : index
    %196 = vector.load %arg29[%c0_137, %c0_138] : memref<8x40xf32, #tpu.memory_space<vmem>>, vector<8x40xf32>
    tpu.vector_store %arg29[%c0_137, %c0_138], %195 {strides = array<i32>} : memref<8x40xf32, #tpu.memory_space<vmem>>, vector<8x40xf32>,
    %c0_139 = arith.constant 0 : index
    %c0_140 = arith.constant 0 : index
    %197 = vector.load %arg30[%c0_139, %c0_140] : memref<8x32xf32, #tpu.memory_space<vmem>>, vector<8x32xf32>
    tpu.vector_store %arg30[%c0_139, %c0_140], %137 {strides = array<i32>} : memref<8x32xf32, #tpu.memory_space<vmem>>, vector<8x32xf32>,
    %c0_141 = arith.constant 0 : index
    %c0_142 = arith.constant 0 : index
    %198 = vector.load %arg31[%c0_141, %c0_142] : memref<8x8xf32, #tpu.memory_space<vmem>>, vector<8x8xf32>
    tpu.vector_store %arg31[%c0_141, %c0_142], %171 {strides = array<i32>} : memref<8x8xf32, #tpu.memory_space<vmem>>, vector<8x8xf32>,
    %c0_143 = arith.constant 0 : index
    %c0_144 = arith.constant 0 : index
    %199 = vector.load %arg32[%c0_143, %c0_144] : memref<8x32xf32, #tpu.memory_space<vmem>>, vector<8x32xf32>
    tpu.vector_store %arg32[%c0_143, %c0_144], %135 {strides = array<i32>} : memref<8x32xf32, #tpu.memory_space<vmem>>, vector<8x32xf32>,
    %c0_145 = arith.constant 0 : index
    %c0_146 = arith.constant 0 : index
    %200 = vector.load %arg33[%c0_145, %c0_146] : memref<8x32xf32, #tpu.memory_space<vmem>>, vector<8x32xf32>
    tpu.vector_store %arg33[%c0_145, %c0_146], %175 {strides = array<i32>} : memref<8x32xf32, #tpu.memory_space<vmem>>, vector<8x32xf32>,
    return
  }
}

</mosaic_0001>

<llo_original>
// kernel: tpu_custom_call.1
$region0: #{tpu_custom_call.1}
  #allocation0 [shape = 'u32[]', space=smem, size = 0x4, offset = 0x4, fixed_abs, tag = 'smem constant byte address 0x4 - core index']
  #allocation1 [shape = 'u32[144,128]{1,0:T(1,128)}', space=vmem, size = 0x12000, scoped, tag = 'internal scratch']
  #allocation2 [shape = 'f32[8,32]{1,0:T(8,128)}', space=vmem, size = 0x1000, scoped, tag = 'scratch operand']
  #allocation3 [shape = 's32[8]{0}', space=sflag, size = 0x20, scoped, tag = 'scratch operand']
  #allocation42 [shape = 's32[]', space=sflag, size = 0x4, offset = 0, fixed_abs, tag = 'sflag constant byte address 0x0 - dummy sync flag']
  #allocation43 [shape = 's32[]', space=sflag, size = 0x4, offset = 0, fixed_abs, tag = 'sflag constant byte address 0x0 - dummy sync flag']
  #allocation44 [shape = 's32[]', space=sflag, size = 0x4, offset = 0, fixed_abs, tag = 'sflag constant byte address 0x0 - dummy sync flag']
  #allocation45 [shape = 's32[]', space=sflag, size = 0x4, offset = 0, fixed_abs, tag = 'sflag constant byte address 0x0 - dummy sync flag']
  #allocation46 [shape = 's32[]', space=sflag, size = 0x4, offset = 0, fixed_abs, tag = 'sflag constant byte address 0x0 - dummy sync flag']
  #allocation47 [shape = 's32[]', space=sflag, size = 0x4, offset = 0, fixed_abs, tag = 'sflag constant byte address 0x0 - dummy sync flag']
  #allocation48 [shape = 's32[]', space=sflag, size = 0x4, offset = 0, fixed_abs, tag = 'sflag constant byte address 0x0 - dummy sync flag']
  #allocation49 [shape = 's32[]', space=sflag, size = 0x4, offset = 0, fixed_abs, tag = 'sflag constant byte address 0x0 - dummy sync flag']
  %s0 = inlined_call_operand.smem [shape: u32[34], index: -1, kind: input, shape index: {}]
  %s1 = sld [smem:[%s0]]
  %s2 = scalar_lea.smem %s0, 1
  %s3 = sld [smem:[%s2]]
  %s4 = scalar_lea.smem %s0, 2
  %s5 = sld [smem:[%s4]]
  %s6 = scalar_lea.smem %s0, 3
  %s7 = sld [smem:[%s6]]
  %s8 = scalar_lea.smem %s0, 4
  %s9 = sld [smem:[%s8]]
  %s10 = scalar_lea.smem %s0, 5
  %s11 = sld [smem:[%s10]]
  %s12 = scalar_lea.smem %s0, 6
  %s13 = sld [smem:[%s12]]
  %s14 = scalar_lea.smem %s0, 7
  %s15 = sld [smem:[%s14]]
  %s16 = scalar_lea.smem %s0, 8
  %s17 = sld [smem:[%s16]]
  %s18 = scalar_lea.smem %s0, 9
  %s19 = sld [smem:[%s18]]
  %s20 = scalar_lea.smem %s0, 10
  %s21 = sld [smem:[%s20]]
  %s22 = scalar_lea.smem %s0, 11
  %s23 = sld [smem:[%s22]]
  %s24 = scalar_lea.smem %s0, 12
  %s25 = sld [smem:[%s24]]
  %s26 = scalar_lea.smem %s0, 13
  %s27 = sld [smem:[%s26]]
  %s28 = scalar_lea.smem %s0, 14
  %s29 = sld [smem:[%s28]]
  %s30 = scalar_lea.smem %s0, 15
  %s31 = sld [smem:[%s30]]
  %s32 = scalar_lea.smem %s0, 16
  %s33 = sld [smem:[%s32]]
  %s34 = scalar_lea.smem %s0, 17
  %s35 = sld [smem:[%s34]]
  %s36 = scalar_lea.smem %s0, 18
  %s37 = sld [smem:[%s36]]
  %s38 = scalar_lea.smem %s0, 19
  %s39 = sld [smem:[%s38]]
  %s40 = scalar_lea.smem %s0, 20
  %s41 = sld [smem:[%s40]]
  %s42 = scalar_lea.smem %s0, 21
  %s43 = sld [smem:[%s42]]
  %s44 = scalar_lea.smem %s0, 22
  %s45 = sld [smem:[%s44]]
  %s46 = scalar_lea.smem %s0, 23
  %s47 = sld [smem:[%s46]]
  %s48 = scalar_lea.smem %s0, 24
  %s49 = sld [smem:[%s48]]
  %s50 = scalar_lea.smem %s0, 25
  %s51 = sld [smem:[%s50]]
  %s52 = scalar_lea.smem %s0, 26
  %s53 = sld [smem:[%s52]]
  %s54 = scalar_lea.smem %s0, 27
  %s55 = sld [smem:[%s54]]
  %s56 = scalar_lea.smem %s0, 28
  %s57 = sld [smem:[%s56]]
  %s58 = scalar_lea.smem %s0, 29
  %s59 = sld [smem:[%s58]]
  %s60 = scalar_lea.smem %s0, 30
  %s61 = sld [smem:[%s60]]
  %s62 = scalar_lea.smem %s0, 31
  %s63 = sld [smem:[%s62]]
  %s64 = scalar_lea.smem %s0, 32
  %s65 = sld [smem:[%s64]]
  %s66 = scalar_lea.smem %s0, 33
  %s67 = sld [smem:[%s66]]
  %68 = xla_tuple %s59, %s61, %s63, %s65, %s67
  %s69 = sld [smem:[#allocation0]]
  $region470: #{tpu_custom_call.1} parent=0
    _
  %s71 = ssub.s32 1, %s69
  %s72 = scalar_select 0, %s71, %s69
  $region1: #{tpu_custom_call.1} parent=0
    #allocation4 [shape = 'u8[512]{0}', space=smem, size = 0x200, scoped, tag = 'input window, operand 0, single buffered']
    #allocation5 [shape = 's32[1]{0}', space=sflag, size = 0x4, scoped, tag = 'scoped memory for tpu_custom_call.1']
    #allocation6 [shape = 's32[1]{0}', space=sflag, size = 0x4, scoped, tag = 'scoped memory for tpu_custom_call.1']
    #allocation7 [shape = 's32[1]{0}', space=sflag, size = 0x4, scoped, tag = 'scoped memory for tpu_custom_call.1']
    #allocation8 [shape = 'u8[4096]{0}', space=vmem, size = 0x1000, scoped, tag = 'input window, operand 2, single buffered']
    #allocation9 [shape = 'u8[4096]{0}', space=vmem, size = 0x1000, scoped, tag = 'input window, operand 3, single buffered']
    #allocation10 [shape = 's32[1]{0}', space=sflag, size = 0x4, scoped, tag = 'scoped memory for tpu_custom_call.1']
    #allocation11 [shape = 'u8[4096]{0}', space=vmem, size = 0x1000, scoped, tag = 'input window, operand 4, single buffered']
    #allocation12 [shape = 'u8[512]{0}', space=vmem, size = 0x400, scoped, tag = 'input window, operand 8, single buffered']
    #allocation13 [shape = 's32[1]{0}', space=sflag, size = 0x4, scoped, tag = 'scoped memory for tpu_custom_call.1']
    #allocation14 [shape = 'u8[16384]{0}', space=vmem, size = 0x4000, scoped, tag = 'input window, operand 9, single buffered']
    #allocation15 [shape = 'u8[16384]{0}', space=vmem, size = 0x4000, scoped, tag = 'input window, operand 10, single buffered']
    #allocation16 [shape = 's32[1]{0}', space=sflag, size = 0x4, scoped, tag = 'scoped memory for tpu_custom_call.1']
    #allocation17 [shape = 'u8[512]{0}', space=vmem, size = 0x400, scoped, tag = 'input window, operand 11, single buffered']
    #allocation18 [shape = 'u8[16384]{0}', space=vmem, size = 0x4000, scoped, tag = 'input window, operand 13, single buffered']
    #allocation19 [shape = 's32[1]{0}', space=sflag, size = 0x4, scoped, tag = 'scoped memory for tpu_custom_call.1']
    #allocation20 [shape = 'u8[16384]{0}', space=vmem, size = 0x4000, scoped, tag = 'input window, operand 15, single buffered']
    #allocation21 [shape = 'u8[16384]{0}', space=vmem, size = 0x4000, scoped, tag = 'input window, operand 16, single buffered']
    #allocation22 [shape = 's32[1]{0}', space=sflag, size = 0x4, scoped, tag = 'scoped memory for tpu_custom_call.1']
    #allocation23 [shape = 'u8[512]{0}', space=vmem, size = 0x400, scoped, tag = 'input window, operand 17, single buffered']
    #allocation24 [shape = 'u8[16384]{0}', space=vmem, size = 0x4000, scoped, tag = 'input window, operand 18, single buffered']
    #allocation25 [shape = 's32[1]{0}', space=sflag, size = 0x4, scoped, tag = 'scoped memory for tpu_custom_call.1']
    #allocation26 [shape = 'u8[16384]{0}', space=vmem, size = 0x4000, scoped, tag = 'input window, operand 19, single buffered']
    #allocation27 [shape = 'u8[512]{0}', space=vmem, size = 0x400, scoped, tag = 'input window, operand 20, single buffered']
    #allocation28 [shape = 's32[1]{0}', space=sflag, size = 0x4, scoped, tag = 'scoped memory for tpu_custom_call.1']
    #allocation29 [shape = 'u8[16384]{0}', space=vmem, size = 0x4000, scoped, tag = 'input window, operand 22, single buffered']
    #allocation30 [shape = 'u8[512]{0}', space=vmem, size = 0x400, scoped, tag = 'input window, operand 23, single buffered']
    #allocation31 [shape = 's32[1]{0}', space=sflag, size = 0x4, scoped, tag = 'scoped memory for tpu_custom_call.1']
    #allocation32 [shape = 'u8[16384]{0}', space=vmem, size = 0x4000, scoped, tag = 'input window, operand 26, single buffered']
    #allocation33 [shape = 'u8[16384]{0}', space=vmem, size = 0x4000, scoped, tag = 'input window, operand 27, single buffered']
    #allocation34 [shape = 's32[1]{0}', space=sflag, size = 0x4, scoped, tag = 'scoped memory for tpu_custom_call.1']
    #allocation35 [shape = 'u8[4096]{0}', space=vmem, size = 0x1000, scoped, tag = 'output window, operand 0, single buffered']
    #allocation36 [shape = 'u8[4096]{0}', space=vmem, size = 0x1000, scoped, tag = 'output window, operand 1, single buffered']
    #allocation37 [shape = 's32[1]{0}', space=sflag, size = 0x4, scoped, tag = 'scoped memory for tpu_custom_call.1']
    #allocation38 [shape = 'u8[4096]{0}', space=vmem, size = 0x1000, scoped, tag = 'output window, operand 2, single buffered']
    #allocation39 [shape = 'u8[4096]{0}', space=vmem, size = 0x1000, scoped, tag = 'output window, operand 3, single buffered']
    #allocation40 [shape = 's32[1]{0}', space=sflag, size = 0x4, scoped, tag = 'scoped memory for tpu_custom_call.1']
    #allocation41 [shape = 'u8[4096]{0}', space=vmem, size = 0x1000, scoped, tag = 'output window, operand 4, single buffered']
    %73 = vsyncpa [#allocation7], 0
    %74 = vsyncpa [#allocation5], 0
    %75 = vsyncpa [#allocation10], 0
    %76 = vsyncpa [#allocation13], 0
    %77 = vsyncpa [#allocation16], 0
    %78 = vsyncpa [#allocation19], 0
    %79 = vsyncpa [#allocation22], 0
    %80 = vsyncpa [#allocation25], 0
    %81 = vsyncpa [#allocation28], 0
    %82 = vsyncpa [#allocation31], 0
    %83 = vsyncpa [#allocation34], 0
    %84 = vsyncpa [#allocation6], 0
    %85 = vsyncpa [#allocation37], 0
    %86 = vsyncpa [#allocation40], 0
    // Predicated region
    $region2: #{tpu_custom_call.1} parent=1 // pred_check
      _
    $region3: #{tpu_custom_call.1} parent=1 // pred_check_branch
      %88 = sbr.rel (0) target = $region5
    $region4: #{tpu_custom_call.1} parent=1 // pred_region
      %s90 = ssub.s32 16, 16
      %91 = vsyncadd [#allocation7], %s90
      %s93 = sshll.u32 %s1, 4
      %s94 = int_to_ptr.vmem [resolvable:$true] %s93
      %96 = dma.vmem_to_smem %s94, 16, [#allocation4], [#allocation7]
    $region5: #{tpu_custom_call.1} parent=1 // pred_fallthru
      _
    // Predicated region
    $region6: #{tpu_custom_call.1} parent=1 // pred_check
      _
    $region7: #{tpu_custom_call.1} parent=1 // pred_check_branch
      %98 = sbr.rel (0) target = $region9
    $region8: #{tpu_custom_call.1} parent=1 // pred_region
      %s100 = ssub.s32 128, 128
      %101 = vsyncadd [#allocation5], %s100
      %s103 = sshll.u32 [#allocation8], 4
      %s104 = int_to_ptr.vmem [resolvable:$true] %s103
      %106 = dma.hbm_to_vmem [thread:$0]  %s5, 128, %s104, [#allocation5]
    $region9: #{tpu_custom_call.1} parent=1 // pred_fallthru
      _
    // Predicated region
    $region10: #{tpu_custom_call.1} parent=1 // pred_check
      _
    $region11: #{tpu_custom_call.1} parent=1 // pred_check_branch
      %108 = sbr.rel (0) target = $region13
    $region12: #{tpu_custom_call.1} parent=1 // pred_region
      %s110 = ssub.s32 128, 128
      %111 = vsyncadd [#allocation10], %s110
      %s113 = sshll.u32 [#allocation9], 4
      %s114 = int_to_ptr.vmem [resolvable:$true] %s113
      %116 = dma.hbm_to_vmem [thread:$0]  %s7, 128, %s114, [#allocation10]
    $region13: #{tpu_custom_call.1} parent=1 // pred_fallthru
      _
    // Predicated region
    $region14: #{tpu_custom_call.1} parent=1 // pred_check
      _
    $region15: #{tpu_custom_call.1} parent=1 // pred_check_branch
      %118 = sbr.rel (0) target = $region17
    $region16: #{tpu_custom_call.1} parent=1 // pred_region
      %s120 = ssub.s32 128, 128
      %121 = vsyncadd [#allocation10], %s120
      %s123 = sshll.u32 [#allocation11], 4
      %s124 = int_to_ptr.vmem [resolvable:$true] %s123
      %126 = dma.hbm_to_vmem [thread:$0]  %s9, 128, %s124, [#allocation10]
    $region17: #{tpu_custom_call.1} parent=1 // pred_fallthru
      _
    // Predicated region
    $region18: #{tpu_custom_call.1} parent=1 // pred_check
      _
    $region19: #{tpu_custom_call.1} parent=1 // pred_check_branch
      %128 = sbr.rel (0) target = $region21
    $region20: #{tpu_custom_call.1} parent=1 // pred_region
      _
    $region21: #{tpu_custom_call.1} parent=1 // pred_fallthru
      _
    // Predicated region
    $region22: #{tpu_custom_call.1} parent=1 // pred_check
      _
    $region23: #{tpu_custom_call.1} parent=1 // pred_check_branch
      %130 = sbr.rel (0) target = $region25
    $region24: #{tpu_custom_call.1} parent=1 // pred_region
      _
    $region25: #{tpu_custom_call.1} parent=1 // pred_fallthru
      _
    // Predicated region
    $region26: #{tpu_custom_call.1} parent=1 // pred_check
      _
    $region27: #{tpu_custom_call.1} parent=1 // pred_check_branch
      %132 = sbr.rel (0) target = $region29
    $region28: #{tpu_custom_call.1} parent=1 // pred_region
      _
    $region29: #{tpu_custom_call.1} parent=1 // pred_fallthru
      _
    // Predicated region
    $region30: #{tpu_custom_call.1} parent=1 // pred_check
      _
    $region31: #{tpu_custom_call.1} parent=1 // pred_check_branch
      %134 = sbr.rel (0) target = $region33
    $region32: #{tpu_custom_call.1} parent=1 // pred_region
      %s136 = ssub.s32 16, 16
      %137 = vsyncadd [#allocation13], %s136
      %s139 = sshll.u32 [#allocation12], 4
      %s140 = int_to_ptr.vmem [resolvable:$true] %s139
      %142 = dma.hbm_to_vmem [thread:$0]  %s17, 16, %s140, [#allocation13]
    $region33: #{tpu_custom_call.1} parent=1 // pred_fallthru
      _
    // Predicated region
    $region34: #{tpu_custom_call.1} parent=1 // pred_check
      _
    $region35: #{tpu_custom_call.1} parent=1 // pred_check_branch
      %144 = sbr.rel (0) target = $region37
    $region36: #{tpu_custom_call.1} parent=1 // pred_region
      %s146 = ssub.s32 512, 512
      %147 = vsyncadd [#allocation13], %s146
      %s148 = sshll.u32 [#allocation14], 4
      %s149 = int_to_ptr.vmem [resolvable:$true] %s148
      %154 = dma.hbm_to_vmem [thread:$0]  %s19, 512, %s149, [#allocation13], 128, 128, 8
    $region37: #{tpu_custom_call.1} parent=1 // pred_fallthru
      _
    // Predicated region
    $region38: #{tpu_custom_call.1} parent=1 // pred_check
      _
    $region39: #{tpu_custom_call.1} parent=1 // pred_check_branch
      %156 = sbr.rel (0) target = $region41
    $region40: #{tpu_custom_call.1} parent=1 // pred_region
      %s158 = ssub.s32 512, 512
      %159 = vsyncadd [#allocation16], %s158
      %s160 = sshll.u32 [#allocation15], 4
      %s161 = int_to_ptr.vmem [resolvable:$true] %s160
      %166 = dma.hbm_to_vmem [thread:$0]  %s21, 512, %s161, [#allocation16], 128, 128, 8
    $region41: #{tpu_custom_call.1} parent=1 // pred_fallthru
      _
    // Predicated region
    $region42: #{tpu_custom_call.1} parent=1 // pred_check
      _
    $region43: #{tpu_custom_call.1} parent=1 // pred_check_branch
      %168 = sbr.rel (0) target = $region45
    $region44: #{tpu_custom_call.1} parent=1 // pred_region
      %s170 = ssub.s32 16, 16
      %171 = vsyncadd [#allocation16], %s170
      %s173 = sshll.u32 [#allocation17], 4
      %s174 = int_to_ptr.vmem [resolvable:$true] %s173
      %176 = dma.hbm_to_vmem [thread:$0]  %s23, 16, %s174, [#allocation16]
    $region45: #{tpu_custom_call.1} parent=1 // pred_fallthru
      _
    // Predicated region
    $region46: #{tpu_custom_call.1} parent=1 // pred_check
      _
    $region47: #{tpu_custom_call.1} parent=1 // pred_check_branch
      %178 = sbr.rel (0) target = $region49
    $region48: #{tpu_custom_call.1} parent=1 // pred_region
      _
    $region49: #{tpu_custom_call.1} parent=1 // pred_fallthru
      _
    // Predicated region
    $region50: #{tpu_custom_call.1} parent=1 // pred_check
      _
    $region51: #{tpu_custom_call.1} parent=1 // pred_check_branch
      %180 = sbr.rel (0) target = $region53
    $region52: #{tpu_custom_call.1} parent=1 // pred_region
      %s182 = ssub.s32 512, 512
      %183 = vsyncadd [#allocation19], %s182
      %s184 = sshll.u32 [#allocation18], 4
      %s185 = int_to_ptr.vmem [resolvable:$true] %s184
      %190 = dma.hbm_to_vmem [thread:$0]  %s27, 512, %s185, [#allocation19], 128, 128, 8
    $region53: #{tpu_custom_call.1} parent=1 // pred_fallthru
      _
    // Predicated region
    $region54: #{tpu_custom_call.1} parent=1 // pred_check
      _
    $region55: #{tpu_custom_call.1} parent=1 // pred_check_branch
      %192 = sbr.rel (0) target = $region57
    $region56: #{tpu_custom_call.1} parent=1 // pred_region
      _
    $region57: #{tpu_custom_call.1} parent=1 // pred_fallthru
      _
    // Predicated region
    $region58: #{tpu_custom_call.1} parent=1 // pred_check
      _
    $region59: #{tpu_custom_call.1} parent=1 // pred_check_branch
      %194 = sbr.rel (0) target = $region61
    $region60: #{tpu_custom_call.1} parent=1 // pred_region
      %s196 = ssub.s32 512, 512
      %197 = vsyncadd [#allocation19], %s196
      %s198 = sshll.u32 [#allocation20], 4
      %s199 = int_to_ptr.vmem [resolvable:$true] %s198
      %204 = dma.hbm_to_vmem [thread:$0]  %s31, 512, %s199, [#allocation19], 128, 128, 8
    $region61: #{tpu_custom_call.1} parent=1 // pred_fallthru
      _
    // Predicated region
    $region62: #{tpu_custom_call.1} parent=1 // pred_check
      _
    $region63: #{tpu_custom_call.1} parent=1 // pred_check_branch
      %206 = sbr.rel (0) target = $region65
    $region64: #{tpu_custom_call.1} parent=1 // pred_region
      %s208 = ssub.s32 512, 512
      %209 = vsyncadd [#allocation22], %s208
      %s210 = sshll.u32 [#allocation21], 4
      %s211 = int_to_ptr.vmem [resolvable:$true] %s210
      %216 = dma.hbm_to_vmem [thread:$0]  %s33, 512, %s211, [#allocation22], 128, 128, 8
    $region65: #{tpu_custom_call.1} parent=1 // pred_fallthru
      _
    // Predicated region
    $region66: #{tpu_custom_call.1} parent=1 // pred_check
      _
    $region67: #{tpu_custom_call.1} parent=1 // pred_check_branch
      %218 = sbr.rel (0) target = $region69
    $region68: #{tpu_custom_call.1} parent=1 // pred_region
      %s220 = ssub.s32 16, 16
      %221 = vsyncadd [#allocation22], %s220
      %s223 = sshll.u32 [#allocation23], 4
      %s224 = int_to_ptr.vmem [resolvable:$true] %s223
      %226 = dma.hbm_to_vmem [thread:$0]  %s35, 16, %s224, [#allocation22]
    $region69: #{tpu_custom_call.1} parent=1 // pred_fallthru
      _
    // Predicated region
    $region70: #{tpu_custom_call.1} parent=1 // pred_check
      _
    $region71: #{tpu_custom_call.1} parent=1 // pred_check_branch
      %228 = sbr.rel (0) target = $region73
    $region72: #{tpu_custom_call.1} parent=1 // pred_region
      %s230 = ssub.s32 512, 512
      %231 = vsyncadd [#allocation25], %s230
      %s232 = sshll.u32 [#allocation24], 4
      %s233 = int_to_ptr.vmem [resolvable:$true] %s232
      %238 = dma.hbm_to_vmem [thread:$0]  %s37, 512, %s233, [#allocation25], 128, 128, 8
    $region73: #{tpu_custom_call.1} parent=1 // pred_fallthru
      _
    // Predicated region
    $region74: #{tpu_custom_call.1} parent=1 // pred_check
      _
    $region75: #{tpu_custom_call.1} parent=1 // pred_check_branch
      %240 = sbr.rel (0) target = $region77
    $region76: #{tpu_custom_call.1} parent=1 // pred_region
      %s242 = ssub.s32 512, 512
      %243 = vsyncadd [#allocation25], %s242
      %s244 = sshll.u32 [#allocation26], 4
      %s245 = int_to_ptr.vmem [resolvable:$true] %s244
      %250 = dma.hbm_to_vmem [thread:$0]  %s39, 512, %s245, [#allocation25], 128, 128, 8
    $region77: #{tpu_custom_call.1} parent=1 // pred_fallthru
      _
    // Predicated region
    $region78: #{tpu_custom_call.1} parent=1 // pred_check
      _
    $region79: #{tpu_custom_call.1} parent=1 // pred_check_branch
      %252 = sbr.rel (0) target = $region81
    $region80: #{tpu_custom_call.1} parent=1 // pred_region
      %s254 = ssub.s32 16, 16
      %255 = vsyncadd [#allocation28], %s254
      %s257 = sshll.u32 [#allocation27], 4
      %s258 = int_to_ptr.vmem [resolvable:$true] %s257
      %260 = dma.hbm_to_vmem [thread:$0]  %s41, 16, %s258, [#allocation28]
    $region81: #{tpu_custom_call.1} parent=1 // pred_fallthru
      _
    // Predicated region
    $region82: #{tpu_custom_call.1} parent=1 // pred_check
      _
    $region83: #{tpu_custom_call.1} parent=1 // pred_check_branch
      %262 = sbr.rel (0) target = $region85
    $region84: #{tpu_custom_call.1} parent=1 // pred_region
      _
    $region85: #{tpu_custom_call.1} parent=1 // pred_fallthru
      _
    // Predicated region
    $region86: #{tpu_custom_call.1} parent=1 // pred_check
      _
    $region87: #{tpu_custom_call.1} parent=1 // pred_check_branch
      %264 = sbr.rel (0) target = $region89
    $region88: #{tpu_custom_call.1} parent=1 // pred_region
      %s266 = ssub.s32 512, 512
      %267 = vsyncadd [#allocation28], %s266
      %s268 = sshll.u32 [#allocation29], 4
      %s269 = int_to_ptr.vmem [resolvable:$true] %s268
      %274 = dma.hbm_to_vmem [thread:$0]  %s45, 512, %s269, [#allocation28], 128, 128, 8
    $region89: #{tpu_custom_call.1} parent=1 // pred_fallthru
      _
    // Predicated region
    $region90: #{tpu_custom_call.1} parent=1 // pred_check
      _
    $region91: #{tpu_custom_call.1} parent=1 // pred_check_branch
      %276 = sbr.rel (0) target = $region93
    $region92: #{tpu_custom_call.1} parent=1 // pred_region
      %s278 = ssub.s32 16, 16
      %279 = vsyncadd [#allocation31], %s278
      %s281 = sshll.u32 [#allocation30], 4
      %s282 = int_to_ptr.vmem [resolvable:$true] %s281
      %284 = dma.hbm_to_vmem [thread:$0]  %s47, 16, %s282, [#allocation31]
    $region93: #{tpu_custom_call.1} parent=1 // pred_fallthru
      _
    // Predicated region
    $region94: #{tpu_custom_call.1} parent=1 // pred_check
      _
    $region95: #{tpu_custom_call.1} parent=1 // pred_check_branch
      %286 = sbr.rel (0) target = $region97
    $region96: #{tpu_custom_call.1} parent=1 // pred_region
      _
    $region97: #{tpu_custom_call.1} parent=1 // pred_fallthru
      _
    // Predicated region
    $region98: #{tpu_custom_call.1} parent=1 // pred_check
      _
    $region99: #{tpu_custom_call.1} parent=1 // pred_check_branch
      %288 = sbr.rel (0) target = $region101
    $region100: #{tpu_custom_call.1} parent=1 // pred_region
      _
    $region101: #{tpu_custom_call.1} parent=1 // pred_fallthru
      _
    // Predicated region
    $region102: #{tpu_custom_call.1} parent=1 // pred_check
      _
    $region103: #{tpu_custom_call.1} parent=1 // pred_check_branch
      %290 = sbr.rel (0) target = $region105
    $region104: #{tpu_custom_call.1} parent=1 // pred_region
      %s292 = ssub.s32 512, 512
      %293 = vsyncadd [#allocation31], %s292
      %s294 = sshll.u32 [#allocation32], 4
      %s295 = int_to_ptr.vmem [resolvable:$true] %s294
      %300 = dma.hbm_to_vmem [thread:$0]  %s53, 512, %s295, [#allocation31], 128, 128, 8
    $region105: #{tpu_custom_call.1} parent=1 // pred_fallthru
      _
    // Predicated region
    $region106: #{tpu_custom_call.1} parent=1 // pred_check
      _
    $region107: #{tpu_custom_call.1} parent=1 // pred_check_branch
      %302 = sbr.rel (0) target = $region109
    $region108: #{tpu_custom_call.1} parent=1 // pred_region
      %s304 = ssub.s32 512, 512
      %305 = vsyncadd [#allocation34], %s304
      %s306 = sshll.u32 [#allocation33], 4
      %s307 = int_to_ptr.vmem [resolvable:$true] %s306
      %312 = dma.hbm_to_vmem [thread:$0]  %s55, 512, %s307, [#allocation34], 128, 128, 8
    $region109: #{tpu_custom_call.1} parent=1 // pred_fallthru
      _
    // Predicated region
    $region110: #{tpu_custom_call.1} parent=1 // pred_check
      _
    $region111: #{tpu_custom_call.1} parent=1 // pred_check_branch
      %314 = sbr.rel (0) target = $region113
    $region112: #{tpu_custom_call.1} parent=1 // pred_region
      _
    $region113: #{tpu_custom_call.1} parent=1 // pred_fallthru
      _
    // Predicated region
    $region114: #{tpu_custom_call.1} parent=1 // pred_check
      _
    $region115: #{tpu_custom_call.1} parent=1 // pred_check_branch
      %316 = sbr.rel (0) target = $region117
    $region116: #{tpu_custom_call.1} parent=1 // pred_region
      %317 = dma.done [#allocation7], 16
    $region117: #{tpu_custom_call.1} parent=1 // pred_fallthru
      _
    // Predicated region
    $region118: #{tpu_custom_call.1} parent=1 // pred_check
      _
    $region119: #{tpu_custom_call.1} parent=1 // pred_check_branch
      %319 = sbr.rel (0) target = $region121
    $region120: #{tpu_custom_call.1} parent=1 // pred_region
      %320 = dma.done [#allocation5], 128
    $region121: #{tpu_custom_call.1} parent=1 // pred_fallthru
      _
    // Predicated region
    $region122: #{tpu_custom_call.1} parent=1 // pred_check
      _
    $region123: #{tpu_custom_call.1} parent=1 // pred_check_branch
      %322 = sbr.rel (0) target = $region125
    $region124: #{tpu_custom_call.1} parent=1 // pred_region
      %323 = dma.done [#allocation10], 128
    $region125: #{tpu_custom_call.1} parent=1 // pred_fallthru
      _
    // Predicated region
    $region126: #{tpu_custom_call.1} parent=1 // pred_check
      _
    $region127: #{tpu_custom_call.1} parent=1 // pred_check_branch
      %325 = sbr.rel (0) target = $region129
    $region128: #{tpu_custom_call.1} parent=1 // pred_region
      %326 = dma.done [#allocation10], 128
    $region129: #{tpu_custom_call.1} parent=1 // pred_fallthru
      _
    // Predicated region
    $region130: #{tpu_custom_call.1} parent=1 // pred_check
      _
    $region131: #{tpu_custom_call.1} parent=1 // pred_check_branch
      %328 = sbr.rel (0) target = $region133
    $region132: #{tpu_custom_call.1} parent=1 // pred_region
      %329 = dma.done [#allocation13], 16
    $region133: #{tpu_custom_call.1} parent=1 // pred_fallthru
      _
    // Predicated region
    $region134: #{tpu_custom_call.1} parent=1 // pred_check
      _
    $region135: #{tpu_custom_call.1} parent=1 // pred_check_branch
      %331 = sbr.rel (0) target = $region137
    $region136: #{tpu_custom_call.1} parent=1 // pred_region
      %332 = dma.done [#allocation13], 512
    $region137: #{tpu_custom_call.1} parent=1 // pred_fallthru
      _
    // Predicated region
    $region138: #{tpu_custom_call.1} parent=1 // pred_check
      _
    $region139: #{tpu_custom_call.1} parent=1 // pred_check_branch
      %334 = sbr.rel (0) target = $region141
    $region140: #{tpu_custom_call.1} parent=1 // pred_region
      %335 = dma.done [#allocation16], 512
    $region141: #{tpu_custom_call.1} parent=1 // pred_fallthru
      _
    // Predicated region
    $region142: #{tpu_custom_call.1} parent=1 // pred_check
      _
    $region143: #{tpu_custom_call.1} parent=1 // pred_check_branch
      %337 = sbr.rel (0) target = $region145
    $region144: #{tpu_custom_call.1} parent=1 // pred_region
      %338 = dma.done [#allocation16], 16
    $region145: #{tpu_custom_call.1} parent=1 // pred_fallthru
      _
    // Predicated region
    $region146: #{tpu_custom_call.1} parent=1 // pred_check
      _
    $region147: #{tpu_custom_call.1} parent=1 // pred_check_branch
      %340 = sbr.rel (0) target = $region149
    $region148: #{tpu_custom_call.1} parent=1 // pred_region
      %341 = dma.done [#allocation19], 512
    $region149: #{tpu_custom_call.1} parent=1 // pred_fallthru
      _
    // Predicated region
    $region150: #{tpu_custom_call.1} parent=1 // pred_check
      _
    $region151: #{tpu_custom_call.1} parent=1 // pred_check_branch
      %343 = sbr.rel (0) target = $region153
    $region152: #{tpu_custom_call.1} parent=1 // pred_region
      %344 = dma.done [#allocation19], 512
    $region153: #{tpu_custom_call.1} parent=1 // pred_fallthru
      _
    // Predicated region
    $region154: #{tpu_custom_call.1} parent=1 // pred_check
      _
    $region155: #{tpu_custom_call.1} parent=1 // pred_check_branch
      %346 = sbr.rel (0) target = $region157
    $region156: #{tpu_custom_call.1} parent=1 // pred_region
      %347 = dma.done [#allocation22], 512
    $region157: #{tpu_custom_call.1} parent=1 // pred_fallthru
      _
    // Predicated region
    $region158: #{tpu_custom_call.1} parent=1 // pred_check
      _
    $region159: #{tpu_custom_call.1} parent=1 // pred_check_branch
      %349 = sbr.rel (0) target = $region161
    $region160: #{tpu_custom_call.1} parent=1 // pred_region
      %350 = dma.done [#allocation22], 16
    $region161: #{tpu_custom_call.1} parent=1 // pred_fallthru
      _
    // Predicated region
    $region162: #{tpu_custom_call.1} parent=1 // pred_check
      _
    $region163: #{tpu_custom_call.1} parent=1 // pred_check_branch
      %352 = sbr.rel (0) target = $region165
    $region164: #{tpu_custom_call.1} parent=1 // pred_region
      %353 = dma.done [#allocation25], 512
    $region165: #{tpu_custom_call.1} parent=1 // pred_fallthru
      _
    // Predicated region
    $region166: #{tpu_custom_call.1} parent=1 // pred_check
      _
    $region167: #{tpu_custom_call.1} parent=1 // pred_check_branch
      %355 = sbr.rel (0) target = $region169
    $region168: #{tpu_custom_call.1} parent=1 // pred_region
      %356 = dma.done [#allocation25], 512
    $region169: #{tpu_custom_call.1} parent=1 // pred_fallthru
      _
    // Predicated region
    $region170: #{tpu_custom_call.1} parent=1 // pred_check
      _
    $region171: #{tpu_custom_call.1} parent=1 // pred_check_branch
      %358 = sbr.rel (0) target = $region173
    $region172: #{tpu_custom_call.1} parent=1 // pred_region
      %359 = dma.done [#allocation28], 16
    $region173: #{tpu_custom_call.1} parent=1 // pred_fallthru
      _
    // Predicated region
    $region174: #{tpu_custom_call.1} parent=1 // pred_check
      _
    $region175: #{tpu_custom_call.1} parent=1 // pred_check_branch
      %361 = sbr.rel (0) target = $region177
    $region176: #{tpu_custom_call.1} parent=1 // pred_region
      %362 = dma.done [#allocation28], 512
    $region177: #{tpu_custom_call.1} parent=1 // pred_fallthru
      _
    // Predicated region
    $region178: #{tpu_custom_call.1} parent=1 // pred_check
      _
    $region179: #{tpu_custom_call.1} parent=1 // pred_check_branch
      %364 = sbr.rel (0) target = $region181
    $region180: #{tpu_custom_call.1} parent=1 // pred_region
      %365 = dma.done [#allocation31], 16
    $region181: #{tpu_custom_call.1} parent=1 // pred_fallthru
      _
    // Predicated region
    $region182: #{tpu_custom_call.1} parent=1 // pred_check
      _
    $region183: #{tpu_custom_call.1} parent=1 // pred_check_branch
      %367 = sbr.rel (0) target = $region185
    $region184: #{tpu_custom_call.1} parent=1 // pred_region
      %368 = dma.done [#allocation31], 512
    $region185: #{tpu_custom_call.1} parent=1 // pred_fallthru
      _
    // Predicated region
    $region186: #{tpu_custom_call.1} parent=1 // pred_check
      _
    $region187: #{tpu_custom_call.1} parent=1 // pred_check_branch
      %370 = sbr.rel (0) target = $region189
    $region188: #{tpu_custom_call.1} parent=1 // pred_region
      %371 = dma.done [#allocation34], 512
    $region189: #{tpu_custom_call.1} parent=1 // pred_fallthru
      _
    %372 = sfence
    %s373 = sld [smem:[#allocation4]]
    %s374 = scalar_lea.vmem %s3, %s373
    %p376 = scmp.lt.u32.totalorder 1, 8
    %p377 = pneg %p376
    // Predicated region
    $region190: #{tpu_custom_call.1} parent=1 // pred_check
      _
    $region191: #{tpu_custom_call.1} parent=1 // pred_check_branch
      %379 = sbr.rel (%p376) target = $region193
    $region192: #{tpu_custom_call.1} parent=1 // pred_region
      %s394 = sand.u32 1, 7
      %p395 = scmp.eq.s32.totalorder %s394, 0
      %p396 = pneg %p395
      // Predicated region
      $region205: #{tpu_custom_call.1} parent=192 // pred_check
        _
      $region206: #{tpu_custom_call.1} parent=192 // pred_check_branch
        %398 = sbr.rel (%p395) target = $region208
      $region207: #{tpu_custom_call.1} parent=192 // pred_region
        %s399 = sand.u32 1, 7
        %s400 = ssub.s32 1, %s399
        %s401 = scalar_lea.vmem %s374, %s400
        %s402 = ssub.s32 1, %s399
        %s403 = scalar_lea.vmem [#allocation2], %s402
        %s404 = sshllo.u32 0, %s399
        loop: start=0, step=1, limit=1
        $region209: #{tpu_custom_call.1} parent=207 // loop_pre_header
          _
        $region210: #{tpu_custom_call.1} parent=207 // loop_header
          %s406 = sphi 0, %s410
          %p407 = scmp.ge.s32.totalorder %s406, 1
          %s411 = sphi %s401, %s401
          %s412 = sphi %s403, %s403
        $region211: #{tpu_custom_call.1} parent=207 // loop_header_branch
          %409 = sbr.rel (%p407) target = $region215
        $region212: #{tpu_custom_call.1} parent=207 // loop_body
          %v413 = vld [vmem:[%s411] sm:%s404]
          %414 = vst [vmem:[%s412] sm:%s404] %v413
        $region213: #{tpu_custom_call.1} parent=207 // loop_footer
          %s410 = sadd.s32 1, %s406
        $region214: #{tpu_custom_call.1} parent=207 // loop_footer_branch
          %405 = sbr.rel target = $region210
        $region215: #{tpu_custom_call.1} parent=207 // loop_exit
          _
      $region208: #{tpu_custom_call.1} parent=192 // pred_fallthru
        _
    $region193: #{tpu_custom_call.1} parent=1 // pred_fallthru
      _
    // Predicated region
    $region194: #{tpu_custom_call.1} parent=1 // pred_check
      %p380 = pneg %p376
    $region195: #{tpu_custom_call.1} parent=1 // pred_check_branch
      %382 = sbr.rel (%p380) target = $region197
    $region196: #{tpu_custom_call.1} parent=1 // pred_region
      %s383 = sshllo.u32 0, 1
      loop: start=0, step=1, limit=1
      $region198: #{tpu_custom_call.1} parent=196 // loop_pre_header
        _
      $region199: #{tpu_custom_call.1} parent=196 // loop_header
        %s385 = sphi 0, %s389
        %p386 = scmp.ge.s32.totalorder %s385, 1
        %s390 = sphi %s374, %s374
        %s391 = sphi [#allocation2], [#allocation2]
      $region200: #{tpu_custom_call.1} parent=196 // loop_header_branch
        %388 = sbr.rel (%p386) target = $region204
      $region201: #{tpu_custom_call.1} parent=196 // loop_body
        %v392 = vld [vmem:[%s390] sm:%s383]
        %393 = vst [vmem:[%s391] sm:%s383] %v392
      $region202: #{tpu_custom_call.1} parent=196 // loop_footer
        %s389 = sadd.s32 1, %s385
      $region203: #{tpu_custom_call.1} parent=196 // loop_footer_branch
        %384 = sbr.rel target = $region199
      $region204: #{tpu_custom_call.1} parent=196 // loop_exit
        _
    $region197: #{tpu_custom_call.1} parent=1 // pred_fallthru
      _
    // Predicated region
    $region216: #{tpu_custom_call.1} parent=1 // pred_check
      _
    $region217: #{tpu_custom_call.1} parent=1 // pred_check_branch
      %417 = sbr.rel (0) target = $region219
    $region218: #{tpu_custom_call.1} parent=1 // pred_region
      %418 = vsyncadd [#allocation3], 16
    $region219: #{tpu_custom_call.1} parent=1 // pred_fallthru
      _
    %s419 = sld [smem:[#allocation4 + $0x1]]
    %s420 = scalar_lea.vmem %s3, %s419
    %s421 = scalar_lea.vmem [#allocation2], 1
    %s422 = scalar_lea.sflag [#allocation3], 1
    %p424 = scmp.lt.u32.totalorder 1, 8
    %p425 = pneg %p424
    // Predicated region
    $region220: #{tpu_custom_call.1} parent=1 // pred_check
      _
    $region221: #{tpu_custom_call.1} parent=1 // pred_check_branch
      %427 = sbr.rel (%p424) target = $region223
    $region222: #{tpu_custom_call.1} parent=1 // pred_region
      %s442 = sand.u32 1, 7
      %p443 = scmp.eq.s32.totalorder %s442, 0
      %p444 = pneg %p443
      // Predicated region
      $region235: #{tpu_custom_call.1} parent=222 // pred_check
        _
      $region236: #{tpu_custom_call.1} parent=222 // pred_check_branch
        %446 = sbr.rel (%p443) target = $region238
      $region237: #{tpu_custom_call.1} parent=222 // pred_region
        %s447 = sand.u32 1, 7
        %s448 = ssub.s32 1, %s447
        %s449 = scalar_lea.vmem %s420, %s448
        %s450 = ssub.s32 1, %s447
        %s451 = scalar_lea.vmem %s421, %s450 [#allocation2]
        %s452 = sshllo.u32 0, %s447
        loop: start=0, step=1, limit=1
        $region239: #{tpu_custom_call.1} parent=237 // loop_pre_header
          _
        $region240: #{tpu_custom_call.1} parent=237 // loop_header
          %s454 = sphi 0, %s458
          %p455 = scmp.ge.s32.totalorder %s454, 1
          %s459 = sphi %s449, %s449
          %s460 = sphi %s451, %s451
        $region241: #{tpu_custom_call.1} parent=237 // loop_header_branch
          %457 = sbr.rel (%p455) target = $region245
        $region242: #{tpu_custom_call.1} parent=237 // loop_body
          %v461 = vld [vmem:[%s459] sm:%s452]
          %462 = vst [vmem:[%s460] sm:%s452] %v461
        $region243: #{tpu_custom_call.1} parent=237 // loop_footer
          %s458 = sadd.s32 1, %s454
        $region244: #{tpu_custom_call.1} parent=237 // loop_footer_branch
          %453 = sbr.rel target = $region240
        $region245: #{tpu_custom_call.1} parent=237 // loop_exit
          _
      $region238: #{tpu_custom_call.1} parent=222 // pred_fallthru
        _
    $region223: #{tpu_custom_call.1} parent=1 // pred_fallthru
      _
    // Predicated region
    $region224: #{tpu_custom_call.1} parent=1 // pred_check
      %p428 = pneg %p424
    $region225: #{tpu_custom_call.1} parent=1 // pred_check_branch
      %430 = sbr.rel (%p428) target = $region227
    $region226: #{tpu_custom_call.1} parent=1 // pred_region
      %s431 = sshllo.u32 0, 1
      loop: start=0, step=1, limit=1
      $region228: #{tpu_custom_call.1} parent=226 // loop_pre_header
        _
      $region229: #{tpu_custom_call.1} parent=226 // loop_header
        %s433 = sphi 0, %s437
        %p434 = scmp.ge.s32.totalorder %s433, 1
        %s438 = sphi %s420, %s420
        %s439 = sphi %s421, %s421
      $region230: #{tpu_custom_call.1} parent=226 // loop_header_branch
        %436 = sbr.rel (%p434) target = $region234
      $region231: #{tpu_custom_call.1} parent=226 // loop_body
        %v440 = vld [vmem:[%s438] sm:%s431]
        %441 = vst [vmem:[%s439] sm:%s431] %v440
      $region232: #{tpu_custom_call.1} parent=226 // loop_footer
        %s437 = sadd.s32 1, %s433
      $region233: #{tpu_custom_call.1} parent=226 // loop_footer_branch
        %432 = sbr.rel target = $region229
      $region234: #{tpu_custom_call.1} parent=226 // loop_exit
        _
    $region227: #{tpu_custom_call.1} parent=1 // pred_fallthru
      _
    // Predicated region
    $region246: #{tpu_custom_call.1} parent=1 // pred_check
      _
    $region247: #{tpu_custom_call.1} parent=1 // pred_check_branch
      %465 = sbr.rel (0) target = $region249
    $region248: #{tpu_custom_call.1} parent=1 // pred_region
      %466 = vsyncadd %s422, 16
    $region249: #{tpu_custom_call.1} parent=1 // pred_fallthru
      _
    %s467 = sld [smem:[#allocation4 + $0x2]]
    %s468 = scalar_lea.vmem %s3, %s467
    %s469 = scalar_lea.vmem [#allocation2], 2
    %s470 = scalar_lea.sflag [#allocation3], 2
    %p472 = scmp.lt.u32.totalorder 1, 8
    %p473 = pneg %p472
    // Predicated region
    $region250: #{tpu_custom_call.1} parent=1 // pred_check
      _
    $region251: #{tpu_custom_call.1} parent=1 // pred_check_branch
      %475 = sbr.rel (%p472) target = $region253
    $region252: #{tpu_custom_call.1} parent=1 // pred_region
      %s490 = sand.u32 1, 7
      %p491 = scmp.eq.s32.totalorder %s490, 0
      %p492 = pneg %p491
      // Predicated region
      $region265: #{tpu_custom_call.1} parent=252 // pred_check
        _
      $region266: #{tpu_custom_call.1} parent=252 // pred_check_branch
        %494 = sbr.rel (%p491) target = $region268
      $region267: #{tpu_custom_call.1} parent=252 // pred_region
        %s495 = sand.u32 1, 7
        %s496 = ssub.s32 1, %s495
        %s497 = scalar_lea.vmem %s468, %s496
        %s498 = ssub.s32 1, %s495
        %s499 = scalar_lea.vmem %s469, %s498 [#allocation2]
        %s500 = sshllo.u32 0, %s495
        loop: start=0, step=1, limit=1
        $region269: #{tpu_custom_call.1} parent=267 // loop_pre_header
          _
        $region270: #{tpu_custom_call.1} parent=267 // loop_header
          %s502 = sphi 0, %s506
          %p503 = scmp.ge.s32.totalorder %s502, 1
          %s507 = sphi %s497, %s497
          %s508 = sphi %s499, %s499
        $region271: #{tpu_custom_call.1} parent=267 // loop_header_branch
          %505 = sbr.rel (%p503) target = $region275
        $region272: #{tpu_custom_call.1} parent=267 // loop_body
          %v509 = vld [vmem:[%s507] sm:%s500]
          %510 = vst [vmem:[%s508] sm:%s500] %v509
        $region273: #{tpu_custom_call.1} parent=267 // loop_footer
          %s506 = sadd.s32 1, %s502
        $region274: #{tpu_custom_call.1} parent=267 // loop_footer_branch
          %501 = sbr.rel target = $region270
        $region275: #{tpu_custom_call.1} parent=267 // loop_exit
          _
      $region268: #{tpu_custom_call.1} parent=252 // pred_fallthru
        _
    $region253: #{tpu_custom_call.1} parent=1 // pred_fallthru
      _
    // Predicated region
    $region254: #{tpu_custom_call.1} parent=1 // pred_check
      %p476 = pneg %p472
    $region255: #{tpu_custom_call.1} parent=1 // pred_check_branch
      %478 = sbr.rel (%p476) target = $region257
    $region256: #{tpu_custom_call.1} parent=1 // pred_region
      %s479 = sshllo.u32 0, 1
      loop: start=0, step=1, limit=1
      $region258: #{tpu_custom_call.1} parent=256 // loop_pre_header
        _
      $region259: #{tpu_custom_call.1} parent=256 // loop_header
        %s481 = sphi 0, %s485
        %p482 = scmp.ge.s32.totalorder %s481, 1
        %s486 = sphi %s468, %s468
        %s487 = sphi %s469, %s469
      $region260: #{tpu_custom_call.1} parent=256 // loop_header_branch
        %484 = sbr.rel (%p482) target = $region264
      $region261: #{tpu_custom_call.1} parent=256 // loop_body
        %v488 = vld [vmem:[%s486] sm:%s479]
        %489 = vst [vmem:[%s487] sm:%s479] %v488
      $region262: #{tpu_custom_call.1} parent=256 // loop_footer
        %s485 = sadd.s32 1, %s481
      $region263: #{tpu_custom_call.1} parent=256 // loop_footer_branch
        %480 = sbr.rel target = $region259
      $region264: #{tpu_custom_call.1} parent=256 // loop_exit
        _
    $region257: #{tpu_custom_call.1} parent=1 // pred_fallthru
      _
    // Predicated region
    $region276: #{tpu_custom_call.1} parent=1 // pred_check
      _
    $region277: #{tpu_custom_call.1} parent=1 // pred_check_branch
      %513 = sbr.rel (0) target = $region279
    $region278: #{tpu_custom_call.1} parent=1 // pred_region
      %514 = vsyncadd %s470, 16
    $region279: #{tpu_custom_call.1} parent=1 // pred_fallthru
      _
    %s515 = sld [smem:[#allocation4 + $0x3]]
    %s516 = scalar_lea.vmem %s3, %s515
    %s517 = scalar_lea.vmem [#allocation2], 3
    %s518 = scalar_lea.sflag [#allocation3], 3
    %p520 = scmp.lt.u32.totalorder 1, 8
    %p521 = pneg %p520
    // Predicated region
    $region280: #{tpu_custom_call.1} parent=1 // pred_check
      _
    $region281: #{tpu_custom_call.1} parent=1 // pred_check_branch
      %523 = sbr.rel (%p520) target = $region283
    $region282: #{tpu_custom_call.1} parent=1 // pred_region
      %s538 = sand.u32 1, 7
      %p539 = scmp.eq.s32.totalorder %s538, 0
      %p540 = pneg %p539
      // Predicated region
      $region295: #{tpu_custom_call.1} parent=282 // pred_check
        _
      $region296: #{tpu_custom_call.1} parent=282 // pred_check_branch
        %542 = sbr.rel (%p539) target = $region298
      $region297: #{tpu_custom_call.1} parent=282 // pred_region
        %s543 = sand.u32 1, 7
        %s544 = ssub.s32 1, %s543
        %s545 = scalar_lea.vmem %s516, %s544
        %s546 = ssub.s32 1, %s543
        %s547 = scalar_lea.vmem %s517, %s546 [#allocation2]
        %s548 = sshllo.u32 0, %s543
        loop: start=0, step=1, limit=1
        $region299: #{tpu_custom_call.1} parent=297 // loop_pre_header
          _
        $region300: #{tpu_custom_call.1} parent=297 // loop_header
          %s550 = sphi 0, %s554
          %p551 = scmp.ge.s32.totalorder %s550, 1
          %s555 = sphi %s545, %s545
          %s556 = sphi %s547, %s547
        $region301: #{tpu_custom_call.1} parent=297 // loop_header_branch
          %553 = sbr.rel (%p551) target = $region305
        $region302: #{tpu_custom_call.1} parent=297 // loop_body
          %v557 = vld [vmem:[%s555] sm:%s548]
          %558 = vst [vmem:[%s556] sm:%s548] %v557
        $region303: #{tpu_custom_call.1} parent=297 // loop_footer
          %s554 = sadd.s32 1, %s550
        $region304: #{tpu_custom_call.1} parent=297 // loop_footer_branch
          %549 = sbr.rel target = $region300
        $region305: #{tpu_custom_call.1} parent=297 // loop_exit
          _
      $region298: #{tpu_custom_call.1} parent=282 // pred_fallthru
        _
    $region283: #{tpu_custom_call.1} parent=1 // pred_fallthru
      _
    // Predicated region
    $region284: #{tpu_custom_call.1} parent=1 // pred_check
      %p524 = pneg %p520
    $region285: #{tpu_custom_call.1} parent=1 // pred_check_branch
      %526 = sbr.rel (%p524) target = $region287
    $region286: #{tpu_custom_call.1} parent=1 // pred_region
      %s527 = sshllo.u32 0, 1
      loop: start=0, step=1, limit=1
      $region288: #{tpu_custom_call.1} parent=286 // loop_pre_header
        _
      $region289: #{tpu_custom_call.1} parent=286 // loop_header
        %s529 = sphi 0, %s533
        %p530 = scmp.ge.s32.totalorder %s529, 1
        %s534 = sphi %s516, %s516
        %s535 = sphi %s517, %s517
      $region290: #{tpu_custom_call.1} parent=286 // loop_header_branch
        %532 = sbr.rel (%p530) target = $region294
      $region291: #{tpu_custom_call.1} parent=286 // loop_body
        %v536 = vld [vmem:[%s534] sm:%s527]
        %537 = vst [vmem:[%s535] sm:%s527] %v536
      $region292: #{tpu_custom_call.1} parent=286 // loop_footer
        %s533 = sadd.s32 1, %s529
      $region293: #{tpu_custom_call.1} parent=286 // loop_footer_branch
        %528 = sbr.rel target = $region289
      $region294: #{tpu_custom_call.1} parent=286 // loop_exit
        _
    $region287: #{tpu_custom_call.1} parent=1 // pred_fallthru
      _
    // Predicated region
    $region306: #{tpu_custom_call.1} parent=1 // pred_check
      _
    $region307: #{tpu_custom_call.1} parent=1 // pred_check_branch
      %561 = sbr.rel (0) target = $region309
    $region308: #{tpu_custom_call.1} parent=1 // pred_region
      %562 = vsyncadd %s518, 16
    $region309: #{tpu_custom_call.1} parent=1 // pred_fallthru
      _
    %s563 = sld [smem:[#allocation4 + $0x4]]
    %s564 = scalar_lea.vmem %s3, %s563
    %s565 = scalar_lea.vmem [#allocation2], 4
    %s566 = scalar_lea.sflag [#allocation3], 4
    %p568 = scmp.lt.u32.totalorder 1, 8
    %p569 = pneg %p568
    // Predicated region
    $region310: #{tpu_custom_call.1} parent=1 // pred_check
      _
    $region311: #{tpu_custom_call.1} parent=1 // pred_check_branch
      %571 = sbr.rel (%p568) target = $region313
    $region312: #{tpu_custom_call.1} parent=1 // pred_region
      %s586 = sand.u32 1, 7
      %p587 = scmp.eq.s32.totalorder %s586, 0
      %p588 = pneg %p587
      // Predicated region
      $region325: #{tpu_custom_call.1} parent=312 // pred_check
        _
      $region326: #{tpu_custom_call.1} parent=312 // pred_check_branch
        %590 = sbr.rel (%p587) target = $region328
      $region327: #{tpu_custom_call.1} parent=312 // pred_region
        %s591 = sand.u32 1, 7
        %s592 = ssub.s32 1, %s591
        %s593 = scalar_lea.vmem %s564, %s592
        %s594 = ssub.s32 1, %s591
        %s595 = scalar_lea.vmem %s565, %s594 [#allocation2]
        %s596 = sshllo.u32 0, %s591
        loop: start=0, step=1, limit=1
        $region329: #{tpu_custom_call.1} parent=327 // loop_pre_header
          _
        $region330: #{tpu_custom_call.1} parent=327 // loop_header
          %s598 = sphi 0, %s602
          %p599 = scmp.ge.s32.totalorder %s598, 1
          %s603 = sphi %s593, %s593
          %s604 = sphi %s595, %s595
        $region331: #{tpu_custom_call.1} parent=327 // loop_header_branch
          %601 = sbr.rel (%p599) target = $region335
        $region332: #{tpu_custom_call.1} parent=327 // loop_body
          %v605 = vld [vmem:[%s603] sm:%s596]
          %606 = vst [vmem:[%s604] sm:%s596] %v605
        $region333: #{tpu_custom_call.1} parent=327 // loop_footer
          %s602 = sadd.s32 1, %s598
        $region334: #{tpu_custom_call.1} parent=327 // loop_footer_branch
          %597 = sbr.rel target = $region330
        $region335: #{tpu_custom_call.1} parent=327 // loop_exit
          _
      $region328: #{tpu_custom_call.1} parent=312 // pred_fallthru
        _
    $region313: #{tpu_custom_call.1} parent=1 // pred_fallthru
      _
    // Predicated region
    $region314: #{tpu_custom_call.1} parent=1 // pred_check
      %p572 = pneg %p568
    $region315: #{tpu_custom_call.1} parent=1 // pred_check_branch
      %574 = sbr.rel (%p572) target = $region317
    $region316: #{tpu_custom_call.1} parent=1 // pred_region
      %s575 = sshllo.u32 0, 1
      loop: start=0, step=1, limit=1
      $region318: #{tpu_custom_call.1} parent=316 // loop_pre_header
        _
      $region319: #{tpu_custom_call.1} parent=316 // loop_header
        %s577 = sphi 0, %s581
        %p578 = scmp.ge.s32.totalorder %s577, 1
        %s582 = sphi %s564, %s564
        %s583 = sphi %s565, %s565
      $region320: #{tpu_custom_call.1} parent=316 // loop_header_branch
        %580 = sbr.rel (%p578) target = $region324
      $region321: #{tpu_custom_call.1} parent=316 // loop_body
        %v584 = vld [vmem:[%s582] sm:%s575]
        %585 = vst [vmem:[%s583] sm:%s575] %v584
      $region322: #{tpu_custom_call.1} parent=316 // loop_footer
        %s581 = sadd.s32 1, %s577
      $region323: #{tpu_custom_call.1} parent=316 // loop_footer_branch
        %576 = sbr.rel target = $region319
      $region324: #{tpu_custom_call.1} parent=316 // loop_exit
        _
    $region317: #{tpu_custom_call.1} parent=1 // pred_fallthru
      _
    // Predicated region
    $region336: #{tpu_custom_call.1} parent=1 // pred_check
      _
    $region337: #{tpu_custom_call.1} parent=1 // pred_check_branch
      %609 = sbr.rel (0) target = $region339
    $region338: #{tpu_custom_call.1} parent=1 // pred_region
      %610 = vsyncadd %s566, 16
    $region339: #{tpu_custom_call.1} parent=1 // pred_fallthru
      _
    %s611 = sld [smem:[#allocation4 + $0x5]]
    %s612 = scalar_lea.vmem %s3, %s611
    %s613 = scalar_lea.vmem [#allocation2], 5
    %s614 = scalar_lea.sflag [#allocation3], 5
    %p616 = scmp.lt.u32.totalorder 1, 8
    %p617 = pneg %p616
    // Predicated region
    $region340: #{tpu_custom_call.1} parent=1 // pred_check
      _
    $region341: #{tpu_custom_call.1} parent=1 // pred_check_branch
      %619 = sbr.rel (%p616) target = $region343
    $region342: #{tpu_custom_call.1} parent=1 // pred_region
      %s634 = sand.u32 1, 7
      %p635 = scmp.eq.s32.totalorder %s634, 0
      %p636 = pneg %p635
      // Predicated region
      $region355: #{tpu_custom_call.1} parent=342 // pred_check
        _
      $region356: #{tpu_custom_call.1} parent=342 // pred_check_branch
        %638 = sbr.rel (%p635) target = $region358
      $region357: #{tpu_custom_call.1} parent=342 // pred_region
        %s639 = sand.u32 1, 7
        %s640 = ssub.s32 1, %s639
        %s641 = scalar_lea.vmem %s612, %s640
        %s642 = ssub.s32 1, %s639
        %s643 = scalar_lea.vmem %s613, %s642 [#allocation2]
        %s644 = sshllo.u32 0, %s639
        loop: start=0, step=1, limit=1
        $region359: #{tpu_custom_call.1} parent=357 // loop_pre_header
          _
        $region360: #{tpu_custom_call.1} parent=357 // loop_header
          %s646 = sphi 0, %s650
          %p647 = scmp.ge.s32.totalorder %s646, 1
          %s651 = sphi %s641, %s641
          %s652 = sphi %s643, %s643
        $region361: #{tpu_custom_call.1} parent=357 // loop_header_branch
          %649 = sbr.rel (%p647) target = $region365
        $region362: #{tpu_custom_call.1} parent=357 // loop_body
          %v653 = vld [vmem:[%s651] sm:%s644]
          %654 = vst [vmem:[%s652] sm:%s644] %v653
        $region363: #{tpu_custom_call.1} parent=357 // loop_footer
          %s650 = sadd.s32 1, %s646
        $region364: #{tpu_custom_call.1} parent=357 // loop_footer_branch
          %645 = sbr.rel target = $region360
        $region365: #{tpu_custom_call.1} parent=357 // loop_exit
          _
      $region358: #{tpu_custom_call.1} parent=342 // pred_fallthru
        _
    $region343: #{tpu_custom_call.1} parent=1 // pred_fallthru
      _
    // Predicated region
    $region344: #{tpu_custom_call.1} parent=1 // pred_check
      %p620 = pneg %p616
    $region345: #{tpu_custom_call.1} parent=1 // pred_check_branch
      %622 = sbr.rel (%p620) target = $region347
    $region346: #{tpu_custom_call.1} parent=1 // pred_region
      %s623 = sshllo.u32 0, 1
      loop: start=0, step=1, limit=1
      $region348: #{tpu_custom_call.1} parent=346 // loop_pre_header
        _
      $region349: #{tpu_custom_call.1} parent=346 // loop_header
        %s625 = sphi 0, %s629
        %p626 = scmp.ge.s32.totalorder %s625, 1
        %s630 = sphi %s612, %s612
        %s631 = sphi %s613, %s613
      $region350: #{tpu_custom_call.1} parent=346 // loop_header_branch
        %628 = sbr.rel (%p626) target = $region354
      $region351: #{tpu_custom_call.1} parent=346 // loop_body
        %v632 = vld [vmem:[%s630] sm:%s623]
        %633 = vst [vmem:[%s631] sm:%s623] %v632
      $region352: #{tpu_custom_call.1} parent=346 // loop_footer
        %s629 = sadd.s32 1, %s625
      $region353: #{tpu_custom_call.1} parent=346 // loop_footer_branch
        %624 = sbr.rel target = $region349
      $region354: #{tpu_custom_call.1} parent=346 // loop_exit
        _
    $region347: #{tpu_custom_call.1} parent=1 // pred_fallthru
      _
    // Predicated region
    $region366: #{tpu_custom_call.1} parent=1 // pred_check
      _
    $region367: #{tpu_custom_call.1} parent=1 // pred_check_branch
      %657 = sbr.rel (0) target = $region369
    $region368: #{tpu_custom_call.1} parent=1 // pred_region
      %658 = vsyncadd %s614, 16
    $region369: #{tpu_custom_call.1} parent=1 // pred_fallthru
      _
    %s659 = sld [smem:[#allocation4 + $0x6]]
    %s660 = scalar_lea.vmem %s3, %s659
    %s661 = scalar_lea.vmem [#allocation2], 6
    %s662 = scalar_lea.sflag [#allocation3], 6
    %p664 = scmp.lt.u32.totalorder 1, 8
    %p665 = pneg %p664
    // Predicated region
    $region370: #{tpu_custom_call.1} parent=1 // pred_check
      _
    $region371: #{tpu_custom_call.1} parent=1 // pred_check_branch
      %667 = sbr.rel (%p664) target = $region373
    $region372: #{tpu_custom_call.1} parent=1 // pred_region
      %s682 = sand.u32 1, 7
      %p683 = scmp.eq.s32.totalorder %s682, 0
      %p684 = pneg %p683
      // Predicated region
      $region385: #{tpu_custom_call.1} parent=372 // pred_check
        _
      $region386: #{tpu_custom_call.1} parent=372 // pred_check_branch
        %686 = sbr.rel (%p683) target = $region388
      $region387: #{tpu_custom_call.1} parent=372 // pred_region
        %s687 = sand.u32 1, 7
        %s688 = ssub.s32 1, %s687
        %s689 = scalar_lea.vmem %s660, %s688
        %s690 = ssub.s32 1, %s687
        %s691 = scalar_lea.vmem %s661, %s690 [#allocation2]
        %s692 = sshllo.u32 0, %s687
        loop: start=0, step=1, limit=1
        $region389: #{tpu_custom_call.1} parent=387 // loop_pre_header
          _
        $region390: #{tpu_custom_call.1} parent=387 // loop_header
          %s694 = sphi 0, %s698
          %p695 = scmp.ge.s32.totalorder %s694, 1
          %s699 = sphi %s689, %s689
          %s700 = sphi %s691, %s691
        $region391: #{tpu_custom_call.1} parent=387 // loop_header_branch
          %697 = sbr.rel (%p695) target = $region395
        $region392: #{tpu_custom_call.1} parent=387 // loop_body
          %v701 = vld [vmem:[%s699] sm:%s692]
          %702 = vst [vmem:[%s700] sm:%s692] %v701
        $region393: #{tpu_custom_call.1} parent=387 // loop_footer
          %s698 = sadd.s32 1, %s694
        $region394: #{tpu_custom_call.1} parent=387 // loop_footer_branch
          %693 = sbr.rel target = $region390
        $region395: #{tpu_custom_call.1} parent=387 // loop_exit
          _
      $region388: #{tpu_custom_call.1} parent=372 // pred_fallthru
        _
    $region373: #{tpu_custom_call.1} parent=1 // pred_fallthru
      _
    // Predicated region
    $region374: #{tpu_custom_call.1} parent=1 // pred_check
      %p668 = pneg %p664
    $region375: #{tpu_custom_call.1} parent=1 // pred_check_branch
      %670 = sbr.rel (%p668) target = $region377
    $region376: #{tpu_custom_call.1} parent=1 // pred_region
      %s671 = sshllo.u32 0, 1
      loop: start=0, step=1, limit=1
      $region378: #{tpu_custom_call.1} parent=376 // loop_pre_header
        _
      $region379: #{tpu_custom_call.1} parent=376 // loop_header
        %s673 = sphi 0, %s677
        %p674 = scmp.ge.s32.totalorder %s673, 1
        %s678 = sphi %s660, %s660
        %s679 = sphi %s661, %s661
      $region380: #{tpu_custom_call.1} parent=376 // loop_header_branch
        %676 = sbr.rel (%p674) target = $region384
      $region381: #{tpu_custom_call.1} parent=376 // loop_body
        %v680 = vld [vmem:[%s678] sm:%s671]
        %681 = vst [vmem:[%s679] sm:%s671] %v680
      $region382: #{tpu_custom_call.1} parent=376 // loop_footer
        %s677 = sadd.s32 1, %s673
      $region383: #{tpu_custom_call.1} parent=376 // loop_footer_branch
        %672 = sbr.rel target = $region379
      $region384: #{tpu_custom_call.1} parent=376 // loop_exit
        _
    $region377: #{tpu_custom_call.1} parent=1 // pred_fallthru
      _
    // Predicated region
    $region396: #{tpu_custom_call.1} parent=1 // pred_check
      _
    $region397: #{tpu_custom_call.1} parent=1 // pred_check_branch
      %705 = sbr.rel (0) target = $region399
    $region398: #{tpu_custom_call.1} parent=1 // pred_region
      %706 = vsyncadd %s662, 16
    $region399: #{tpu_custom_call.1} parent=1 // pred_fallthru
      _
    %s707 = sld [smem:[#allocation4 + $0x7]]
    %s708 = scalar_lea.vmem %s3, %s707
    %s709 = scalar_lea.vmem [#allocation2], 7
    %s710 = scalar_lea.sflag [#allocation3], 7
    %p712 = scmp.lt.u32.totalorder 1, 8
    %p713 = pneg %p712
    // Predicated region
    $region400: #{tpu_custom_call.1} parent=1 // pred_check
      _
    $region401: #{tpu_custom_call.1} parent=1 // pred_check_branch
      %715 = sbr.rel (%p712) target = $region403
    $region402: #{tpu_custom_call.1} parent=1 // pred_region
      %s730 = sand.u32 1, 7
      %p731 = scmp.eq.s32.totalorder %s730, 0
      %p732 = pneg %p731
      // Predicated region
      $region415: #{tpu_custom_call.1} parent=402 // pred_check
        _
      $region416: #{tpu_custom_call.1} parent=402 // pred_check_branch
        %734 = sbr.rel (%p731) target = $region418
      $region417: #{tpu_custom_call.1} parent=402 // pred_region
        %s735 = sand.u32 1, 7
        %s736 = ssub.s32 1, %s735
        %s737 = scalar_lea.vmem %s708, %s736
        %s738 = ssub.s32 1, %s735
        %s739 = scalar_lea.vmem %s709, %s738 [#allocation2]
        %s740 = sshllo.u32 0, %s735
        loop: start=0, step=1, limit=1
        $region419: #{tpu_custom_call.1} parent=417 // loop_pre_header
          _
        $region420: #{tpu_custom_call.1} parent=417 // loop_header
          %s742 = sphi 0, %s746
          %p743 = scmp.ge.s32.totalorder %s742, 1
          %s747 = sphi %s737, %s737
          %s748 = sphi %s739, %s739
        $region421: #{tpu_custom_call.1} parent=417 // loop_header_branch
          %745 = sbr.rel (%p743) target = $region425
        $region422: #{tpu_custom_call.1} parent=417 // loop_body
          %v749 = vld [vmem:[%s747] sm:%s740]
          %750 = vst [vmem:[%s748] sm:%s740] %v749
        $region423: #{tpu_custom_call.1} parent=417 // loop_footer
          %s746 = sadd.s32 1, %s742
        $region424: #{tpu_custom_call.1} parent=417 // loop_footer_branch
          %741 = sbr.rel target = $region420
        $region425: #{tpu_custom_call.1} parent=417 // loop_exit
          _
      $region418: #{tpu_custom_call.1} parent=402 // pred_fallthru
        _
    $region403: #{tpu_custom_call.1} parent=1 // pred_fallthru
      _
    // Predicated region
    $region404: #{tpu_custom_call.1} parent=1 // pred_check
      %p716 = pneg %p712
    $region405: #{tpu_custom_call.1} parent=1 // pred_check_branch
      %718 = sbr.rel (%p716) target = $region407
    $region406: #{tpu_custom_call.1} parent=1 // pred_region
      %s719 = sshllo.u32 0, 1
      loop: start=0, step=1, limit=1
      $region408: #{tpu_custom_call.1} parent=406 // loop_pre_header
        _
      $region409: #{tpu_custom_call.1} parent=406 // loop_header
        %s721 = sphi 0, %s725
        %p722 = scmp.ge.s32.totalorder %s721, 1
        %s726 = sphi %s708, %s708
        %s727 = sphi %s709, %s709
      $region410: #{tpu_custom_call.1} parent=406 // loop_header_branch
        %724 = sbr.rel (%p722) target = $region414
      $region411: #{tpu_custom_call.1} parent=406 // loop_body
        %v728 = vld [vmem:[%s726] sm:%s719]
        %729 = vst [vmem:[%s727] sm:%s719] %v728
      $region412: #{tpu_custom_call.1} parent=406 // loop_footer
        %s725 = sadd.s32 1, %s721
      $region413: #{tpu_custom_call.1} parent=406 // loop_footer_branch
        %720 = sbr.rel target = $region409
      $region414: #{tpu_custom_call.1} parent=406 // loop_exit
        _
    $region407: #{tpu_custom_call.1} parent=1 // pred_fallthru
      _
    // Predicated region
    $region426: #{tpu_custom_call.1} parent=1 // pred_check
      _
    $region427: #{tpu_custom_call.1} parent=1 // pred_check_branch
      %753 = sbr.rel (0) target = $region429
    $region428: #{tpu_custom_call.1} parent=1 // pred_region
      %754 = vsyncadd %s710, 16
    $region429: #{tpu_custom_call.1} parent=1 // pred_fallthru
      _
    %s755 = smul.u32 1, 1
    %s756 = sshll.u32 %s755, 4
    %757 = dma.done [#allocation3], %s756
    %s758 = sshll.u32 %s755, 4
    %759 = dma.done %s422, %s758
    %s760 = sshll.u32 %s755, 4
    %761 = dma.done %s470, %s760
    %s762 = sshll.u32 %s755, 4
    %763 = dma.done %s518, %s762
    %s764 = sshll.u32 %s755, 4
    %765 = dma.done %s566, %s764
    %s766 = sshll.u32 %s755, 4
    %767 = dma.done %s614, %s766
    %s768 = sshll.u32 %s755, 4
    %769 = dma.done %s662, %s768
    %s770 = sshll.u32 %s755, 4
    %771 = dma.done %s710, %s770
    %v772 = vld [vmem:[#allocation2] sm:$0xff]
    %v773 = vld [vmem:[#allocation8] sm:$0xff]
    %v774 = vld [vmem:[#allocation9] sm:$0xff]
    %v775 = vld [vmem:[#allocation11] sm:$0xff]
    %v776 = vld [vmem:[%s11] sm:$0xff]
    %v777 = vld [vmem:[%s11 + $0x8] sm:$0xff]
    %v778 = vld [vmem:[%s11 + $0x10] sm:$0xff]
    %v779 = vld [vmem:[%s11 + $0x18] sm:$0xff]
    %v780 = vld [vmem:[%s11 + $0x20] sm:$0xff]
    %v781 = vld [vmem:[%s11 + $0x28] sm:$0xff]
    %v782 = vld [vmem:[%s11 + $0x30] sm:$0xff]
    %v783 = vld [vmem:[%s11 + $0x38] sm:$0xff]
    %v784 = vld [vmem:[%s13] sm:$0xff]
    %v785 = vld [vmem:[%s13 + $0x8] sm:$0xff]
    %v786 = vld [vmem:[%s13 + $0x10] sm:$0xff]
    %v787 = vld [vmem:[%s13 + $0x18] sm:$0xff]
    %v788 = vld [vmem:[%s15] sm:$0xff]
    %v789 = vld [vmem:[%s15 + $0x8] sm:$0xff]
    %v790 = vld [vmem:[%s15 + $0x10] sm:$0xff]
    %v791 = vld [vmem:[%s15 + $0x18] sm:$0xff]
    %vm792 = vcmask 261120
    %v794 = vsel %vm792, %v773, 0
    %796 = vmatprep.subr.mxu0 0.0
    %797 = vmatpush1.msra.mxu0 %v788
    %798 = vmatprep.subr.mxu0 0.0
    %799 = vmatpush1.msra.mxu0 %v789
    %800 = vmatprep.subr.mxu0 0.0
    %801 = vmatpush1.msra.mxu0 %v790
    %802 = vmatprep.subr.mxu0 0.0
    %803 = vmatpush1.msra.mxu0 %v791
    %804 = vmatprep.subr.mxu0 0.0
    %805 = vmatpush1.msra.mxu0 0.0
    %806 = vmatprep.subr.mxu0 0.0
    %807 = vmatpush1.msra.mxu0 0.0
    %808 = vmatprep.subr.mxu0 0.0
    %809 = vmatpush1.msra.mxu0 0.0
    %810 = vmatprep.subr.mxu0 0.0
    %811 = vmatpush1.msra.mxu0 0.0
    %812 = vmatprep.subr.mxu0 0.0
    %813 = vmatpush1.msra.mxu0 0.0
    %814 = vmatprep.subr.mxu0 0.0
    %815 = vmatpush1.msra.mxu0 0.0
    %816 = vmatprep.subr.mxu0 0.0
    %817 = vmatpush1.msra.mxu0 0.0
    %818 = vmatprep.subr.mxu0 0.0
    %819 = vmatpush1.msra.mxu0 0.0
    %820 = vmatprep.subr.mxu0 0.0
    %821 = vmatpush1.msra.mxu0 0.0
    %822 = vmatprep.subr.mxu0 0.0
    %823 = vmatpush1.msra.mxu0 0.0
    %824 = vmatprep.subr.mxu0 0.0
    %825 = vmatpush1.msra.mxu0 0.0
    %826 = vmatprep.subr.mxu0 0.0
    %827 = vmatpush1.msra.mxu0 0.0
    %828 = vmatprep.subr.mxu0 0.0
    %829 = vmatpush1.msra.mxu0 0.0
    %830 = vmatprep.subr.mxu0 0.0
    %831 = vmatpush1.msra.mxu0 0.0
    %832 = vmatprep.subr.mxu0 0.0
    %833 = vmatpush1.msra.mxu0 0.0
    %834 = vmatprep.subr.mxu0 0.0
    %835 = vmatpush1.msra.mxu0 0.0
    %836 = vmatprep.subr.mxu0 0.0
    %837 = vmatpush1.msra.mxu0 0.0
    %838 = vmatprep.subr.mxu0 0.0
    %839 = vmatpush1.msra.mxu0 0.0
    %840 = vmatprep.subr.mxu0 0.0
    %841 = vmatpush1.msra.mxu0 0.0
    %842 = vmatprep.subr.mxu0 0.0
    %843 = vmatpush1.msra.mxu0 0.0
    %844 = vmatprep.subr.mxu0 0.0
    %845 = vmatpush1.msra.mxu0 0.0
    %846 = vmatprep.subr.mxu0 0.0
    %847 = vmatpush1.msra.mxu0 0.0
    %848 = vmatprep.subr.mxu0 0.0
    %849 = vmatpush1.msra.mxu0 0.0
    %850 = vmatprep.subr.mxu0 0.0
    %851 = vmatpush1.msra.mxu0 0.0
    %852 = vmatprep.subr.mxu0 0.0
    %853 = vmatpush1.msra.mxu0 0.0
    %854 = vmatprep.subr.mxu0 0.0
    %855 = vmatpush1.msra.mxu0 0.0
    %856 = vmatprep.subr.mxu0 0.0
    %857 = vmatpush1.msra.mxu0 0.0
    %858 = vmatprep.subr.mxu0 0.0
    %859 = vmatpush1.msra.mxu0 0.0
    %860 = vmatprep.mubr.f32.mxu0 0.0
    %861 = vmatmul.mubr.f32.gmra.mrb[0].mxu0 %v794
    %v862 = vpop.f32.mrb[0].mxu0
    %v863 = vadd.f32 0.0, %v862
    %v864 = vpop.f32.mrb[0].mxu0
    %865 = vdwg.mxu0
    %v867 = vsel %vm792, %v772, 0
    %869 = vmatprep.subr.mxu0 0.0
    %870 = vmatpush1.msra.mxu0 %v784
    %871 = vmatprep.subr.mxu0 0.0
    %872 = vmatpush1.msra.mxu0 %v785
    %873 = vmatprep.subr.mxu0 0.0
    %874 = vmatpush1.msra.mxu0 %v786
    %875 = vmatprep.subr.mxu0 0.0
    %876 = vmatpush1.msra.mxu0 %v787
    %877 = vmatprep.subr.mxu0 0.0
    %878 = vmatpush1.msra.mxu0 0.0
    %879 = vmatprep.subr.mxu0 0.0
    %880 = vmatpush1.msra.mxu0 0.0
    %881 = vmatprep.subr.mxu0 0.0
    %882 = vmatpush1.msra.mxu0 0.0
    %883 = vmatprep.subr.mxu0 0.0
    %884 = vmatpush1.msra.mxu0 0.0
    %885 = vmatprep.subr.mxu0 0.0
    %886 = vmatpush1.msra.mxu0 0.0
    %887 = vmatprep.subr.mxu0 0.0
    %888 = vmatpush1.msra.mxu0 0.0
    %889 = vmatprep.subr.mxu0 0.0
    %890 = vmatpush1.msra.mxu0 0.0
    %891 = vmatprep.subr.mxu0 0.0
    %892 = vmatpush1.msra.mxu0 0.0
    %893 = vmatprep.subr.mxu0 0.0
    %894 = vmatpush1.msra.mxu0 0.0
    %895 = vmatprep.subr.mxu0 0.0
    %896 = vmatpush1.msra.mxu0 0.0
    %897 = vmatprep.subr.mxu0 0.0
    %898 = vmatpush1.msra.mxu0 0.0
    %899 = vmatprep.subr.mxu0 0.0
    %900 = vmatpush1.msra.mxu0 0.0
    %901 = vmatprep.subr.mxu0 0.0
    %902 = vmatpush1.msra.mxu0 0.0
    %903 = vmatprep.subr.mxu0 0.0
    %904 = vmatpush1.msra.mxu0 0.0
    %905 = vmatprep.subr.mxu0 0.0
    %906 = vmatpush1.msra.mxu0 0.0
    %907 = vmatprep.subr.mxu0 0.0
    %908 = vmatpush1.msra.mxu0 0.0
    %909 = vmatprep.subr.mxu0 0.0
    %910 = vmatpush1.msra.mxu0 0.0
    %911 = vmatprep.subr.mxu0 0.0
    %912 = vmatpush1.msra.mxu0 0.0
    %913 = vmatprep.subr.mxu0 0.0
    %914 = vmatpush1.msra.mxu0 0.0
    %915 = vmatprep.subr.mxu0 0.0
    %916 = vmatpush1.msra.mxu0 0.0
    %917 = vmatprep.subr.mxu0 0.0
    %918 = vmatpush1.msra.mxu0 0.0
    %919 = vmatprep.subr.mxu0 0.0
    %920 = vmatpush1.msra.mxu0 0.0
    %921 = vmatprep.subr.mxu0 0.0
    %922 = vmatpush1.msra.mxu0 0.0
    %923 = vmatprep.subr.mxu0 0.0
    %924 = vmatpush1.msra.mxu0 0.0
    %925 = vmatprep.subr.mxu0 0.0
    %926 = vmatpush1.msra.mxu0 0.0
    %927 = vmatprep.subr.mxu0 0.0
    %928 = vmatpush1.msra.mxu0 0.0
    %929 = vmatprep.subr.mxu0 0.0
    %930 = vmatpush1.msra.mxu0 0.0
    %931 = vmatprep.subr.mxu0 0.0
    %932 = vmatpush1.msra.mxu0 0.0
    %933 = vmatprep.mubr.f32.mxu0 0.0
    %934 = vmatmul.mubr.f32.gmra.mrb[0].mxu0 %v867
    %v935 = vpop.f32.mrb[0].mxu0
    %v936 = vadd.f32 %v863, %v935
    %v937 = vpop.f32.mrb[0].mxu0
    %938 = vdwg.mxu0
    %v939 = vld [vmem:[#allocation12] sm:$0x1]
    %v941 = vlaneseq
    %v942 = vshrl.u32 %v941, 7
    %v943 = vsub.s32 0, %v942
    %v944 = vrot.slane %v939, %v943
    %v946 = vadd.f32 %v936, %v944
    %v947 = vld [vmem:[#allocation14] sm:$0xff]
    %v948 = vld [vmem:[#allocation14 + $0x8] sm:$0xff]
    %v949 = vld [vmem:[#allocation14 + $0x10] sm:$0xff]
    %v950 = vld [vmem:[#allocation14 + $0x18] sm:$0xff]
    %v951 = vld [vmem:[#allocation15] sm:$0xff]
    %v952 = vld [vmem:[#allocation15 + $0x8] sm:$0xff]
    %v953 = vld [vmem:[#allocation15 + $0x10] sm:$0xff]
    %v954 = vld [vmem:[#allocation15 + $0x18] sm:$0xff]
    %v956 = vsel %vm792, %v774, 0
    %958 = vmatprep.subr.mxu0 0.0
    %959 = vmatpush1.msra.mxu0 %v951
    %960 = vmatprep.subr.mxu0 0.0
    %961 = vmatpush1.msra.mxu0 %v952
    %962 = vmatprep.subr.mxu0 0.0
    %963 = vmatpush1.msra.mxu0 %v953
    %964 = vmatprep.subr.mxu0 0.0
    %965 = vmatpush1.msra.mxu0 %v954
    %966 = vmatprep.subr.mxu0 0.0
    %967 = vmatpush1.msra.mxu0 0.0
    %968 = vmatprep.subr.mxu0 0.0
    %969 = vmatpush1.msra.mxu0 0.0
    %970 = vmatprep.subr.mxu0 0.0
    %971 = vmatpush1.msra.mxu0 0.0
    %972 = vmatprep.subr.mxu0 0.0
    %973 = vmatpush1.msra.mxu0 0.0
    %974 = vmatprep.subr.mxu0 0.0
    %975 = vmatpush1.msra.mxu0 0.0
    %976 = vmatprep.subr.mxu0 0.0
    %977 = vmatpush1.msra.mxu0 0.0
    %978 = vmatprep.subr.mxu0 0.0
    %979 = vmatpush1.msra.mxu0 0.0
    %980 = vmatprep.subr.mxu0 0.0
    %981 = vmatpush1.msra.mxu0 0.0
    %982 = vmatprep.subr.mxu0 0.0
    %983 = vmatpush1.msra.mxu0 0.0
    %984 = vmatprep.subr.mxu0 0.0
    %985 = vmatpush1.msra.mxu0 0.0
    %986 = vmatprep.subr.mxu0 0.0
    %987 = vmatpush1.msra.mxu0 0.0
    %988 = vmatprep.subr.mxu0 0.0
    %989 = vmatpush1.msra.mxu0 0.0
    %990 = vmatprep.subr.mxu0 0.0
    %991 = vmatpush1.msra.mxu0 0.0
    %992 = vmatprep.subr.mxu0 0.0
    %993 = vmatpush1.msra.mxu0 0.0
    %994 = vmatprep.subr.mxu0 0.0
    %995 = vmatpush1.msra.mxu0 0.0
    %996 = vmatprep.subr.mxu0 0.0
    %997 = vmatpush1.msra.mxu0 0.0
    %998 = vmatprep.subr.mxu0 0.0
    %999 = vmatpush1.msra.mxu0 0.0
    %1000 = vmatprep.subr.mxu0 0.0
    %1001 = vmatpush1.msra.mxu0 0.0
    %1002 = vmatprep.subr.mxu0 0.0
    %1003 = vmatpush1.msra.mxu0 0.0
    %1004 = vmatprep.subr.mxu0 0.0
    %1005 = vmatpush1.msra.mxu0 0.0
    %1006 = vmatprep.subr.mxu0 0.0
    %1007 = vmatpush1.msra.mxu0 0.0
    %1008 = vmatprep.subr.mxu0 0.0
    %1009 = vmatpush1.msra.mxu0 0.0
    %1010 = vmatprep.subr.mxu0 0.0
    %1011 = vmatpush1.msra.mxu0 0.0
    %1012 = vmatprep.subr.mxu0 0.0
    %1013 = vmatpush1.msra.mxu0 0.0
    %1014 = vmatprep.subr.mxu0 0.0
    %1015 = vmatpush1.msra.mxu0 0.0
    %1016 = vmatprep.subr.mxu0 0.0
    %1017 = vmatpush1.msra.mxu0 0.0
    %1018 = vmatprep.subr.mxu0 0.0
    %1019 = vmatpush1.msra.mxu0 0.0
    %1020 = vmatprep.subr.mxu0 0.0
    %1021 = vmatpush1.msra.mxu0 0.0
    %1022 = vmatprep.mubr.f32.mxu0 0.0
    %1023 = vmatmul.mubr.f32.gmra.mrb[0].mxu0 %v956
    %v1024 = vpop.f32.mrb[0].mxu0
    %v1025 = vadd.f32 0.0, %v1024
    %v1026 = vpop.f32.mrb[0].mxu0
    %1027 = vdwg.mxu0
    %v1029 = vsel %vm792, %v946, 0
    %1031 = vmatprep.subr.mxu0 0.0
    %1032 = vmatpush1.msra.mxu0 %v947
    %1033 = vmatprep.subr.mxu0 0.0
    %1034 = vmatpush1.msra.mxu0 %v948
    %1035 = vmatprep.subr.mxu0 0.0
    %1036 = vmatpush1.msra.mxu0 %v949
    %1037 = vmatprep.subr.mxu0 0.0
    %1038 = vmatpush1.msra.mxu0 %v950
    %1039 = vmatprep.subr.mxu0 0.0
    %1040 = vmatpush1.msra.mxu0 0.0
    %1041 = vmatprep.subr.mxu0 0.0
    %1042 = vmatpush1.msra.mxu0 0.0
    %1043 = vmatprep.subr.mxu0 0.0
    %1044 = vmatpush1.msra.mxu0 0.0
    %1045 = vmatprep.subr.mxu0 0.0
    %1046 = vmatpush1.msra.mxu0 0.0
    %1047 = vmatprep.subr.mxu0 0.0
    %1048 = vmatpush1.msra.mxu0 0.0
    %1049 = vmatprep.subr.mxu0 0.0
    %1050 = vmatpush1.msra.mxu0 0.0
    %1051 = vmatprep.subr.mxu0 0.0
    %1052 = vmatpush1.msra.mxu0 0.0
    %1053 = vmatprep.subr.mxu0 0.0
    %1054 = vmatpush1.msra.mxu0 0.0
    %1055 = vmatprep.subr.mxu0 0.0
    %1056 = vmatpush1.msra.mxu0 0.0
    %1057 = vmatprep.subr.mxu0 0.0
    %1058 = vmatpush1.msra.mxu0 0.0
    %1059 = vmatprep.subr.mxu0 0.0
    %1060 = vmatpush1.msra.mxu0 0.0
    %1061 = vmatprep.subr.mxu0 0.0
    %1062 = vmatpush1.msra.mxu0 0.0
    %1063 = vmatprep.subr.mxu0 0.0
    %1064 = vmatpush1.msra.mxu0 0.0
    %1065 = vmatprep.subr.mxu0 0.0
    %1066 = vmatpush1.msra.mxu0 0.0
    %1067 = vmatprep.subr.mxu0 0.0
    %1068 = vmatpush1.msra.mxu0 0.0
    %1069 = vmatprep.subr.mxu0 0.0
    %1070 = vmatpush1.msra.mxu0 0.0
    %1071 = vmatprep.subr.mxu0 0.0
    %1072 = vmatpush1.msra.mxu0 0.0
    %1073 = vmatprep.subr.mxu0 0.0
    %1074 = vmatpush1.msra.mxu0 0.0
    %1075 = vmatprep.subr.mxu0 0.0
    %1076 = vmatpush1.msra.mxu0 0.0
    %1077 = vmatprep.subr.mxu0 0.0
    %1078 = vmatpush1.msra.mxu0 0.0
    %1079 = vmatprep.subr.mxu0 0.0
    %1080 = vmatpush1.msra.mxu0 0.0
    %1081 = vmatprep.subr.mxu0 0.0
    %1082 = vmatpush1.msra.mxu0 0.0
    %1083 = vmatprep.subr.mxu0 0.0
    %1084 = vmatpush1.msra.mxu0 0.0
    %1085 = vmatprep.subr.mxu0 0.0
    %1086 = vmatpush1.msra.mxu0 0.0
    %1087 = vmatprep.subr.mxu0 0.0
    %1088 = vmatpush1.msra.mxu0 0.0
    %1089 = vmatprep.subr.mxu0 0.0
    %1090 = vmatpush1.msra.mxu0 0.0
    %1091 = vmatprep.subr.mxu0 0.0
    %1092 = vmatpush1.msra.mxu0 0.0
    %1093 = vmatprep.subr.mxu0 0.0
    %1094 = vmatpush1.msra.mxu0 0.0
    %1095 = vmatprep.mubr.f32.mxu0 0.0
    %1096 = vmatmul.mubr.f32.gmra.mrb[0].mxu0 %v1029
    %v1097 = vpop.f32.mrb[0].mxu0
    %v1098 = vadd.f32 %v1025, %v1097
    %v1099 = vpop.f32.mrb[0].mxu0
    %1100 = vdwg.mxu0
    %v1101 = vld [vmem:[#allocation17] sm:$0x1]
    %v1103 = vlaneseq
    %v1104 = vshrl.u32 %v1103, 7
    %v1105 = vsub.s32 0, %v1104
    %v1106 = vrot.slane %v1101, %v1105
    %v1108 = vadd.f32 %v1098, %v1106
    %v1109 = vxor.u32 %v1108, 2147483648
    %v1110 = vmul.f32 %v1109, 1.442695
    %v1111 = vpow.pop %v1110
    %v1112 = vadd.f32 %v1111, 1.0
    %v1113 = vrcp.pop %v1112
    %v1114 = vmul.f32 1.0, %v1113
    %v1115 = vld [vmem:[%s25] sm:$0xff]
    %v1116 = vld [vmem:[%s25 + $0x8] sm:$0xff]
    %v1117 = vld [vmem:[%s25 + $0x10] sm:$0xff]
    %v1118 = vld [vmem:[%s25 + $0x18] sm:$0xff]
    %v1119 = vld [vmem:[#allocation18] sm:$0xff]
    %v1120 = vld [vmem:[#allocation18 + $0x8] sm:$0xff]
    %v1121 = vld [vmem:[#allocation18 + $0x10] sm:$0xff]
    %v1122 = vld [vmem:[#allocation18 + $0x18] sm:$0xff]
    %1123 = vmatprep.subr.mxu0 0.0
    %1124 = vmatpush1.msra.mxu0 %v1119
    %1125 = vmatprep.subr.mxu0 0.0
    %1126 = vmatpush1.msra.mxu0 %v1120
    %1127 = vmatprep.subr.mxu0 0.0
    %1128 = vmatpush1.msra.mxu0 %v1121
    %1129 = vmatprep.subr.mxu0 0.0
    %1130 = vmatpush1.msra.mxu0 %v1122
    %1131 = vmatprep.subr.mxu0 0.0
    %1132 = vmatpush1.msra.mxu0 0.0
    %1133 = vmatprep.subr.mxu0 0.0
    %1134 = vmatpush1.msra.mxu0 0.0
    %1135 = vmatprep.subr.mxu0 0.0
    %1136 = vmatpush1.msra.mxu0 0.0
    %1137 = vmatprep.subr.mxu0 0.0
    %1138 = vmatpush1.msra.mxu0 0.0
    %1139 = vmatprep.subr.mxu0 0.0
    %1140 = vmatpush1.msra.mxu0 0.0
    %1141 = vmatprep.subr.mxu0 0.0
    %1142 = vmatpush1.msra.mxu0 0.0
    %1143 = vmatprep.subr.mxu0 0.0
    %1144 = vmatpush1.msra.mxu0 0.0
    %1145 = vmatprep.subr.mxu0 0.0
    %1146 = vmatpush1.msra.mxu0 0.0
    %1147 = vmatprep.subr.mxu0 0.0
    %1148 = vmatpush1.msra.mxu0 0.0
    %1149 = vmatprep.subr.mxu0 0.0
    %1150 = vmatpush1.msra.mxu0 0.0
    %1151 = vmatprep.subr.mxu0 0.0
    %1152 = vmatpush1.msra.mxu0 0.0
    %1153 = vmatprep.subr.mxu0 0.0
    %1154 = vmatpush1.msra.mxu0 0.0
    %1155 = vmatprep.subr.mxu0 0.0
    %1156 = vmatpush1.msra.mxu0 0.0
    %1157 = vmatprep.subr.mxu0 0.0
    %1158 = vmatpush1.msra.mxu0 0.0
    %1159 = vmatprep.subr.mxu0 0.0
    %1160 = vmatpush1.msra.mxu0 0.0
    %1161 = vmatprep.subr.mxu0 0.0
    %1162 = vmatpush1.msra.mxu0 0.0
    %1163 = vmatprep.subr.mxu0 0.0
    %1164 = vmatpush1.msra.mxu0 0.0
    %1165 = vmatprep.subr.mxu0 0.0
    %1166 = vmatpush1.msra.mxu0 0.0
    %1167 = vmatprep.subr.mxu0 0.0
    %1168 = vmatpush1.msra.mxu0 0.0
    %1169 = vmatprep.subr.mxu0 0.0
    %1170 = vmatpush1.msra.mxu0 0.0
    %1171 = vmatprep.subr.mxu0 0.0
    %1172 = vmatpush1.msra.mxu0 0.0
    %1173 = vmatprep.subr.mxu0 0.0
    %1174 = vmatpush1.msra.mxu0 0.0
    %1175 = vmatprep.subr.mxu0 0.0
    %1176 = vmatpush1.msra.mxu0 0.0
    %1177 = vmatprep.subr.mxu0 0.0
    %1178 = vmatpush1.msra.mxu0 0.0
    %1179 = vmatprep.subr.mxu0 0.0
    %1180 = vmatpush1.msra.mxu0 0.0
    %1181 = vmatprep.subr.mxu0 0.0
    %1182 = vmatpush1.msra.mxu0 0.0
    %1183 = vmatprep.subr.mxu0 0.0
    %1184 = vmatpush1.msra.mxu0 0.0
    %1185 = vmatprep.subr.mxu0 0.0
    %1186 = vmatpush1.msra.mxu0 0.0
    %1187 = vmatprep.mubr.f32.mxu0 0.0
    %1188 = vmatmul.mubr.f32.gmra.mrb[0].mxu0 %v956
    %v1189 = vpop.f32.mrb[0].mxu0
    %v1190 = vadd.f32 0.0, %v1189
    %v1191 = vpop.f32.mrb[0].mxu0
    %1192 = vdwg.mxu0
    %1193 = vmatprep.subr.mxu0 0.0
    %1194 = vmatpush1.msra.mxu0 %v1115
    %1195 = vmatprep.subr.mxu0 0.0
    %1196 = vmatpush1.msra.mxu0 %v1116
    %1197 = vmatprep.subr.mxu0 0.0
    %1198 = vmatpush1.msra.mxu0 %v1117
    %1199 = vmatprep.subr.mxu0 0.0
    %1200 = vmatpush1.msra.mxu0 %v1118
    %1201 = vmatprep.subr.mxu0 0.0
    %1202 = vmatpush1.msra.mxu0 0.0
    %1203 = vmatprep.subr.mxu0 0.0
    %1204 = vmatpush1.msra.mxu0 0.0
    %1205 = vmatprep.subr.mxu0 0.0
    %1206 = vmatpush1.msra.mxu0 0.0
    %1207 = vmatprep.subr.mxu0 0.0
    %1208 = vmatpush1.msra.mxu0 0.0
    %1209 = vmatprep.subr.mxu0 0.0
    %1210 = vmatpush1.msra.mxu0 0.0
    %1211 = vmatprep.subr.mxu0 0.0
    %1212 = vmatpush1.msra.mxu0 0.0
    %1213 = vmatprep.subr.mxu0 0.0
    %1214 = vmatpush1.msra.mxu0 0.0
    %1215 = vmatprep.subr.mxu0 0.0
    %1216 = vmatpush1.msra.mxu0 0.0
    %1217 = vmatprep.subr.mxu0 0.0
    %1218 = vmatpush1.msra.mxu0 0.0
    %1219 = vmatprep.subr.mxu0 0.0
    %1220 = vmatpush1.msra.mxu0 0.0
    %1221 = vmatprep.subr.mxu0 0.0
    %1222 = vmatpush1.msra.mxu0 0.0
    %1223 = vmatprep.subr.mxu0 0.0
    %1224 = vmatpush1.msra.mxu0 0.0
    %1225 = vmatprep.subr.mxu0 0.0
    %1226 = vmatpush1.msra.mxu0 0.0
    %1227 = vmatprep.subr.mxu0 0.0
    %1228 = vmatpush1.msra.mxu0 0.0
    %1229 = vmatprep.subr.mxu0 0.0
    %1230 = vmatpush1.msra.mxu0 0.0
    %1231 = vmatprep.subr.mxu0 0.0
    %1232 = vmatpush1.msra.mxu0 0.0
    %1233 = vmatprep.subr.mxu0 0.0
    %1234 = vmatpush1.msra.mxu0 0.0
    %1235 = vmatprep.subr.mxu0 0.0
    %1236 = vmatpush1.msra.mxu0 0.0
    %1237 = vmatprep.subr.mxu0 0.0
    %1238 = vmatpush1.msra.mxu0 0.0
    %1239 = vmatprep.subr.mxu0 0.0
    %1240 = vmatpush1.msra.mxu0 0.0
    %1241 = vmatprep.subr.mxu0 0.0
    %1242 = vmatpush1.msra.mxu0 0.0
    %1243 = vmatprep.subr.mxu0 0.0
    %1244 = vmatpush1.msra.mxu0 0.0
    %1245 = vmatprep.subr.mxu0 0.0
    %1246 = vmatpush1.msra.mxu0 0.0
    %1247 = vmatprep.subr.mxu0 0.0
    %1248 = vmatpush1.msra.mxu0 0.0
    %1249 = vmatprep.subr.mxu0 0.0
    %1250 = vmatpush1.msra.mxu0 0.0
    %1251 = vmatprep.subr.mxu0 0.0
    %1252 = vmatpush1.msra.mxu0 0.0
    %1253 = vmatprep.subr.mxu0 0.0
    %1254 = vmatpush1.msra.mxu0 0.0
    %1255 = vmatprep.subr.mxu0 0.0
    %1256 = vmatpush1.msra.mxu0 0.0
    %1257 = vmatprep.mubr.f32.mxu0 0.0
    %1258 = vmatmul.mubr.f32.gmra.mrb[0].mxu0 %v1029
    %v1259 = vpop.f32.mrb[0].mxu0
    %v1260 = vadd.f32 %v1190, %v1259
    %v1261 = vpop.f32.mrb[0].mxu0
    %1262 = vdwg.mxu0
    %v1263 = vld [vmem:[%s29] sm:$0x1]
    %v1265 = vlaneseq
    %v1266 = vshrl.u32 %v1265, 7
    %v1267 = vsub.s32 0, %v1266
    %v1268 = vrot.slane %v1263, %v1267
    %v1270 = vadd.f32 %v1260, %v1268
    %v1271 = vxor.u32 %v1270, 2147483648
    %v1272 = vmul.f32 %v1271, 1.442695
    %v1273 = vpow.pop %v1272
    %v1274 = vadd.f32 %v1273, 1.0
    %v1275 = vrcp.pop %v1274
    %v1276 = vmul.f32 1.0, %v1275
    %v1277 = vld [vmem:[#allocation20] sm:$0xff]
    %v1278 = vld [vmem:[#allocation20 + $0x8] sm:$0xff]
    %v1279 = vld [vmem:[#allocation20 + $0x10] sm:$0xff]
    %v1280 = vld [vmem:[#allocation20 + $0x18] sm:$0xff]
    %v1281 = vld [vmem:[#allocation21] sm:$0xff]
    %v1282 = vld [vmem:[#allocation21 + $0x8] sm:$0xff]
    %v1283 = vld [vmem:[#allocation21 + $0x10] sm:$0xff]
    %v1284 = vld [vmem:[#allocation21 + $0x18] sm:$0xff]
    %1285 = vmatprep.subr.mxu0 0.0
    %1286 = vmatpush1.msra.mxu0 %v1281
    %1287 = vmatprep.subr.mxu0 0.0
    %1288 = vmatpush1.msra.mxu0 %v1282
    %1289 = vmatprep.subr.mxu0 0.0
    %1290 = vmatpush1.msra.mxu0 %v1283
    %1291 = vmatprep.subr.mxu0 0.0
    %1292 = vmatpush1.msra.mxu0 %v1284
    %1293 = vmatprep.subr.mxu0 0.0
    %1294 = vmatpush1.msra.mxu0 0.0
    %1295 = vmatprep.subr.mxu0 0.0
    %1296 = vmatpush1.msra.mxu0 0.0
    %1297 = vmatprep.subr.mxu0 0.0
    %1298 = vmatpush1.msra.mxu0 0.0
    %1299 = vmatprep.subr.mxu0 0.0
    %1300 = vmatpush1.msra.mxu0 0.0
    %1301 = vmatprep.subr.mxu0 0.0
    %1302 = vmatpush1.msra.mxu0 0.0
    %1303 = vmatprep.subr.mxu0 0.0
    %1304 = vmatpush1.msra.mxu0 0.0
    %1305 = vmatprep.subr.mxu0 0.0
    %1306 = vmatpush1.msra.mxu0 0.0
    %1307 = vmatprep.subr.mxu0 0.0
    %1308 = vmatpush1.msra.mxu0 0.0
    %1309 = vmatprep.subr.mxu0 0.0
    %1310 = vmatpush1.msra.mxu0 0.0
    %1311 = vmatprep.subr.mxu0 0.0
    %1312 = vmatpush1.msra.mxu0 0.0
    %1313 = vmatprep.subr.mxu0 0.0
    %1314 = vmatpush1.msra.mxu0 0.0
    %1315 = vmatprep.subr.mxu0 0.0
    %1316 = vmatpush1.msra.mxu0 0.0
    %1317 = vmatprep.subr.mxu0 0.0
    %1318 = vmatpush1.msra.mxu0 0.0
    %1319 = vmatprep.subr.mxu0 0.0
    %1320 = vmatpush1.msra.mxu0 0.0
    %1321 = vmatprep.subr.mxu0 0.0
    %1322 = vmatpush1.msra.mxu0 0.0
    %1323 = vmatprep.subr.mxu0 0.0
    %1324 = vmatpush1.msra.mxu0 0.0
    %1325 = vmatprep.subr.mxu0 0.0
    %1326 = vmatpush1.msra.mxu0 0.0
    %1327 = vmatprep.subr.mxu0 0.0
    %1328 = vmatpush1.msra.mxu0 0.0
    %1329 = vmatprep.subr.mxu0 0.0
    %1330 = vmatpush1.msra.mxu0 0.0
    %1331 = vmatprep.subr.mxu0 0.0
    %1332 = vmatpush1.msra.mxu0 0.0
    %1333 = vmatprep.subr.mxu0 0.0
    %1334 = vmatpush1.msra.mxu0 0.0
    %1335 = vmatprep.subr.mxu0 0.0
    %1336 = vmatpush1.msra.mxu0 0.0
    %1337 = vmatprep.subr.mxu0 0.0
    %1338 = vmatpush1.msra.mxu0 0.0
    %1339 = vmatprep.subr.mxu0 0.0
    %1340 = vmatpush1.msra.mxu0 0.0
    %1341 = vmatprep.subr.mxu0 0.0
    %1342 = vmatpush1.msra.mxu0 0.0
    %1343 = vmatprep.subr.mxu0 0.0
    %1344 = vmatpush1.msra.mxu0 0.0
    %1345 = vmatprep.subr.mxu0 0.0
    %1346 = vmatpush1.msra.mxu0 0.0
    %1347 = vmatprep.subr.mxu0 0.0
    %1348 = vmatpush1.msra.mxu0 0.0
    %1349 = vmatprep.mubr.f32.mxu0 0.0
    %1350 = vmatmul.mubr.f32.gmra.mrb[0].mxu0 %v956
    %v1351 = vpop.f32.mrb[0].mxu0
    %v1352 = vadd.f32 0.0, %v1351
    %v1353 = vpop.f32.mrb[0].mxu0
    %1354 = vdwg.mxu0
    %1355 = vmatprep.subr.mxu0 0.0
    %1356 = vmatpush1.msra.mxu0 %v1277
    %1357 = vmatprep.subr.mxu0 0.0
    %1358 = vmatpush1.msra.mxu0 %v1278
    %1359 = vmatprep.subr.mxu0 0.0
    %1360 = vmatpush1.msra.mxu0 %v1279
    %1361 = vmatprep.subr.mxu0 0.0
    %1362 = vmatpush1.msra.mxu0 %v1280
    %1363 = vmatprep.subr.mxu0 0.0
    %1364 = vmatpush1.msra.mxu0 0.0
    %1365 = vmatprep.subr.mxu0 0.0
    %1366 = vmatpush1.msra.mxu0 0.0
    %1367 = vmatprep.subr.mxu0 0.0
    %1368 = vmatpush1.msra.mxu0 0.0
    %1369 = vmatprep.subr.mxu0 0.0
    %1370 = vmatpush1.msra.mxu0 0.0
    %1371 = vmatprep.subr.mxu0 0.0
    %1372 = vmatpush1.msra.mxu0 0.0
    %1373 = vmatprep.subr.mxu0 0.0
    %1374 = vmatpush1.msra.mxu0 0.0
    %1375 = vmatprep.subr.mxu0 0.0
    %1376 = vmatpush1.msra.mxu0 0.0
    %1377 = vmatprep.subr.mxu0 0.0
    %1378 = vmatpush1.msra.mxu0 0.0
    %1379 = vmatprep.subr.mxu0 0.0
    %1380 = vmatpush1.msra.mxu0 0.0
    %1381 = vmatprep.subr.mxu0 0.0
    %1382 = vmatpush1.msra.mxu0 0.0
    %1383 = vmatprep.subr.mxu0 0.0
    %1384 = vmatpush1.msra.mxu0 0.0
    %1385 = vmatprep.subr.mxu0 0.0
    %1386 = vmatpush1.msra.mxu0 0.0
    %1387 = vmatprep.subr.mxu0 0.0
    %1388 = vmatpush1.msra.mxu0 0.0
    %1389 = vmatprep.subr.mxu0 0.0
    %1390 = vmatpush1.msra.mxu0 0.0
    %1391 = vmatprep.subr.mxu0 0.0
    %1392 = vmatpush1.msra.mxu0 0.0
    %1393 = vmatprep.subr.mxu0 0.0
    %1394 = vmatpush1.msra.mxu0 0.0
    %1395 = vmatprep.subr.mxu0 0.0
    %1396 = vmatpush1.msra.mxu0 0.0
    %1397 = vmatprep.subr.mxu0 0.0
    %1398 = vmatpush1.msra.mxu0 0.0
    %1399 = vmatprep.subr.mxu0 0.0
    %1400 = vmatpush1.msra.mxu0 0.0
    %1401 = vmatprep.subr.mxu0 0.0
    %1402 = vmatpush1.msra.mxu0 0.0
    %1403 = vmatprep.subr.mxu0 0.0
    %1404 = vmatpush1.msra.mxu0 0.0
    %1405 = vmatprep.subr.mxu0 0.0
    %1406 = vmatpush1.msra.mxu0 0.0
    %1407 = vmatprep.subr.mxu0 0.0
    %1408 = vmatpush1.msra.mxu0 0.0
    %1409 = vmatprep.subr.mxu0 0.0
    %1410 = vmatpush1.msra.mxu0 0.0
    %1411 = vmatprep.subr.mxu0 0.0
    %1412 = vmatpush1.msra.mxu0 0.0
    %1413 = vmatprep.subr.mxu0 0.0
    %1414 = vmatpush1.msra.mxu0 0.0
    %1415 = vmatprep.subr.mxu0 0.0
    %1416 = vmatpush1.msra.mxu0 0.0
    %1417 = vmatprep.subr.mxu0 0.0
    %1418 = vmatpush1.msra.mxu0 0.0
    %1419 = vmatprep.mubr.f32.mxu0 0.0
    %1420 = vmatmul.mubr.f32.gmra.mrb[0].mxu0 %v1029
    %v1421 = vpop.f32.mrb[0].mxu0
    %v1422 = vadd.f32 %v1352, %v1421
    %v1423 = vpop.f32.mrb[0].mxu0
    %1424 = vdwg.mxu0
    %v1425 = vld [vmem:[#allocation23] sm:$0x1]
    %v1427 = vlaneseq
    %v1428 = vshrl.u32 %v1427, 7
    %v1429 = vsub.s32 0, %v1428
    %v1430 = vrot.slane %v1425, %v1429
    %v1432 = vadd.f32 %v1422, %v1430
    %v1433 = vtanh.pop %v1432
    %v1434 = vld [vmem:[#allocation24] sm:$0xff]
    %v1435 = vld [vmem:[#allocation24 + $0x8] sm:$0xff]
    %v1436 = vld [vmem:[#allocation24 + $0x10] sm:$0xff]
    %v1437 = vld [vmem:[#allocation24 + $0x18] sm:$0xff]
    %v1438 = vld [vmem:[#allocation26] sm:$0xff]
    %v1439 = vld [vmem:[#allocation26 + $0x8] sm:$0xff]
    %v1440 = vld [vmem:[#allocation26 + $0x10] sm:$0xff]
    %v1441 = vld [vmem:[#allocation26 + $0x18] sm:$0xff]
    %1442 = vmatprep.subr.mxu0 0.0
    %1443 = vmatpush1.msra.mxu0 %v1438
    %1444 = vmatprep.subr.mxu0 0.0
    %1445 = vmatpush1.msra.mxu0 %v1439
    %1446 = vmatprep.subr.mxu0 0.0
    %1447 = vmatpush1.msra.mxu0 %v1440
    %1448 = vmatprep.subr.mxu0 0.0
    %1449 = vmatpush1.msra.mxu0 %v1441
    %1450 = vmatprep.subr.mxu0 0.0
    %1451 = vmatpush1.msra.mxu0 0.0
    %1452 = vmatprep.subr.mxu0 0.0
    %1453 = vmatpush1.msra.mxu0 0.0
    %1454 = vmatprep.subr.mxu0 0.0
    %1455 = vmatpush1.msra.mxu0 0.0
    %1456 = vmatprep.subr.mxu0 0.0
    %1457 = vmatpush1.msra.mxu0 0.0
    %1458 = vmatprep.subr.mxu0 0.0
    %1459 = vmatpush1.msra.mxu0 0.0
    %1460 = vmatprep.subr.mxu0 0.0
    %1461 = vmatpush1.msra.mxu0 0.0
    %1462 = vmatprep.subr.mxu0 0.0
    %1463 = vmatpush1.msra.mxu0 0.0
    %1464 = vmatprep.subr.mxu0 0.0
    %1465 = vmatpush1.msra.mxu0 0.0
    %1466 = vmatprep.subr.mxu0 0.0
    %1467 = vmatpush1.msra.mxu0 0.0
    %1468 = vmatprep.subr.mxu0 0.0
    %1469 = vmatpush1.msra.mxu0 0.0
    %1470 = vmatprep.subr.mxu0 0.0
    %1471 = vmatpush1.msra.mxu0 0.0
    %1472 = vmatprep.subr.mxu0 0.0
    %1473 = vmatpush1.msra.mxu0 0.0
    %1474 = vmatprep.subr.mxu0 0.0
    %1475 = vmatpush1.msra.mxu0 0.0
    %1476 = vmatprep.subr.mxu0 0.0
    %1477 = vmatpush1.msra.mxu0 0.0
    %1478 = vmatprep.subr.mxu0 0.0
    %1479 = vmatpush1.msra.mxu0 0.0
    %1480 = vmatprep.subr.mxu0 0.0
    %1481 = vmatpush1.msra.mxu0 0.0
    %1482 = vmatprep.subr.mxu0 0.0
    %1483 = vmatpush1.msra.mxu0 0.0
    %1484 = vmatprep.subr.mxu0 0.0
    %1485 = vmatpush1.msra.mxu0 0.0
    %1486 = vmatprep.subr.mxu0 0.0
    %1487 = vmatpush1.msra.mxu0 0.0
    %1488 = vmatprep.subr.mxu0 0.0
    %1489 = vmatpush1.msra.mxu0 0.0
    %1490 = vmatprep.subr.mxu0 0.0
    %1491 = vmatpush1.msra.mxu0 0.0
    %1492 = vmatprep.subr.mxu0 0.0
    %1493 = vmatpush1.msra.mxu0 0.0
    %1494 = vmatprep.subr.mxu0 0.0
    %1495 = vmatpush1.msra.mxu0 0.0
    %1496 = vmatprep.subr.mxu0 0.0
    %1497 = vmatpush1.msra.mxu0 0.0
    %1498 = vmatprep.subr.mxu0 0.0
    %1499 = vmatpush1.msra.mxu0 0.0
    %1500 = vmatprep.subr.mxu0 0.0
    %1501 = vmatpush1.msra.mxu0 0.0
    %1502 = vmatprep.subr.mxu0 0.0
    %1503 = vmatpush1.msra.mxu0 0.0
    %1504 = vmatprep.subr.mxu0 0.0
    %1505 = vmatpush1.msra.mxu0 0.0
    %1506 = vmatprep.mubr.f32.mxu0 0.0
    %1507 = vmatmul.mubr.f32.gmra.mrb[0].mxu0 %v956
    %v1508 = vpop.f32.mrb[0].mxu0
    %v1509 = vadd.f32 0.0, %v1508
    %v1510 = vpop.f32.mrb[0].mxu0
    %1511 = vdwg.mxu0
    %1512 = vmatprep.subr.mxu0 0.0
    %1513 = vmatpush1.msra.mxu0 %v1434
    %1514 = vmatprep.subr.mxu0 0.0
    %1515 = vmatpush1.msra.mxu0 %v1435
    %1516 = vmatprep.subr.mxu0 0.0
    %1517 = vmatpush1.msra.mxu0 %v1436
    %1518 = vmatprep.subr.mxu0 0.0
    %1519 = vmatpush1.msra.mxu0 %v1437
    %1520 = vmatprep.subr.mxu0 0.0
    %1521 = vmatpush1.msra.mxu0 0.0
    %1522 = vmatprep.subr.mxu0 0.0
    %1523 = vmatpush1.msra.mxu0 0.0
    %1524 = vmatprep.subr.mxu0 0.0
    %1525 = vmatpush1.msra.mxu0 0.0
    %1526 = vmatprep.subr.mxu0 0.0
    %1527 = vmatpush1.msra.mxu0 0.0
    %1528 = vmatprep.subr.mxu0 0.0
    %1529 = vmatpush1.msra.mxu0 0.0
    %1530 = vmatprep.subr.mxu0 0.0
    %1531 = vmatpush1.msra.mxu0 0.0
    %1532 = vmatprep.subr.mxu0 0.0
    %1533 = vmatpush1.msra.mxu0 0.0
    %1534 = vmatprep.subr.mxu0 0.0
    %1535 = vmatpush1.msra.mxu0 0.0
    %1536 = vmatprep.subr.mxu0 0.0
    %1537 = vmatpush1.msra.mxu0 0.0
    %1538 = vmatprep.subr.mxu0 0.0
    %1539 = vmatpush1.msra.mxu0 0.0
    %1540 = vmatprep.subr.mxu0 0.0
    %1541 = vmatpush1.msra.mxu0 0.0
    %1542 = vmatprep.subr.mxu0 0.0
    %1543 = vmatpush1.msra.mxu0 0.0
    %1544 = vmatprep.subr.mxu0 0.0
    %1545 = vmatpush1.msra.mxu0 0.0
    %1546 = vmatprep.subr.mxu0 0.0
    %1547 = vmatpush1.msra.mxu0 0.0
    %1548 = vmatprep.subr.mxu0 0.0
    %1549 = vmatpush1.msra.mxu0 0.0
    %1550 = vmatprep.subr.mxu0 0.0
    %1551 = vmatpush1.msra.mxu0 0.0
    %1552 = vmatprep.subr.mxu0 0.0
    %1553 = vmatpush1.msra.mxu0 0.0
    %1554 = vmatprep.subr.mxu0 0.0
    %1555 = vmatpush1.msra.mxu0 0.0
    %1556 = vmatprep.subr.mxu0 0.0
    %1557 = vmatpush1.msra.mxu0 0.0
    %1558 = vmatprep.subr.mxu0 0.0
    %1559 = vmatpush1.msra.mxu0 0.0
    %1560 = vmatprep.subr.mxu0 0.0
    %1561 = vmatpush1.msra.mxu0 0.0
    %1562 = vmatprep.subr.mxu0 0.0
    %1563 = vmatpush1.msra.mxu0 0.0
    %1564 = vmatprep.subr.mxu0 0.0
    %1565 = vmatpush1.msra.mxu0 0.0
    %1566 = vmatprep.subr.mxu0 0.0
    %1567 = vmatpush1.msra.mxu0 0.0
    %1568 = vmatprep.subr.mxu0 0.0
    %1569 = vmatpush1.msra.mxu0 0.0
    %1570 = vmatprep.subr.mxu0 0.0
    %1571 = vmatpush1.msra.mxu0 0.0
    %1572 = vmatprep.subr.mxu0 0.0
    %1573 = vmatpush1.msra.mxu0 0.0
    %1574 = vmatprep.subr.mxu0 0.0
    %1575 = vmatpush1.msra.mxu0 0.0
    %1576 = vmatprep.mubr.f32.mxu0 0.0
    %1577 = vmatmul.mubr.f32.gmra.mrb[0].mxu0 %v1029
    %v1578 = vpop.f32.mrb[0].mxu0
    %v1579 = vadd.f32 %v1509, %v1578
    %v1580 = vpop.f32.mrb[0].mxu0
    %1581 = vdwg.mxu0
    %v1582 = vld [vmem:[#allocation27] sm:$0x1]
    %v1584 = vlaneseq
    %v1585 = vshrl.u32 %v1584, 7
    %v1586 = vsub.s32 0, %v1585
    %v1587 = vrot.slane %v1582, %v1586
    %v1589 = vadd.f32 %v1579, %v1587
    %v1590 = vxor.u32 %v1589, 2147483648
    %v1591 = vmul.f32 %v1590, 1.442695
    %v1592 = vpow.pop %v1591
    %v1593 = vadd.f32 %v1592, 1.0
    %v1594 = vrcp.pop %v1593
    %v1595 = vmul.f32 1.0, %v1594
    %v1596 = vmul.f32 %v1276, %v775
    %v1597 = vmul.f32 %v1114, %v1433
    %v1598 = vadd.f32 %v1596, %v1597
    %v1599 = vtanh.pop %v1598
    %v1600 = vmul.f32 %v1595, %v1599
    %v1601 = vld [vmem:[%s43] sm:$0xff]
    %v1602 = vld [vmem:[%s43 + $0x8] sm:$0xff]
    %v1603 = vld [vmem:[%s43 + $0x10] sm:$0xff]
    %v1604 = vld [vmem:[%s43 + $0x18] sm:$0xff]
    %v1605 = vld [vmem:[#allocation29] sm:$0xff]
    %v1606 = vld [vmem:[#allocation29 + $0x8] sm:$0xff]
    %v1607 = vld [vmem:[#allocation29 + $0x10] sm:$0xff]
    %v1608 = vld [vmem:[#allocation29 + $0x18] sm:$0xff]
    %1609 = vmatprep.subr.mxu0 0.0
    %1610 = vmatpush1.msra.mxu0 %v1605
    %1611 = vmatprep.subr.mxu0 0.0
    %1612 = vmatpush1.msra.mxu0 %v1606
    %1613 = vmatprep.subr.mxu0 0.0
    %1614 = vmatpush1.msra.mxu0 %v1607
    %1615 = vmatprep.subr.mxu0 0.0
    %1616 = vmatpush1.msra.mxu0 %v1608
    %1617 = vmatprep.subr.mxu0 0.0
    %1618 = vmatpush1.msra.mxu0 0.0
    %1619 = vmatprep.subr.mxu0 0.0
    %1620 = vmatpush1.msra.mxu0 0.0
    %1621 = vmatprep.subr.mxu0 0.0
    %1622 = vmatpush1.msra.mxu0 0.0
    %1623 = vmatprep.subr.mxu0 0.0
    %1624 = vmatpush1.msra.mxu0 0.0
    %1625 = vmatprep.subr.mxu0 0.0
    %1626 = vmatpush1.msra.mxu0 0.0
    %1627 = vmatprep.subr.mxu0 0.0
    %1628 = vmatpush1.msra.mxu0 0.0
    %1629 = vmatprep.subr.mxu0 0.0
    %1630 = vmatpush1.msra.mxu0 0.0
    %1631 = vmatprep.subr.mxu0 0.0
    %1632 = vmatpush1.msra.mxu0 0.0
    %1633 = vmatprep.subr.mxu0 0.0
    %1634 = vmatpush1.msra.mxu0 0.0
    %1635 = vmatprep.subr.mxu0 0.0
    %1636 = vmatpush1.msra.mxu0 0.0
    %1637 = vmatprep.subr.mxu0 0.0
    %1638 = vmatpush1.msra.mxu0 0.0
    %1639 = vmatprep.subr.mxu0 0.0
    %1640 = vmatpush1.msra.mxu0 0.0
    %1641 = vmatprep.subr.mxu0 0.0
    %1642 = vmatpush1.msra.mxu0 0.0
    %1643 = vmatprep.subr.mxu0 0.0
    %1644 = vmatpush1.msra.mxu0 0.0
    %1645 = vmatprep.subr.mxu0 0.0
    %1646 = vmatpush1.msra.mxu0 0.0
    %1647 = vmatprep.subr.mxu0 0.0
    %1648 = vmatpush1.msra.mxu0 0.0
    %1649 = vmatprep.subr.mxu0 0.0
    %1650 = vmatpush1.msra.mxu0 0.0
    %1651 = vmatprep.subr.mxu0 0.0
    %1652 = vmatpush1.msra.mxu0 0.0
    %1653 = vmatprep.subr.mxu0 0.0
    %1654 = vmatpush1.msra.mxu0 0.0
    %1655 = vmatprep.subr.mxu0 0.0
    %1656 = vmatpush1.msra.mxu0 0.0
    %1657 = vmatprep.subr.mxu0 0.0
    %1658 = vmatpush1.msra.mxu0 0.0
    %1659 = vmatprep.subr.mxu0 0.0
    %1660 = vmatpush1.msra.mxu0 0.0
    %1661 = vmatprep.subr.mxu0 0.0
    %1662 = vmatpush1.msra.mxu0 0.0
    %1663 = vmatprep.subr.mxu0 0.0
    %1664 = vmatpush1.msra.mxu0 0.0
    %1665 = vmatprep.subr.mxu0 0.0
    %1666 = vmatpush1.msra.mxu0 0.0
    %1667 = vmatprep.subr.mxu0 0.0
    %1668 = vmatpush1.msra.mxu0 0.0
    %1669 = vmatprep.subr.mxu0 0.0
    %1670 = vmatpush1.msra.mxu0 0.0
    %1671 = vmatprep.subr.mxu0 0.0
    %1672 = vmatpush1.msra.mxu0 0.0
    %1673 = vmatprep.mubr.f32.mxu0 0.0
    %1674 = vmatmul.mubr.f32.gmra.mrb[0].mxu0 %v1029
    %v1675 = vpop.f32.mrb[0].mxu0
    %v1676 = vadd.f32 0.0, %v1675
    %v1677 = vpop.f32.mrb[0].mxu0
    %1678 = vdwg.mxu0
    %1679 = vmatprep.subr.mxu0 0.0
    %1680 = vmatpush1.msra.mxu0 %v1601
    %1681 = vmatprep.subr.mxu0 0.0
    %1682 = vmatpush1.msra.mxu0 %v1602
    %1683 = vmatprep.subr.mxu0 0.0
    %1684 = vmatpush1.msra.mxu0 %v1603
    %1685 = vmatprep.subr.mxu0 0.0
    %1686 = vmatpush1.msra.mxu0 %v1604
    %1687 = vmatprep.subr.mxu0 0.0
    %1688 = vmatpush1.msra.mxu0 0.0
    %1689 = vmatprep.subr.mxu0 0.0
    %1690 = vmatpush1.msra.mxu0 0.0
    %1691 = vmatprep.subr.mxu0 0.0
    %1692 = vmatpush1.msra.mxu0 0.0
    %1693 = vmatprep.subr.mxu0 0.0
    %1694 = vmatpush1.msra.mxu0 0.0
    %1695 = vmatprep.subr.mxu0 0.0
    %1696 = vmatpush1.msra.mxu0 0.0
    %1697 = vmatprep.subr.mxu0 0.0
    %1698 = vmatpush1.msra.mxu0 0.0
    %1699 = vmatprep.subr.mxu0 0.0
    %1700 = vmatpush1.msra.mxu0 0.0
    %1701 = vmatprep.subr.mxu0 0.0
    %1702 = vmatpush1.msra.mxu0 0.0
    %1703 = vmatprep.subr.mxu0 0.0
    %1704 = vmatpush1.msra.mxu0 0.0
    %1705 = vmatprep.subr.mxu0 0.0
    %1706 = vmatpush1.msra.mxu0 0.0
    %1707 = vmatprep.subr.mxu0 0.0
    %1708 = vmatpush1.msra.mxu0 0.0
    %1709 = vmatprep.subr.mxu0 0.0
    %1710 = vmatpush1.msra.mxu0 0.0
    %1711 = vmatprep.subr.mxu0 0.0
    %1712 = vmatpush1.msra.mxu0 0.0
    %1713 = vmatprep.subr.mxu0 0.0
    %1714 = vmatpush1.msra.mxu0 0.0
    %1715 = vmatprep.subr.mxu0 0.0
    %1716 = vmatpush1.msra.mxu0 0.0
    %1717 = vmatprep.subr.mxu0 0.0
    %1718 = vmatpush1.msra.mxu0 0.0
    %1719 = vmatprep.subr.mxu0 0.0
    %1720 = vmatpush1.msra.mxu0 0.0
    %1721 = vmatprep.subr.mxu0 0.0
    %1722 = vmatpush1.msra.mxu0 0.0
    %1723 = vmatprep.subr.mxu0 0.0
    %1724 = vmatpush1.msra.mxu0 0.0
    %1725 = vmatprep.subr.mxu0 0.0
    %1726 = vmatpush1.msra.mxu0 0.0
    %1727 = vmatprep.subr.mxu0 0.0
    %1728 = vmatpush1.msra.mxu0 0.0
    %1729 = vmatprep.subr.mxu0 0.0
    %1730 = vmatpush1.msra.mxu0 0.0
    %1731 = vmatprep.subr.mxu0 0.0
    %1732 = vmatpush1.msra.mxu0 0.0
    %1733 = vmatprep.subr.mxu0 0.0
    %1734 = vmatpush1.msra.mxu0 0.0
    %1735 = vmatprep.subr.mxu0 0.0
    %1736 = vmatpush1.msra.mxu0 0.0
    %1737 = vmatprep.subr.mxu0 0.0
    %1738 = vmatpush1.msra.mxu0 0.0
    %1739 = vmatprep.subr.mxu0 0.0
    %1740 = vmatpush1.msra.mxu0 0.0
    %1741 = vmatprep.subr.mxu0 0.0
    %1742 = vmatpush1.msra.mxu0 0.0
    %1743 = vmatprep.mubr.f32.mxu0 0.0
    %1744 = vmatmul.mubr.f32.gmra.mrb[0].mxu0 %v794
    %v1745 = vpop.f32.mrb[0].mxu0
    %v1746 = vadd.f32 %v1676, %v1745
    %v1747 = vpop.f32.mrb[0].mxu0
    %1748 = vdwg.mxu0
    %v1749 = vld [vmem:[#allocation30] sm:$0x1]
    %v1751 = vlaneseq
    %v1752 = vshrl.u32 %v1751, 7
    %v1753 = vsub.s32 0, %v1752
    %v1754 = vrot.slane %v1749, %v1753
    %v1756 = vadd.f32 %v1746, %v1754
    %v1757 = vxor.u32 %v1756, 2147483648
    %v1758 = vmul.f32 %v1757, 1.442695
    %v1759 = vpow.pop %v1758
    %v1760 = vadd.f32 %v1759, 1.0
    %v1761 = vrcp.pop %v1760
    %v1762 = vmul.f32 1.0, %v1761
    %v1763 = vld [vmem:[%s49] sm:$0xff]
    %v1764 = vld [vmem:[%s49 + $0x8] sm:$0xff]
    %v1765 = vld [vmem:[%s49 + $0x10] sm:$0xff]
    %v1766 = vld [vmem:[%s49 + $0x18] sm:$0xff]
    %v1767 = vld [vmem:[%s51] sm:$0x1]
    %v1769 = vlaneseq
    %v1770 = vshrl.u32 %v1769, 7
    %v1771 = vsub.s32 0, %v1770
    %v1772 = vrot.slane %v1767, %v1771
    %v1775 = vsel %vm792, %v1762, 0
    %1777 = vmatprep.subr.mxu0 0.0
    %1778 = vmatpush1.msra.mxu0 %v1763
    %1779 = vmatprep.subr.mxu0 0.0
    %1780 = vmatpush1.msra.mxu0 %v1764
    %1781 = vmatprep.subr.mxu0 0.0
    %1782 = vmatpush1.msra.mxu0 %v1765
    %1783 = vmatprep.subr.mxu0 0.0
    %1784 = vmatpush1.msra.mxu0 %v1766
    %1785 = vmatprep.subr.mxu0 0.0
    %1786 = vmatpush1.msra.mxu0 0.0
    %1787 = vmatprep.subr.mxu0 0.0
    %1788 = vmatpush1.msra.mxu0 0.0
    %1789 = vmatprep.subr.mxu0 0.0
    %1790 = vmatpush1.msra.mxu0 0.0
    %1791 = vmatprep.subr.mxu0 0.0
    %1792 = vmatpush1.msra.mxu0 0.0
    %1793 = vmatprep.subr.mxu0 0.0
    %1794 = vmatpush1.msra.mxu0 0.0
    %1795 = vmatprep.subr.mxu0 0.0
    %1796 = vmatpush1.msra.mxu0 0.0
    %1797 = vmatprep.subr.mxu0 0.0
    %1798 = vmatpush1.msra.mxu0 0.0
    %1799 = vmatprep.subr.mxu0 0.0
    %1800 = vmatpush1.msra.mxu0 0.0
    %1801 = vmatprep.subr.mxu0 0.0
    %1802 = vmatpush1.msra.mxu0 0.0
    %1803 = vmatprep.subr.mxu0 0.0
    %1804 = vmatpush1.msra.mxu0 0.0
    %1805 = vmatprep.subr.mxu0 0.0
    %1806 = vmatpush1.msra.mxu0 0.0
    %1807 = vmatprep.subr.mxu0 0.0
    %1808 = vmatpush1.msra.mxu0 0.0
    %1809 = vmatprep.subr.mxu0 0.0
    %1810 = vmatpush1.msra.mxu0 0.0
    %1811 = vmatprep.subr.mxu0 0.0
    %1812 = vmatpush1.msra.mxu0 0.0
    %1813 = vmatprep.subr.mxu0 0.0
    %1814 = vmatpush1.msra.mxu0 0.0
    %1815 = vmatprep.subr.mxu0 0.0
    %1816 = vmatpush1.msra.mxu0 0.0
    %1817 = vmatprep.subr.mxu0 0.0
    %1818 = vmatpush1.msra.mxu0 0.0
    %1819 = vmatprep.subr.mxu0 0.0
    %1820 = vmatpush1.msra.mxu0 0.0
    %1821 = vmatprep.subr.mxu0 0.0
    %1822 = vmatpush1.msra.mxu0 0.0
    %1823 = vmatprep.subr.mxu0 0.0
    %1824 = vmatpush1.msra.mxu0 0.0
    %1825 = vmatprep.subr.mxu0 0.0
    %1826 = vmatpush1.msra.mxu0 0.0
    %1827 = vmatprep.subr.mxu0 0.0
    %1828 = vmatpush1.msra.mxu0 0.0
    %1829 = vmatprep.subr.mxu0 0.0
    %1830 = vmatpush1.msra.mxu0 0.0
    %1831 = vmatprep.subr.mxu0 0.0
    %1832 = vmatpush1.msra.mxu0 0.0
    %1833 = vmatprep.subr.mxu0 0.0
    %1834 = vmatpush1.msra.mxu0 0.0
    %1835 = vmatprep.subr.mxu0 0.0
    %1836 = vmatpush1.msra.mxu0 0.0
    %1837 = vmatprep.subr.mxu0 0.0
    %1838 = vmatpush1.msra.mxu0 0.0
    %1839 = vmatprep.subr.mxu0 0.0
    %1840 = vmatpush1.msra.mxu0 0.0
    %1841 = vmatprep.mubr.f32.mxu0 0.0
    %1842 = vmatmul.mubr.f32.gmra.mrb[0].mxu0 %v1775
    %v1843 = vpop.f32.mrb[0].mxu0
    %v1844 = vadd.f32 %v1772, %v1843
    %v1845 = vpop.f32.mrb[0].mxu0
    %1846 = vdwg.mxu0
    %v1847 = vxor.u32 %v1844, 2147483648
    %v1848 = vmul.f32 %v1847, 1.442695
    %v1849 = vpow.pop %v1848
    %v1850 = vadd.f32 %v1849, 1.0
    %v1851 = vrcp.pop %v1850
    %v1852 = vmul.f32 1.0, %v1851
    %vm1853 = vcmask 121856
    %v1854 = vsel %vm1853, %v1852, -inf
    %1855 = vmax.xlane.f32.xlu0 %v1854
    %v1856 = vpop.xlane.xlu0 %1855
    %v1857 = vsub.f32 %v1852, %v1856
    %v1858 = vmul.f32 %v1857, 1.442695
    %v1859 = vpow.pop %v1858
    %v1860 = vsel %vm1853, %v1859, 0.0
    %1861 = vadd.xlane.f32.xlu0 %v1860
    %v1862 = vpop.xlane.xlu0 %1861
    %v1863 = vrcp.pop %v1862
    %v1864 = vmul.f32 %v1859, %v1863
    %v1865 = vlaneseq
    %v1866 = vshrl.u32 %v1865, 7
    %v1867 = vsub.s32 0, %v1866
    %v1868 = vrot.slane %v1864, %v1867
    %1870 = vbcast.lane.b32.xlu0 %v1868, 256
    %v1871 = vpop.permute.xlu0 %1870
    %v1872 = vlaneseq
    %v1873 = vshrl.u32 %v1872, 7
    %v1874 = vsub.s32 1, %v1873
    %v1875 = vrot.slane %v1864, %v1874
    %1877 = vbcast.lane.b32.xlu0 %v1875, 256
    %v1878 = vpop.permute.xlu0 %1877
    %v1879 = vlaneseq
    %v1880 = vshrl.u32 %v1879, 7
    %v1881 = vsub.s32 2, %v1880
    %v1882 = vrot.slane %v1864, %v1881
    %1884 = vbcast.lane.b32.xlu0 %v1882, 256
    %v1885 = vpop.permute.xlu0 %1884
    %v1886 = vlaneseq
    %v1887 = vshrl.u32 %v1886, 7
    %v1888 = vsub.s32 3, %v1887
    %v1889 = vrot.slane %v1864, %v1888
    %1891 = vbcast.lane.b32.xlu0 %v1889, 256
    %v1892 = vpop.permute.xlu0 %1891
    %v1893 = vlaneseq
    %v1894 = vshrl.u32 %v1893, 7
    %v1895 = vsub.s32 4, %v1894
    %v1896 = vrot.slane %v1864, %v1895
    %1898 = vbcast.lane.b32.xlu0 %v1896, 256
    %v1899 = vpop.permute.xlu0 %1898
    %v1900 = vlaneseq
    %v1901 = vshrl.u32 %v1900, 7
    %v1902 = vsub.s32 5, %v1901
    %v1903 = vrot.slane %v1864, %v1902
    %1905 = vbcast.lane.b32.xlu0 %v1903, 256
    %v1906 = vpop.permute.xlu0 %1905
    %v1907 = vlaneseq
    %v1908 = vshrl.u32 %v1907, 7
    %v1909 = vsub.s32 6, %v1908
    %v1910 = vrot.slane %v1864, %v1909
    %1912 = vbcast.lane.b32.xlu0 %v1910, 256
    %v1913 = vpop.permute.xlu0 %1912
    %v1914 = vlaneseq
    %v1915 = vshrl.u32 %v1914, 7
    %v1916 = vsub.s32 7, %v1915
    %v1917 = vrot.slane %v1864, %v1916
    %1919 = vbcast.lane.b32.xlu0 %v1917, 256
    %v1920 = vpop.permute.xlu0 %1919
    %v1921 = vmul.f32 %v1871, %v776
    %v1922 = vmul.f32 %v1878, %v777
    %v1923 = vmul.f32 %v1885, %v778
    %v1924 = vmul.f32 %v1892, %v779
    %v1925 = vmul.f32 %v1899, %v780
    %v1926 = vmul.f32 %v1906, %v781
    %v1927 = vmul.f32 %v1913, %v782
    %v1928 = vmul.f32 %v1920, %v783
    %v1929 = vsel %vm792, %v1921, 0.0
    %v1930 = vrot.slane %v1929, 4
    %v1931 = vadd.f32 %v1929, %v1930
    %v1932 = vrot.slane %v1931, 2
    %v1933 = vadd.f32 %v1931, %v1932
    %v1934 = vrot.slane %v1933, 1
    %v1935 = vadd.f32 %v1933, %v1934
    %v1936 = vsel %vm792, %v1922, 0.0
    %v1937 = vrot.slane %v1936, 4
    %v1938 = vadd.f32 %v1936, %v1937
    %v1939 = vrot.slane %v1938, 2
    %v1940 = vadd.f32 %v1938, %v1939
    %v1941 = vrot.slane %v1940, 1
    %v1942 = vadd.f32 %v1940, %v1941
    %v1943 = vsel %vm792, %v1923, 0.0
    %v1944 = vrot.slane %v1943, 4
    %v1945 = vadd.f32 %v1943, %v1944
    %v1946 = vrot.slane %v1945, 2
    %v1947 = vadd.f32 %v1945, %v1946
    %v1948 = vrot.slane %v1947, 1
    %v1949 = vadd.f32 %v1947, %v1948
    %v1950 = vsel %vm792, %v1924, 0.0
    %v1951 = vrot.slane %v1950, 4
    %v1952 = vadd.f32 %v1950, %v1951
    %v1953 = vrot.slane %v1952, 2
    %v1954 = vadd.f32 %v1952, %v1953
    %v1955 = vrot.slane %v1954, 1
    %v1956 = vadd.f32 %v1954, %v1955
    %v1957 = vsel %vm792, %v1925, 0.0
    %v1958 = vrot.slane %v1957, 4
    %v1959 = vadd.f32 %v1957, %v1958
    %v1960 = vrot.slane %v1959, 2
    %v1961 = vadd.f32 %v1959, %v1960
    %v1962 = vrot.slane %v1961, 1
    %v1963 = vadd.f32 %v1961, %v1962
    %v1964 = vsel %vm792, %v1926, 0.0
    %v1965 = vrot.slane %v1964, 4
    %v1966 = vadd.f32 %v1964, %v1965
    %v1967 = vrot.slane %v1966, 2
    %v1968 = vadd.f32 %v1966, %v1967
    %v1969 = vrot.slane %v1968, 1
    %v1970 = vadd.f32 %v1968, %v1969
    %v1971 = vsel %vm792, %v1927, 0.0
    %v1972 = vrot.slane %v1971, 4
    %v1973 = vadd.f32 %v1971, %v1972
    %v1974 = vrot.slane %v1973, 2
    %v1975 = vadd.f32 %v1973, %v1974
    %v1976 = vrot.slane %v1975, 1
    %v1977 = vadd.f32 %v1975, %v1976
    %v1978 = vsel %vm792, %v1928, 0.0
    %v1979 = vrot.slane %v1978, 4
    %v1980 = vadd.f32 %v1978, %v1979
    %v1981 = vrot.slane %v1980, 2
    %v1982 = vadd.f32 %v1980, %v1981
    %v1983 = vrot.slane %v1982, 1
    %v1984 = vadd.f32 %v1982, %v1983
    %v1985 = vld [vmem:[#allocation32] sm:$0xff]
    %v1986 = vld [vmem:[#allocation32 + $0x8] sm:$0xff]
    %v1987 = vld [vmem:[#allocation32 + $0x10] sm:$0xff]
    %v1988 = vld [vmem:[#allocation32 + $0x18] sm:$0xff]
    %v1989 = vld [vmem:[#allocation33] sm:$0xff]
    %v1990 = vld [vmem:[#allocation33 + $0x8] sm:$0xff]
    %v1991 = vld [vmem:[#allocation33 + $0x10] sm:$0xff]
    %v1992 = vld [vmem:[#allocation33 + $0x18] sm:$0xff]
    %vm2001 = vcmask 1041409
    %v2002 = vsel %vm2001, %v1942, %v1935
    %vm2003 = vcmask 1042434
    %v2004 = vsel %vm2003, %v1949, %v2002
    %vm2005 = vcmask 1043459
    %v2006 = vsel %vm2005, %v1956, %v2004
    %vm2007 = vcmask 1044484
    %v2008 = vsel %vm2007, %v1963, %v2006
    %vm2009 = vcmask 1045509
    %v2010 = vsel %vm2009, %v1970, %v2008
    %vm2011 = vcmask 1046534
    %v2012 = vsel %vm2011, %v1977, %v2010
    %vm2013 = vcmask 1047559
    %v2014 = vsel %vm2013, %v1984, %v2012
    %v2015 = vsel %vm792, %v2014, 0
    %2017 = vmatprep.subr.mxu0 0.0
    %2018 = vmatpush1.msra.mxu0 %v1989
    %2019 = vmatprep.subr.mxu0 0.0
    %2020 = vmatpush1.msra.mxu0 %v1990
    %2021 = vmatprep.subr.mxu0 0.0
    %2022 = vmatpush1.msra.mxu0 %v1991
    %2023 = vmatprep.subr.mxu0 0.0
    %2024 = vmatpush1.msra.mxu0 %v1992
    %2025 = vmatprep.subr.mxu0 0.0
    %2026 = vmatpush1.msra.mxu0 0.0
    %2027 = vmatprep.subr.mxu0 0.0
    %2028 = vmatpush1.msra.mxu0 0.0
    %2029 = vmatprep.subr.mxu0 0.0
    %2030 = vmatpush1.msra.mxu0 0.0
    %2031 = vmatprep.subr.mxu0 0.0
    %2032 = vmatpush1.msra.mxu0 0.0
    %2033 = vmatprep.subr.mxu0 0.0
    %2034 = vmatpush1.msra.mxu0 0.0
    %2035 = vmatprep.subr.mxu0 0.0
    %2036 = vmatpush1.msra.mxu0 0.0
    %2037 = vmatprep.subr.mxu0 0.0
    %2038 = vmatpush1.msra.mxu0 0.0
    %2039 = vmatprep.subr.mxu0 0.0
    %2040 = vmatpush1.msra.mxu0 0.0
    %2041 = vmatprep.subr.mxu0 0.0
    %2042 = vmatpush1.msra.mxu0 0.0
    %2043 = vmatprep.subr.mxu0 0.0
    %2044 = vmatpush1.msra.mxu0 0.0
    %2045 = vmatprep.subr.mxu0 0.0
    %2046 = vmatpush1.msra.mxu0 0.0
    %2047 = vmatprep.subr.mxu0 0.0
    %2048 = vmatpush1.msra.mxu0 0.0
    %2049 = vmatprep.subr.mxu0 0.0
    %2050 = vmatpush1.msra.mxu0 0.0
    %2051 = vmatprep.subr.mxu0 0.0
    %2052 = vmatpush1.msra.mxu0 0.0
    %2053 = vmatprep.subr.mxu0 0.0
    %2054 = vmatpush1.msra.mxu0 0.0
    %2055 = vmatprep.subr.mxu0 0.0
    %2056 = vmatpush1.msra.mxu0 0.0
    %2057 = vmatprep.subr.mxu0 0.0
    %2058 = vmatpush1.msra.mxu0 0.0
    %2059 = vmatprep.subr.mxu0 0.0
    %2060 = vmatpush1.msra.mxu0 0.0
    %2061 = vmatprep.subr.mxu0 0.0
    %2062 = vmatpush1.msra.mxu0 0.0
    %2063 = vmatprep.subr.mxu0 0.0
    %2064 = vmatpush1.msra.mxu0 0.0
    %2065 = vmatprep.subr.mxu0 0.0
    %2066 = vmatpush1.msra.mxu0 0.0
    %2067 = vmatprep.subr.mxu0 0.0
    %2068 = vmatpush1.msra.mxu0 0.0
    %2069 = vmatprep.subr.mxu0 0.0
    %2070 = vmatpush1.msra.mxu0 0.0
    %2071 = vmatprep.subr.mxu0 0.0
    %2072 = vmatpush1.msra.mxu0 0.0
    %2073 = vmatprep.subr.mxu0 0.0
    %2074 = vmatpush1.msra.mxu0 0.0
    %2075 = vmatprep.subr.mxu0 0.0
    %2076 = vmatpush1.msra.mxu0 0.0
    %2077 = vmatprep.subr.mxu0 0.0
    %2078 = vmatpush1.msra.mxu0 0.0
    %2079 = vmatprep.subr.mxu0 0.0
    %2080 = vmatpush1.msra.mxu0 0.0
    %2081 = vmatprep.mubr.f32.mxu0 0.0
    %2082 = vmatmul.mubr.f32.gmra.mrb[0].mxu0 %v2015
    %v2083 = vpop.f32.mrb[0].mxu0
    %v2084 = vadd.f32 0.0, %v2083
    %v2085 = vpop.f32.mrb[0].mxu0
    %2086 = vdwg.mxu0
    %v2088 = vsel %vm792, %v1600, 0
    %2090 = vmatprep.subr.mxu0 0.0
    %2091 = vmatpush1.msra.mxu0 %v1985
    %2092 = vmatprep.subr.mxu0 0.0
    %2093 = vmatpush1.msra.mxu0 %v1986
    %2094 = vmatprep.subr.mxu0 0.0
    %2095 = vmatpush1.msra.mxu0 %v1987
    %2096 = vmatprep.subr.mxu0 0.0
    %2097 = vmatpush1.msra.mxu0 %v1988
    %2098 = vmatprep.subr.mxu0 0.0
    %2099 = vmatpush1.msra.mxu0 0.0
    %2100 = vmatprep.subr.mxu0 0.0
    %2101 = vmatpush1.msra.mxu0 0.0
    %2102 = vmatprep.subr.mxu0 0.0
    %2103 = vmatpush1.msra.mxu0 0.0
    %2104 = vmatprep.subr.mxu0 0.0
    %2105 = vmatpush1.msra.mxu0 0.0
    %2106 = vmatprep.subr.mxu0 0.0
    %2107 = vmatpush1.msra.mxu0 0.0
    %2108 = vmatprep.subr.mxu0 0.0
    %2109 = vmatpush1.msra.mxu0 0.0
    %2110 = vmatprep.subr.mxu0 0.0
    %2111 = vmatpush1.msra.mxu0 0.0
    %2112 = vmatprep.subr.mxu0 0.0
    %2113 = vmatpush1.msra.mxu0 0.0
    %2114 = vmatprep.subr.mxu0 0.0
    %2115 = vmatpush1.msra.mxu0 0.0
    %2116 = vmatprep.subr.mxu0 0.0
    %2117 = vmatpush1.msra.mxu0 0.0
    %2118 = vmatprep.subr.mxu0 0.0
    %2119 = vmatpush1.msra.mxu0 0.0
    %2120 = vmatprep.subr.mxu0 0.0
    %2121 = vmatpush1.msra.mxu0 0.0
    %2122 = vmatprep.subr.mxu0 0.0
    %2123 = vmatpush1.msra.mxu0 0.0
    %2124 = vmatprep.subr.mxu0 0.0
    %2125 = vmatpush1.msra.mxu0 0.0
    %2126 = vmatprep.subr.mxu0 0.0
    %2127 = vmatpush1.msra.mxu0 0.0
    %2128 = vmatprep.subr.mxu0 0.0
    %2129 = vmatpush1.msra.mxu0 0.0
    %2130 = vmatprep.subr.mxu0 0.0
    %2131 = vmatpush1.msra.mxu0 0.0
    %2132 = vmatprep.subr.mxu0 0.0
    %2133 = vmatpush1.msra.mxu0 0.0
    %2134 = vmatprep.subr.mxu0 0.0
    %2135 = vmatpush1.msra.mxu0 0.0
    %2136 = vmatprep.subr.mxu0 0.0
    %2137 = vmatpush1.msra.mxu0 0.0
    %2138 = vmatprep.subr.mxu0 0.0
    %2139 = vmatpush1.msra.mxu0 0.0
    %2140 = vmatprep.subr.mxu0 0.0
    %2141 = vmatpush1.msra.mxu0 0.0
    %2142 = vmatprep.subr.mxu0 0.0
    %2143 = vmatpush1.msra.mxu0 0.0
    %2144 = vmatprep.subr.mxu0 0.0
    %2145 = vmatpush1.msra.mxu0 0.0
    %2146 = vmatprep.subr.mxu0 0.0
    %2147 = vmatpush1.msra.mxu0 0.0
    %2148 = vmatprep.subr.mxu0 0.0
    %2149 = vmatpush1.msra.mxu0 0.0
    %2150 = vmatprep.subr.mxu0 0.0
    %2151 = vmatpush1.msra.mxu0 0.0
    %2152 = vmatprep.subr.mxu0 0.0
    %2153 = vmatpush1.msra.mxu0 0.0
    %2154 = vmatprep.mubr.f32.mxu0 0.0
    %2155 = vmatmul.mubr.f32.gmra.mrb[0].mxu0 %v2088
    %v2156 = vpop.f32.mrb[0].mxu0
    %v2157 = vadd.f32 %v2084, %v2156
    %v2158 = vpop.f32.mrb[0].mxu0
    %2159 = vdwg.mxu0
    %v2160 = vld [vmem:[%s57] sm:$0x1]
    %v2162 = vlaneseq
    %v2163 = vshrl.u32 %v2162, 7
    %v2164 = vsub.s32 0, %v2163
    %v2165 = vrot.slane %v2160, %v2164
    %v2167 = vadd.f32 %v2157, %v2165
    %vm2168 = vcmask 326656
    %v2169 = vsel %vm2168, %v2167, -inf
    %2170 = vmax.xlane.f32.xlu0 %v2169
    %v2171 = vpop.xlane.xlu0 %2170
    %v2172 = vsub.f32 %v2167, %v2171
    %v2173 = vmul.f32 %v2172, 1.442695
    %v2174 = vpow.pop %v2173
    %v2175 = vsel %vm2168, %v2174, 0.0
    %2176 = vadd.xlane.f32.xlu0 %v2175
    %v2177 = vpop.xlane.xlu0 %2176
    %v2178 = vlog2.pop %v2177
    %v2179 = vmul.f32 %v2178, 0.6931472
    %v2180 = vsub.f32 %v2172, %v2179
    %2181 = vst.msk [vmem:[#allocation35] sm:$0xff] %vm2168, %v2180
    %2182 = vst.msk [vmem:[#allocation36] sm:$0xff] %vm792, %v1600
    %vm2183 = vcmask 64512
    %2184 = vst.msk [vmem:[#allocation38] sm:$0xff] %vm2183, %v1864
    %2185 = vst.msk [vmem:[#allocation39] sm:$0xff] %vm792, %v1598
    %2187 = vst.msk [vmem:[#allocation41] sm:$0xff] %vm792, %v2014
    // Predicated region
    $region430: #{tpu_custom_call.1} parent=1 // pred_check
      _
    $region431: #{tpu_custom_call.1} parent=1 // pred_check_branch
      %2189 = sbr.rel (0) target = $region433
    $region432: #{tpu_custom_call.1} parent=1 // pred_region
      %s2191 = ssub.s32 128, 128
      %2192 = vsyncadd [#allocation6], %s2191
      %s2194 = sshll.u32 [#allocation35], 4
      %s2195 = int_to_ptr.vmem [resolvable:$true] %s2194
      %2197 = dma.vmem_to_hbm [thread:$0]  %s2195, 128, %s59, [#allocation6]
    $region433: #{tpu_custom_call.1} parent=1 // pred_fallthru
      _
    // Predicated region
    $region434: #{tpu_custom_call.1} parent=1 // pred_check
      _
    $region435: #{tpu_custom_call.1} parent=1 // pred_check_branch
      %2199 = sbr.rel (0) target = $region437
    $region436: #{tpu_custom_call.1} parent=1 // pred_region
      %s2201 = ssub.s32 128, 128
      %2202 = vsyncadd [#allocation37], %s2201
      %s2204 = sshll.u32 [#allocation36], 4
      %s2205 = int_to_ptr.vmem [resolvable:$true] %s2204
      %2207 = dma.vmem_to_hbm [thread:$0]  %s2205, 128, %s61, [#allocation37]
    $region437: #{tpu_custom_call.1} parent=1 // pred_fallthru
      _
    // Predicated region
    $region438: #{tpu_custom_call.1} parent=1 // pred_check
      _
    $region439: #{tpu_custom_call.1} parent=1 // pred_check_branch
      %2209 = sbr.rel (0) target = $region441
    $region440: #{tpu_custom_call.1} parent=1 // pred_region
      %s2211 = ssub.s32 128, 128
      %2212 = vsyncadd [#allocation37], %s2211
      %s2214 = sshll.u32 [#allocation38], 4
      %s2215 = int_to_ptr.vmem [resolvable:$true] %s2214
      %2217 = dma.vmem_to_hbm [thread:$0]  %s2215, 128, %s63, [#allocation37]
    $region441: #{tpu_custom_call.1} parent=1 // pred_fallthru
      _
    // Predicated region
    $region442: #{tpu_custom_call.1} parent=1 // pred_check
      _
    $region443: #{tpu_custom_call.1} parent=1 // pred_check_branch
      %2219 = sbr.rel (0) target = $region445
    $region444: #{tpu_custom_call.1} parent=1 // pred_region
      %s2221 = ssub.s32 128, 128
      %2222 = vsyncadd [#allocation40], %s2221
      %s2224 = sshll.u32 [#allocation39], 4
      %s2225 = int_to_ptr.vmem [resolvable:$true] %s2224
      %2227 = dma.vmem_to_hbm [thread:$0]  %s2225, 128, %s65, [#allocation40]
    $region445: #{tpu_custom_call.1} parent=1 // pred_fallthru
      _
    // Predicated region
    $region446: #{tpu_custom_call.1} parent=1 // pred_check
      _
    $region447: #{tpu_custom_call.1} parent=1 // pred_check_branch
      %2229 = sbr.rel (0) target = $region449
    $region448: #{tpu_custom_call.1} parent=1 // pred_region
      %s2231 = ssub.s32 128, 128
      %2232 = vsyncadd [#allocation40], %s2231
      %s2234 = sshll.u32 [#allocation41], 4
      %s2235 = int_to_ptr.vmem [resolvable:$true] %s2234
      %2237 = dma.vmem_to_hbm [thread:$0]  %s2235, 128, %s67, [#allocation40]
    $region449: #{tpu_custom_call.1} parent=1 // pred_fallthru
      _
    // Predicated region
    $region450: #{tpu_custom_call.1} parent=1 // pred_check
      _
    $region451: #{tpu_custom_call.1} parent=1 // pred_check_branch
      %2239 = sbr.rel (0) target = $region453
    $region452: #{tpu_custom_call.1} parent=1 // pred_region
      %2240 = dma.done [#allocation6], 128
    $region453: #{tpu_custom_call.1} parent=1 // pred_fallthru
      _
    // Predicated region
    $region454: #{tpu_custom_call.1} parent=1 // pred_check
      _
    $region455: #{tpu_custom_call.1} parent=1 // pred_check_branch
      %2242 = sbr.rel (0) target = $region457
    $region456: #{tpu_custom_call.1} parent=1 // pred_region
      %2243 = dma.done [#allocation37], 128
    $region457: #{tpu_custom_call.1} parent=1 // pred_fallthru
      _
    // Predicated region
    $region458: #{tpu_custom_call.1} parent=1 // pred_check
      _
    $region459: #{tpu_custom_call.1} parent=1 // pred_check_branch
      %2245 = sbr.rel (0) target = $region461
    $region460: #{tpu_custom_call.1} parent=1 // pred_region
      %2246 = dma.done [#allocation37], 128
    $region461: #{tpu_custom_call.1} parent=1 // pred_fallthru
      _
    // Predicated region
    $region462: #{tpu_custom_call.1} parent=1 // pred_check
      _
    $region463: #{tpu_custom_call.1} parent=1 // pred_check_branch
      %2248 = sbr.rel (0) target = $region465
    $region464: #{tpu_custom_call.1} parent=1 // pred_region
      %2249 = dma.done [#allocation40], 128
    $region465: #{tpu_custom_call.1} parent=1 // pred_fallthru
      _
    // Predicated region
    $region466: #{tpu_custom_call.1} parent=1 // pred_check
      _
    $region467: #{tpu_custom_call.1} parent=1 // pred_check_branch
      %2251 = sbr.rel (0) target = $region469
    $region468: #{tpu_custom_call.1} parent=1 // pred_region
      %2252 = dma.done [#allocation40], 128
    $region469: #{tpu_custom_call.1} parent=1 // pred_fallthru
      _
    %2253 = vsyncpa [#allocation5], 1
    %2254 = vsyncpa [#allocation10], 1
    %2255 = vsyncpa [#allocation13], 1
    %2256 = vsyncpa [#allocation16], 1
    %2257 = vsyncpa [#allocation19], 1
    %2258 = vsyncpa [#allocation22], 1
    %2259 = vsyncpa [#allocation25], 1
    %2260 = vsyncpa [#allocation28], 1
    %2261 = vsyncpa [#allocation31], 1
    %2262 = vsyncpa [#allocation34], 1
    %2263 = vsyncpa [#allocation6], 1
    %2264 = vsyncpa [#allocation37], 1
    %2265 = vsyncpa [#allocation40], 1
    %2266 = vsyncpa [#allocation7], 1
  %2267 = vsyncmov [#allocation3]
  %s2268 = vpop.sfrf %2267
  %p2269 = scmp.eq.s32.totalorder %s2268, 0
  %p2270 = pneg %p2269
  %2272 = shalt.err (%p2270)
  %s2273 = scalar_lea.sflag [#allocation3], 1
  %2274 = vsyncmov %s2273
  %s2275 = vpop.sfrf %2274
  %p2276 = scmp.eq.s32.totalorder %s2275, 0
  %p2277 = pneg %p2276
  %2279 = shalt.err (%p2277)
  %s2280 = scalar_lea.sflag [#allocation3], 2
  %2281 = vsyncmov %s2280
  %s2282 = vpop.sfrf %2281
  %p2283 = scmp.eq.s32.totalorder %s2282, 0
  %p2284 = pneg %p2283
  %2286 = shalt.err (%p2284)
  %s2287 = scalar_lea.sflag [#allocation3], 3
  %2288 = vsyncmov %s2287
  %s2289 = vpop.sfrf %2288
  %p2290 = scmp.eq.s32.totalorder %s2289, 0
  %p2291 = pneg %p2290
  %2293 = shalt.err (%p2291)
  %s2294 = scalar_lea.sflag [#allocation3], 4
  %2295 = vsyncmov %s2294
  %s2296 = vpop.sfrf %2295
  %p2297 = scmp.eq.s32.totalorder %s2296, 0
  %p2298 = pneg %p2297
  %2300 = shalt.err (%p2298)
  %s2301 = scalar_lea.sflag [#allocation3], 5
  %2302 = vsyncmov %s2301
  %s2303 = vpop.sfrf %2302
  %p2304 = scmp.eq.s32.totalorder %s2303, 0
  %p2305 = pneg %p2304
  %2307 = shalt.err (%p2305)
  %s2308 = scalar_lea.sflag [#allocation3], 6
  %2309 = vsyncmov %s2308
  %s2310 = vpop.sfrf %2309
  %p2311 = scmp.eq.s32.totalorder %s2310, 0
  %p2312 = pneg %p2311
  %2314 = shalt.err (%p2312)
  %s2315 = scalar_lea.sflag [#allocation3], 7
  %2316 = vsyncmov %s2315
  %s2317 = vpop.sfrf %2316
  %p2318 = scmp.eq.s32.totalorder %s2317, 0
  %p2319 = pneg %p2318
  %2321 = shalt.err (%p2319)

</llo_original>
